<compile_context>
chip_gen: v5e
topology: v5e:2x2
jax: 0.10.0
libtpu: 0.0.40
codegen_flags: <defaults>
</compile_context>

<pallas_src>
import functools

import jax
import jax.numpy as jnp
from jax.experimental import pallas as pl
from jax.experimental.pallas import tpu as pltpu

NEG_SLOPE = 0.2
BN_EPS = 1e-5
MXU_DTYPE = jnp.bfloat16


# ----------------------------- Pallas kernel --------------------------------

def _fused_conv_kernel(ph_ref, w_ref, mask_ref, g_ref, b_ref, o_ref, *,
                       shifts, inv_count, with_bn):
    """Fused 4x4/s2/p1 conv (+ optional BatchNorm batch stats) + LeakyReLU.

    ph_ref  : (4*Cin, Mp) bf16   phase-packed zero-padded activation
    w_ref   : (4, Cout, 4*Cin) bf16  weights per (d, e) tap group
    mask_ref: (1, Mp) f32        1.0 on valid output positions, 0.0 on padding
    g_ref   : (Cout, 1) f32      BN gamma (ignored when with_bn=False)
    b_ref   : (Cout, 1) f32      BN beta
    o_ref   : (Cout, Mp) f32     padded layer output, lane-dense in Mp
    """
    ph = ph_ref[...]
    acc = None
    for de, s in enumerate(shifts):
        # (Cout, 4Cin) @ (4Cin, Mp) -> (Cout, Mp); bf16 MXU, f32 accumulation.
        t = jnp.dot(w_ref[de], ph, preferred_element_type=jnp.float32)
        if s:
            # out[:, m] needs this tap at column m + s.  The cyclically wrapped
            # tail columns only land in the (discarded) padding region.
            t = jnp.concatenate([t[:, s:], t[:, :s]], axis=1)
        acc = t if acc is None else acc + t

    if with_bn:
        # Training-mode BatchNorm2d: biased batch statistics over the valid
        # (N, Ho, Wo) positions only (masked; padded columns excluded).
        mask = mask_ref[...]
        mean = jnp.sum(acc * mask, axis=1, keepdims=True) * inv_count
        cen = (acc - mean) * mask
        var = jnp.sum(cen * cen, axis=1, keepdims=True) * inv_count
        y = (acc - mean) * jax.lax.rsqrt(var + BN_EPS)
        y = y * g_ref[...] + b_ref[...]
    else:
        y = acc

    y = jnp.where(y >= 0, y, NEG_SLOPE * y)           # LeakyReLU(0.2)
    o_ref[...] = y.astype(o_ref.dtype)


# ------------------------------ host helpers --------------------------------

def _phase_pack(act):
    """(C, N, H, W) -> (4*C, N*Hp*Wp) bf16 with K ordered (a, b, c)."""
    c, n, h, w = act.shape
    hp, wp = h // 2 + 1, w // 2 + 1
    x = jnp.pad(act.astype(MXU_DTYPE), ((0, 0), (0, 0), (1, 1), (1, 1)))
    x = x.reshape(c, n, hp, 2, wp, 2)          # row = 2*h' + a, col = 2*w' + b
    x = x.transpose(3, 5, 0, 1, 2, 4)          # (a, b, c, n, h', w')
    return x.reshape(4 * c, n * hp * wp)


def _pack_weights(w):
    """(Cout, Cin, 4, 4) -> (4, Cout, 4*Cin) bf16; leading dim is de = 2d+e."""
    cout, cin = w.shape[:2]
    w = w.reshape(cout, cin, 2, 2, 2, 2)       # ki = 2d + a, kj = 2e + b
    w = w.transpose(2, 4, 0, 3, 5, 1)          # (d, e, Cout, a, b, Cin)
    return w.reshape(4, cout, 4 * cin).astype(MXU_DTYPE)


def _valid_mask(n, ho, wo):
    hp, wp = ho + 1, wo + 1
    m = (jnp.arange(hp)[:, None] < ho) & (jnp.arange(wp)[None, :] < wo)
    m = jnp.broadcast_to(m[None], (n, hp, wp))
    return m.reshape(1, n * hp * wp).astype(jnp.float32)


def _conv4x4_s2(act, weight, gamma=None, beta=None):
    """Conv2d(k=4, s=2, p=1, bias=False) [+BN +LeakyReLU] on (C, N, H, W)."""
    c, n, h, w = act.shape
    cout = weight.shape[0]
    ho, wo = h // 2, w // 2
    hp, wp = ho + 1, wo + 1
    mp = n * hp * wp

    ph = _phase_pack(act)
    wm = _pack_weights(weight)
    mask = _valid_mask(n, ho, wo)
    with_bn = gamma is not None
    if with_bn:
        g = gamma.reshape(cout, 1).astype(jnp.float32)
        b = beta.reshape(cout, 1).astype(jnp.float32)
    else:
        g = jnp.ones((cout, 1), jnp.float32)
        b = jnp.zeros((cout, 1), jnp.float32)

    kernel = functools.partial(
        _fused_conv_kernel,
        shifts=(0, 1, wp, wp + 1),             # de = 2d + e  ->  d*Wp + e
        inv_count=1.0 / float(n * ho * wo),
        with_bn=with_bn)

    # Whole layer is VMEM-resident; size the scoped VMEM limit explicitly with
    # headroom and keep it well under v7x's 64 MiB physical VMEM.
    vmem_bytes = int(2 * ph.size + 2 * wm.size + 4 * mask.size
                     + 8 * cout * mp * 4) + (4 << 20)
    vmem_bytes = min(max(vmem_bytes, 16 << 20), 40 << 20)

    out_p = pl.pallas_call(
        kernel,
        out_shape=jax.ShapeDtypeStruct((cout, mp), jnp.float32),
        grid=(1,),
        in_specs=[
            pl.BlockSpec((4 * c, mp), lambda i: (0, 0)),
            pl.BlockSpec((4, cout, 4 * c), lambda i: (0, 0, 0)),
            pl.BlockSpec((1, mp), lambda i: (0, 0)),
            pl.BlockSpec((cout, 1), lambda i: (0, 0)),
            pl.BlockSpec((cout, 1), lambda i: (0, 0)),
        ],
        out_specs=pl.BlockSpec((cout, mp), lambda i: (0, 0)),
        compiler_params=pltpu.CompilerParams(
            dimension_semantics=("arbitrary",),
            vmem_limit_bytes=vmem_bytes),
    )(ph, wm, mask, g, b)

    # Drop the padded h'=Ho / w'=Wo columns -> next layer's channel-major act.
    return out_p.reshape(cout, n, hp, wp)[:, :, :ho, :wo]


def discriminator_forward(x, params):
    """x: (N, channel, 64, 64) NCHW float32 -> (N, 1, 1, 1)."""
    w1, (w2, g2, b2), (w3, g3, b3), (w4, g4, b4), w5 = params
    act = jnp.transpose(x, (1, 0, 2, 3))       # NCHW -> channel-major, once
    act = _conv4x4_s2(act, w1)                 # conv + LeakyReLU
    act = _conv4x4_s2(act, w2, g2, b2)         # conv + BN + LeakyReLU
    act = _conv4x4_s2(act, w3, g3, b3)
    act = _conv4x4_s2(act, w4, g4, b4)
    # Final 4x4 VALID conv -> one scalar per image.  M == batch is tiny; per
    # the perf review a plain f32 dot beats a pallas_call at this size.
    n = x.shape[0]
    out = jnp.einsum('cnhw,chw->n', act, w5[0],
                     precision=jax.lax.Precision.HIGHEST)
    return out.reshape(n, 1, 1, 1)


# --------------------------- pure-JAX reference -----------------------------

def _ref_forward(x, params):
    def conv(x, w, stride, pad):
        return jax.lax.conv_general_dilated(
            x, w, (stride, stride), [(pad, pad), (pad, pad)],
            dimension_numbers=("NCHW", "OIHW", "NCHW"),
            precision=jax.lax.Precision.HIGHEST)

    def bn(x, g, b):
        mean = jnp.mean(x, axis=(0, 2, 3), keepdims=True)
        var = jnp.mean((x - mean) ** 2, axis=(0, 2, 3), keepdims=True)
        y = (x - mean) * jax.lax.rsqrt(var + BN_EPS)
        return y * g.reshape(1, -1, 1, 1) + b.reshape(1, -1, 1, 1)

    def lrelu(x):
        return jnp.where(x >= 0, x, NEG_SLOPE * x)

    w1, (w2, g2, b2), (w3, g3, b3), (w4, g4, b4), w5 = params
    x = lrelu(conv(x, w1, 2, 1))
    x = lrelu(bn(conv(x, w2, 2, 1), g2, b2))
    x = lrelu(bn(conv(x, w3, 2, 1), g3, b3))
    x = lrelu(bn(conv(x, w4, 2, 1), g4, b4))
    return conv(x, w5, 1, 0)


# ----------------------------------- main ------------------------------------

if __name__ == "__main__":
    # Small config: image_size=16 (=> channels 8,16,32,64), channel=4.
    # Spatial input must be 64x64 so the final 4x4 valid conv yields 1x1.
    image_size = 16
    channel = 4
    batch = 2

    key = jax.random.PRNGKey(0)
    ks = jax.random.split(key, 8)

    def winit(k, cout, cin):
        return 0.02 * jax.random.normal(k, (cout, cin, 4, 4), jnp.float32)

    c1, c2, c3, c4 = (image_size // 2, image_size, image_size * 2,
                      image_size * 4)
    w1 = winit(ks[0], c1, channel)
    w2 = winit(ks[1], c2, c1)
    w3 = winit(ks[2], c3, c2)
    w4 = winit(ks[3], c4, c3)
    w5 = winit(ks[4], 1, c4)
    # BatchNorm affine params (PyTorch defaults: gamma=1, beta=0)
    g2, b2 = jnp.ones((c2,), jnp.float32), jnp.zeros((c2,), jnp.float32)
    g3, b3 = jnp.ones((c3,), jnp.float32), jnp.zeros((c3,), jnp.float32)
    g4, b4 = jnp.ones((c4,), jnp.float32), jnp.zeros((c4,), jnp.float32)

    params = (w1, (w2, g2, b2), (w3, g3, b3), (w4, g4, b4), w5)

    x = jax.random.normal(ks[5], (batch, channel, 64, 64), jnp.float32)

    fwd = jax.jit(discriminator_forward)
    out = jax.block_until_ready(fwd(x, params))
    assert out.shape == (batch, 1, 1, 1), out.shape
    assert bool(jnp.all(jnp.isfinite(out)))

    ref = jax.block_until_ready(_ref_forward(x, params))
    # bf16 MXU operands across 4 conv layers -> slightly looser tolerance than
    # the all-f32 HIGHEST reference.
    assert jnp.allclose(out, ref, rtol=3e-2, atol=3e-2), (out, ref)

    print("KERNEL_OK")
</pallas_src>

<mosaic_0001>
module attributes {stable_mosaic.version = 11 : i64} {
  func.func @_fused_conv_kernel(%arg0: i32, %arg1: memref<16x2178xbf16, #tpu.memory_space<vmem>>, %arg2: memref<4x8x16xbf16, #tpu.memory_space<vmem>>, %arg3: memref<1x2178xf32, #tpu.memory_space<vmem>>, %arg4: memref<8x1xf32, #tpu.memory_space<vmem>>, %arg5: memref<8x1xf32, #tpu.memory_space<vmem>>, %arg6: memref<8x2178xf32, #tpu.memory_space<vmem>>) attributes {dimension_semantics = [#tpu.dimension_semantics<arbitrary>], iteration_bounds = array<i64: 1>, scalar_prefetch = 0 : i64, scratch_operands = 0 : i64, tpu.core_type = #tpu.core_type<tc>, window_params = [{pipeline_mode = #tpu.pipeline_mode<synchronous>, transform_indices = @transform_0, window_bounds = array<i64: 16, 2178>}, {pipeline_mode = #tpu.pipeline_mode<synchronous>, transform_indices = @transform_1, window_bounds = array<i64: 4, 8, 16>}, {pipeline_mode = #tpu.pipeline_mode<synchronous>, transform_indices = @transform_2, window_bounds = array<i64: 1, 2178>}, {pipeline_mode = #tpu.pipeline_mode<synchronous>, transform_indices = @transform_3, window_bounds = array<i64: 8, 1>}, {pipeline_mode = #tpu.pipeline_mode<synchronous>, transform_indices = @transform_4, window_bounds = array<i64: 8, 1>}, {pipeline_mode = #tpu.pipeline_mode<synchronous>, transform_indices = @transform_5, window_bounds = array<i64: 8, 2178>}]} {
    %c0 = arith.constant 0 : index
    %c0_0 = arith.constant 0 : index
    %0 = vector.load %arg1[%c0, %c0_0] : memref<16x2178xbf16, #tpu.memory_space<vmem>>, vector<16x2178xbf16>
    %c0_1 = arith.constant 0 : index
    %c0_2 = arith.constant 0 : index
    %c0_3 = arith.constant 0 : index
    %1 = vector.load %arg2[%c0_1, %c0_2, %c0_3] : memref<4x8x16xbf16, #tpu.memory_space<vmem>>, vector<1x8x16xbf16>
    %2 = vector.shape_cast %1 : vector<1x8x16xbf16> to vector<8x16xbf16>
    %cst = arith.constant dense<0.000000e+00> : vector<8x2178xf32>
    %3 = tpu.matmul %2, %0, %cst {dimension_numbers = #tpu.dot_dimension_numbers<[1], [0], [0], [1], [0, 0, 1, 1], [], []>} : vector<8x16xbf16>, vector<16x2178xbf16>, vector<8x2178xf32> -> vector<8x2178xf32>
    %c1 = arith.constant 1 : index
    %c0_4 = arith.constant 0 : index
    %c0_5 = arith.constant 0 : index
    %4 = vector.load %arg2[%c1, %c0_4, %c0_5] : memref<4x8x16xbf16, #tpu.memory_space<vmem>>, vector<1x8x16xbf16>
    %5 = vector.shape_cast %4 : vector<1x8x16xbf16> to vector<8x16xbf16>
    %cst_6 = arith.constant dense<0.000000e+00> : vector<8x2178xf32>
    %6 = tpu.matmul %5, %0, %cst_6 {dimension_numbers = #tpu.dot_dimension_numbers<[1], [0], [0], [1], [0, 0, 1, 1], [], []>} : vector<8x16xbf16>, vector<16x2178xbf16>, vector<8x2178xf32> -> vector<8x2178xf32>
    %7 = vector.extract_strided_slice %6 {offsets = [0, 1], sizes = [8, 2177], strides = [1, 1]} : vector<8x2178xf32> to vector<8x2177xf32>
    %8 = vector.extract_strided_slice %6 {offsets = [0, 0], sizes = [8, 1], strides = [1, 1]} : vector<8x2178xf32> to vector<8x1xf32>
    %9 = tpu.concatenate %7, %8 in 1 : vector<8x2177xf32>, vector<8x1xf32> -> vector<8x2178xf32>
    %10 = arith.addf %3, %9 : vector<8x2178xf32>
    %c2 = arith.constant 2 : index
    %c0_7 = arith.constant 0 : index
    %c0_8 = arith.constant 0 : index
    %11 = vector.load %arg2[%c2, %c0_7, %c0_8] : memref<4x8x16xbf16, #tpu.memory_space<vmem>>, vector<1x8x16xbf16>
    %12 = vector.shape_cast %11 : vector<1x8x16xbf16> to vector<8x16xbf16>
    %cst_9 = arith.constant dense<0.000000e+00> : vector<8x2178xf32>
    %13 = tpu.matmul %12, %0, %cst_9 {dimension_numbers = #tpu.dot_dimension_numbers<[1], [0], [0], [1], [0, 0, 1, 1], [], []>} : vector<8x16xbf16>, vector<16x2178xbf16>, vector<8x2178xf32> -> vector<8x2178xf32>
    %14 = vector.extract_strided_slice %13 {offsets = [0, 33], sizes = [8, 2145], strides = [1, 1]} : vector<8x2178xf32> to vector<8x2145xf32>
    %15 = vector.extract_strided_slice %13 {offsets = [0, 0], sizes = [8, 33], strides = [1, 1]} : vector<8x2178xf32> to vector<8x33xf32>
    %16 = tpu.concatenate %14, %15 in 1 : vector<8x2145xf32>, vector<8x33xf32> -> vector<8x2178xf32>
    %17 = arith.addf %10, %16 : vector<8x2178xf32>
    %c3 = arith.constant 3 : index
    %c0_10 = arith.constant 0 : index
    %c0_11 = arith.constant 0 : index
    %18 = vector.load %arg2[%c3, %c0_10, %c0_11] : memref<4x8x16xbf16, #tpu.memory_space<vmem>>, vector<1x8x16xbf16>
    %19 = vector.shape_cast %18 : vector<1x8x16xbf16> to vector<8x16xbf16>
    %cst_12 = arith.constant dense<0.000000e+00> : vector<8x2178xf32>
    %20 = tpu.matmul %19, %0, %cst_12 {dimension_numbers = #tpu.dot_dimension_numbers<[1], [0], [0], [1], [0, 0, 1, 1], [], []>} : vector<8x16xbf16>, vector<16x2178xbf16>, vector<8x2178xf32> -> vector<8x2178xf32>
    %21 = vector.extract_strided_slice %20 {offsets = [0, 34], sizes = [8, 2144], strides = [1, 1]} : vector<8x2178xf32> to vector<8x2144xf32>
    %22 = vector.extract_strided_slice %20 {offsets = [0, 0], sizes = [8, 34], strides = [1, 1]} : vector<8x2178xf32> to vector<8x34xf32>
    %23 = tpu.concatenate %21, %22 in 1 : vector<8x2144xf32>, vector<8x34xf32> -> vector<8x2178xf32>
    %24 = arith.addf %17, %23 : vector<8x2178xf32>
    %cst_13 = arith.constant 0.000000e+00 : f32
    %25 = vector.broadcast %cst_13 : f32 to vector<8x2178xf32>
    %26 = arith.cmpf oge, %24, %25 : vector<8x2178xf32>
    %cst_14 = arith.constant 2.000000e-01 : f32
    %27 = vector.broadcast %cst_14 : f32 to vector<8x2178xf32>
    %28 = arith.mulf %27, %24 : vector<8x2178xf32>
    %29 = arith.select %26, %24, %28 : vector<8x2178xi1>, vector<8x2178xf32>
    %c0_15 = arith.constant 0 : index
    %c0_16 = arith.constant 0 : index
    %30 = vector.load %arg6[%c0_15, %c0_16] : memref<8x2178xf32, #tpu.memory_space<vmem>>, vector<8x2178xf32>
    tpu.vector_store %arg6[%c0_15, %c0_16], %29 {strides = array<i32>} : memref<8x2178xf32, #tpu.memory_space<vmem>>, vector<8x2178xf32>,
    return
  }
  func.func @transform_0(%arg0: i32) -> (i32, i32) {
    %c0_i32 = arith.constant 0 : i32
    %c0_i32_0 = arith.constant 0 : i32
    %c0_i32_1 = arith.constant 0 : i32
    return %c0_i32, %c0_i32_0 : i32, i32
  }
  func.func @transform_1(%arg0: i32) -> (i32, i32, i32) {
    %c0_i32 = arith.constant 0 : i32
    %c0_i32_0 = arith.constant 0 : i32
    %c0_i32_1 = arith.constant 0 : i32
    %c0_i32_2 = arith.constant 0 : i32
    return %c0_i32, %c0_i32_0, %c0_i32_1 : i32, i32, i32
  }
  func.func @transform_2(%arg0: i32) -> (i32, i32) {
    %c0_i32 = arith.constant 0 : i32
    %c0_i32_0 = arith.constant 0 : i32
    %c0_i32_1 = arith.constant 0 : i32
    return %c0_i32, %c0_i32_0 : i32, i32
  }
  func.func @transform_3(%arg0: i32) -> (i32, i32) {
    %c0_i32 = arith.constant 0 : i32
    %c0_i32_0 = arith.constant 0 : i32
    %c0_i32_1 = arith.constant 0 : i32
    return %c0_i32, %c0_i32_0 : i32, i32
  }
  func.func @transform_4(%arg0: i32) -> (i32, i32) {
    %c0_i32 = arith.constant 0 : i32
    %c0_i32_0 = arith.constant 0 : i32
    %c0_i32_1 = arith.constant 0 : i32
    return %c0_i32, %c0_i32_0 : i32, i32
  }
  func.func @transform_5(%arg0: i32) -> (i32, i32) {
    %c0_i32 = arith.constant 0 : i32
    %c0_i32_0 = arith.constant 0 : i32
    %c0_i32_1 = arith.constant 0 : i32
    return %c0_i32, %c0_i32_0 : i32, i32
  }
}

module attributes {stable_mosaic.version = 11 : i64} {
  func.func @_fused_conv_kernel(%arg0: i32, %arg1: memref<32x578xbf16, #tpu.memory_space<vmem>>, %arg2: memref<4x16x32xbf16, #tpu.memory_space<vmem>>, %arg3: memref<1x578xf32, #tpu.memory_space<vmem>>, %arg4: memref<16x1xf32, #tpu.memory_space<vmem>>, %arg5: memref<16x1xf32, #tpu.memory_space<vmem>>, %arg6: memref<16x578xf32, #tpu.memory_space<vmem>>) attributes {dimension_semantics = [#tpu.dimension_semantics<arbitrary>], iteration_bounds = array<i64: 1>, scalar_prefetch = 0 : i64, scratch_operands = 0 : i64, tpu.core_type = #tpu.core_type<tc>, window_params = [{pipeline_mode = #tpu.pipeline_mode<synchronous>, transform_indices = @transform_0, window_bounds = array<i64: 32, 578>}, {pipeline_mode = #tpu.pipeline_mode<synchronous>, transform_indices = @transform_1, window_bounds = array<i64: 4, 16, 32>}, {pipeline_mode = #tpu.pipeline_mode<synchronous>, transform_indices = @transform_2, window_bounds = array<i64: 1, 578>}, {pipeline_mode = #tpu.pipeline_mode<synchronous>, transform_indices = @transform_3, window_bounds = array<i64: 16, 1>}, {pipeline_mode = #tpu.pipeline_mode<synchronous>, transform_indices = @transform_4, window_bounds = array<i64: 16, 1>}, {pipeline_mode = #tpu.pipeline_mode<synchronous>, transform_indices = @transform_5, window_bounds = array<i64: 16, 578>}]} {
    %c0 = arith.constant 0 : index
    %c0_0 = arith.constant 0 : index
    %0 = vector.load %arg1[%c0, %c0_0] : memref<32x578xbf16, #tpu.memory_space<vmem>>, vector<32x578xbf16>
    %c0_1 = arith.constant 0 : index
    %c0_2 = arith.constant 0 : index
    %c0_3 = arith.constant 0 : index
    %1 = vector.load %arg2[%c0_1, %c0_2, %c0_3] : memref<4x16x32xbf16, #tpu.memory_space<vmem>>, vector<1x16x32xbf16>
    %2 = vector.shape_cast %1 : vector<1x16x32xbf16> to vector<16x32xbf16>
    %cst = arith.constant dense<0.000000e+00> : vector<16x578xf32>
    %3 = tpu.matmul %2, %0, %cst {dimension_numbers = #tpu.dot_dimension_numbers<[1], [0], [0], [1], [0, 0, 1, 1], [], []>} : vector<16x32xbf16>, vector<32x578xbf16>, vector<16x578xf32> -> vector<16x578xf32>
    %c1 = arith.constant 1 : index
    %c0_4 = arith.constant 0 : index
    %c0_5 = arith.constant 0 : index
    %4 = vector.load %arg2[%c1, %c0_4, %c0_5] : memref<4x16x32xbf16, #tpu.memory_space<vmem>>, vector<1x16x32xbf16>
    %5 = vector.shape_cast %4 : vector<1x16x32xbf16> to vector<16x32xbf16>
    %cst_6 = arith.constant dense<0.000000e+00> : vector<16x578xf32>
    %6 = tpu.matmul %5, %0, %cst_6 {dimension_numbers = #tpu.dot_dimension_numbers<[1], [0], [0], [1], [0, 0, 1, 1], [], []>} : vector<16x32xbf16>, vector<32x578xbf16>, vector<16x578xf32> -> vector<16x578xf32>
    %7 = vector.extract_strided_slice %6 {offsets = [0, 1], sizes = [16, 577], strides = [1, 1]} : vector<16x578xf32> to vector<16x577xf32>
    %8 = vector.extract_strided_slice %6 {offsets = [0, 0], sizes = [16, 1], strides = [1, 1]} : vector<16x578xf32> to vector<16x1xf32>
    %9 = tpu.concatenate %7, %8 in 1 : vector<16x577xf32>, vector<16x1xf32> -> vector<16x578xf32>
    %10 = arith.addf %3, %9 : vector<16x578xf32>
    %c2 = arith.constant 2 : index
    %c0_7 = arith.constant 0 : index
    %c0_8 = arith.constant 0 : index
    %11 = vector.load %arg2[%c2, %c0_7, %c0_8] : memref<4x16x32xbf16, #tpu.memory_space<vmem>>, vector<1x16x32xbf16>
    %12 = vector.shape_cast %11 : vector<1x16x32xbf16> to vector<16x32xbf16>
    %cst_9 = arith.constant dense<0.000000e+00> : vector<16x578xf32>
    %13 = tpu.matmul %12, %0, %cst_9 {dimension_numbers = #tpu.dot_dimension_numbers<[1], [0], [0], [1], [0, 0, 1, 1], [], []>} : vector<16x32xbf16>, vector<32x578xbf16>, vector<16x578xf32> -> vector<16x578xf32>
    %14 = vector.extract_strided_slice %13 {offsets = [0, 17], sizes = [16, 561], strides = [1, 1]} : vector<16x578xf32> to vector<16x561xf32>
    %15 = vector.extract_strided_slice %13 {offsets = [0, 0], sizes = [16, 17], strides = [1, 1]} : vector<16x578xf32> to vector<16x17xf32>
    %16 = tpu.concatenate %14, %15 in 1 : vector<16x561xf32>, vector<16x17xf32> -> vector<16x578xf32>
    %17 = arith.addf %10, %16 : vector<16x578xf32>
    %c3 = arith.constant 3 : index
    %c0_10 = arith.constant 0 : index
    %c0_11 = arith.constant 0 : index
    %18 = vector.load %arg2[%c3, %c0_10, %c0_11] : memref<4x16x32xbf16, #tpu.memory_space<vmem>>, vector<1x16x32xbf16>
    %19 = vector.shape_cast %18 : vector<1x16x32xbf16> to vector<16x32xbf16>
    %cst_12 = arith.constant dense<0.000000e+00> : vector<16x578xf32>
    %20 = tpu.matmul %19, %0, %cst_12 {dimension_numbers = #tpu.dot_dimension_numbers<[1], [0], [0], [1], [0, 0, 1, 1], [], []>} : vector<16x32xbf16>, vector<32x578xbf16>, vector<16x578xf32> -> vector<16x578xf32>
    %21 = vector.extract_strided_slice %20 {offsets = [0, 18], sizes = [16, 560], strides = [1, 1]} : vector<16x578xf32> to vector<16x560xf32>
    %22 = vector.extract_strided_slice %20 {offsets = [0, 0], sizes = [16, 18], strides = [1, 1]} : vector<16x578xf32> to vector<16x18xf32>
    %23 = tpu.concatenate %21, %22 in 1 : vector<16x560xf32>, vector<16x18xf32> -> vector<16x578xf32>
    %24 = arith.addf %17, %23 : vector<16x578xf32>
    %c0_13 = arith.constant 0 : index
    %c0_14 = arith.constant 0 : index
    %25 = vector.load %arg3[%c0_13, %c0_14] : memref<1x578xf32, #tpu.memory_space<vmem>>, vector<1x578xf32>
    %26 = vector.broadcast %25 : vector<1x578xf32> to vector<16x578xf32>
    %27 = arith.mulf %24, %26 : vector<16x578xf32>
    %cst_15 = arith.constant dense<0.000000e+00> : vector<16xf32>
    %28 = vector.multi_reduction <add>, %27, %cst_15 [1] : vector<16x578xf32> to vector<16xf32>
    %29 = vector.shape_cast %28 : vector<16xf32> to vector<16x1xf32>
    %cst_16 = arith.constant 0.001953125 : f32
    %30 = vector.broadcast %cst_16 : f32 to vector<16x1xf32>
    %31 = arith.mulf %29, %30 : vector<16x1xf32>
    %32 = vector.broadcast %31 : vector<16x1xf32> to vector<16x578xf32>
    %33 = arith.subf %24, %32 : vector<16x578xf32>
    %34 = vector.broadcast %25 : vector<1x578xf32> to vector<16x578xf32>
    %35 = arith.mulf %33, %34 : vector<16x578xf32>
    %36 = arith.mulf %35, %35 : vector<16x578xf32>
    %cst_17 = arith.constant dense<0.000000e+00> : vector<16xf32>
    %37 = vector.multi_reduction <add>, %36, %cst_17 [1] : vector<16x578xf32> to vector<16xf32>
    %38 = vector.shape_cast %37 : vector<16xf32> to vector<16x1xf32>
    %cst_18 = arith.constant 0.001953125 : f32
    %39 = vector.broadcast %cst_18 : f32 to vector<16x1xf32>
    %40 = arith.mulf %38, %39 : vector<16x1xf32>
    %41 = vector.broadcast %31 : vector<16x1xf32> to vector<16x578xf32>
    %42 = arith.subf %24, %41 : vector<16x578xf32>
    %cst_19 = arith.constant 9.99999974E-6 : f32
    %43 = vector.broadcast %cst_19 : f32 to vector<16x1xf32>
    %44 = arith.addf %40, %43 : vector<16x1xf32>
    %45 = math.rsqrt %44 : vector<16x1xf32>
    %46 = vector.broadcast %45 : vector<16x1xf32> to vector<16x578xf32>
    %47 = arith.mulf %42, %46 : vector<16x578xf32>
    %c0_20 = arith.constant 0 : index
    %c0_21 = arith.constant 0 : index
    %48 = vector.load %arg4[%c0_20, %c0_21] : memref<16x1xf32, #tpu.memory_space<vmem>>, vector<16x1xf32>
    %49 = vector.broadcast %48 : vector<16x1xf32> to vector<16x578xf32>
    %50 = arith.mulf %47, %49 : vector<16x578xf32>
    %c0_22 = arith.constant 0 : index
    %c0_23 = arith.constant 0 : index
    %51 = vector.load %arg5[%c0_22, %c0_23] : memref<16x1xf32, #tpu.memory_space<vmem>>, vector<16x1xf32>
    %52 = vector.broadcast %51 : vector<16x1xf32> to vector<16x578xf32>
    %53 = arith.addf %50, %52 : vector<16x578xf32>
    %cst_24 = arith.constant 0.000000e+00 : f32
    %54 = vector.broadcast %cst_24 : f32 to vector<16x578xf32>
    %55 = arith.cmpf oge, %53, %54 : vector<16x578xf32>
    %cst_25 = arith.constant 2.000000e-01 : f32
    %56 = vector.broadcast %cst_25 : f32 to vector<16x578xf32>
    %57 = arith.mulf %56, %53 : vector<16x578xf32>
    %58 = arith.select %55, %53, %57 : vector<16x578xi1>, vector<16x578xf32>
    %c0_26 = arith.constant 0 : index
    %c0_27 = arith.constant 0 : index
    %59 = vector.load %arg6[%c0_26, %c0_27] : memref<16x578xf32, #tpu.memory_space<vmem>>, vector<16x578xf32>
    tpu.vector_store %arg6[%c0_26, %c0_27], %58 {strides = array<i32>} : memref<16x578xf32, #tpu.memory_space<vmem>>, vector<16x578xf32>,
    return
  }
  func.func @transform_0(%arg0: i32) -> (i32, i32) {
    %c0_i32 = arith.constant 0 : i32
    %c0_i32_0 = arith.constant 0 : i32
    %c0_i32_1 = arith.constant 0 : i32
    return %c0_i32, %c0_i32_0 : i32, i32
  }
  func.func @transform_1(%arg0: i32) -> (i32, i32, i32) {
    %c0_i32 = arith.constant 0 : i32
    %c0_i32_0 = arith.constant 0 : i32
    %c0_i32_1 = arith.constant 0 : i32
    %c0_i32_2 = arith.constant 0 : i32
    return %c0_i32, %c0_i32_0, %c0_i32_1 : i32, i32, i32
  }
  func.func @transform_2(%arg0: i32) -> (i32, i32) {
    %c0_i32 = arith.constant 0 : i32
    %c0_i32_0 = arith.constant 0 : i32
    %c0_i32_1 = arith.constant 0 : i32
    return %c0_i32, %c0_i32_0 : i32, i32
  }
  func.func @transform_3(%arg0: i32) -> (i32, i32) {
    %c0_i32 = arith.constant 0 : i32
    %c0_i32_0 = arith.constant 0 : i32
    %c0_i32_1 = arith.constant 0 : i32
    return %c0_i32, %c0_i32_0 : i32, i32
  }
  func.func @transform_4(%arg0: i32) -> (i32, i32) {
    %c0_i32 = arith.constant 0 : i32
    %c0_i32_0 = arith.constant 0 : i32
    %c0_i32_1 = arith.constant 0 : i32
    return %c0_i32, %c0_i32_0 : i32, i32
  }
  func.func @transform_5(%arg0: i32) -> (i32, i32) {
    %c0_i32 = arith.constant 0 : i32
    %c0_i32_0 = arith.constant 0 : i32
    %c0_i32_1 = arith.constant 0 : i32
    return %c0_i32, %c0_i32_0 : i32, i32
  }
}

module attributes {stable_mosaic.version = 11 : i64} {
  func.func @_fused_conv_kernel(%arg0: i32, %arg1: memref<64x162xbf16, #tpu.memory_space<vmem>>, %arg2: memref<4x32x64xbf16, #tpu.memory_space<vmem>>, %arg3: memref<1x162xf32, #tpu.memory_space<vmem>>, %arg4: memref<32x1xf32, #tpu.memory_space<vmem>>, %arg5: memref<32x1xf32, #tpu.memory_space<vmem>>, %arg6: memref<32x162xf32, #tpu.memory_space<vmem>>) attributes {dimension_semantics = [#tpu.dimension_semantics<arbitrary>], iteration_bounds = array<i64: 1>, scalar_prefetch = 0 : i64, scratch_operands = 0 : i64, tpu.core_type = #tpu.core_type<tc>, window_params = [{pipeline_mode = #tpu.pipeline_mode<synchronous>, transform_indices = @transform_0, window_bounds = array<i64: 64, 162>}, {pipeline_mode = #tpu.pipeline_mode<synchronous>, transform_indices = @transform_1, window_bounds = array<i64: 4, 32, 64>}, {pipeline_mode = #tpu.pipeline_mode<synchronous>, transform_indices = @transform_2, window_bounds = array<i64: 1, 162>}, {pipeline_mode = #tpu.pipeline_mode<synchronous>, transform_indices = @transform_3, window_bounds = array<i64: 32, 1>}, {pipeline_mode = #tpu.pipeline_mode<synchronous>, transform_indices = @transform_4, window_bounds = array<i64: 32, 1>}, {pipeline_mode = #tpu.pipeline_mode<synchronous>, transform_indices = @transform_5, window_bounds = array<i64: 32, 162>}]} {
    %c0 = arith.constant 0 : index
    %c0_0 = arith.constant 0 : index
    %0 = vector.load %arg1[%c0, %c0_0] : memref<64x162xbf16, #tpu.memory_space<vmem>>, vector<64x162xbf16>
    %c0_1 = arith.constant 0 : index
    %c0_2 = arith.constant 0 : index
    %c0_3 = arith.constant 0 : index
    %1 = vector.load %arg2[%c0_1, %c0_2, %c0_3] : memref<4x32x64xbf16, #tpu.memory_space<vmem>>, vector<1x32x64xbf16>
    %2 = vector.shape_cast %1 : vector<1x32x64xbf16> to vector<32x64xbf16>
    %cst = arith.constant dense<0.000000e+00> : vector<32x162xf32>
    %3 = tpu.matmul %2, %0, %cst {dimension_numbers = #tpu.dot_dimension_numbers<[1], [0], [0], [1], [0, 0, 1, 1], [], []>} : vector<32x64xbf16>, vector<64x162xbf16>, vector<32x162xf32> -> vector<32x162xf32>
    %c1 = arith.constant 1 : index
    %c0_4 = arith.constant 0 : index
    %c0_5 = arith.constant 0 : index
    %4 = vector.load %arg2[%c1, %c0_4, %c0_5] : memref<4x32x64xbf16, #tpu.memory_space<vmem>>, vector<1x32x64xbf16>
    %5 = vector.shape_cast %4 : vector<1x32x64xbf16> to vector<32x64xbf16>
    %cst_6 = arith.constant dense<0.000000e+00> : vector<32x162xf32>
    %6 = tpu.matmul %5, %0, %cst_6 {dimension_numbers = #tpu.dot_dimension_numbers<[1], [0], [0], [1], [0, 0, 1, 1], [], []>} : vector<32x64xbf16>, vector<64x162xbf16>, vector<32x162xf32> -> vector<32x162xf32>
    %7 = vector.extract_strided_slice %6 {offsets = [0, 1], sizes = [32, 161], strides = [1, 1]} : vector<32x162xf32> to vector<32x161xf32>
    %8 = vector.extract_strided_slice %6 {offsets = [0, 0], sizes = [32, 1], strides = [1, 1]} : vector<32x162xf32> to vector<32x1xf32>
    %9 = tpu.concatenate %7, %8 in 1 : vector<32x161xf32>, vector<32x1xf32> -> vector<32x162xf32>
    %10 = arith.addf %3, %9 : vector<32x162xf32>
    %c2 = arith.constant 2 : index
    %c0_7 = arith.constant 0 : index
    %c0_8 = arith.constant 0 : index
    %11 = vector.load %arg2[%c2, %c0_7, %c0_8] : memref<4x32x64xbf16, #tpu.memory_space<vmem>>, vector<1x32x64xbf16>
    %12 = vector.shape_cast %11 : vector<1x32x64xbf16> to vector<32x64xbf16>
    %cst_9 = arith.constant dense<0.000000e+00> : vector<32x162xf32>
    %13 = tpu.matmul %12, %0, %cst_9 {dimension_numbers = #tpu.dot_dimension_numbers<[1], [0], [0], [1], [0, 0, 1, 1], [], []>} : vector<32x64xbf16>, vector<64x162xbf16>, vector<32x162xf32> -> vector<32x162xf32>
    %14 = vector.extract_strided_slice %13 {offsets = [0, 9], sizes = [32, 153], strides = [1, 1]} : vector<32x162xf32> to vector<32x153xf32>
    %15 = vector.extract_strided_slice %13 {offsets = [0, 0], sizes = [32, 9], strides = [1, 1]} : vector<32x162xf32> to vector<32x9xf32>
    %16 = tpu.concatenate %14, %15 in 1 : vector<32x153xf32>, vector<32x9xf32> -> vector<32x162xf32>
    %17 = arith.addf %10, %16 : vector<32x162xf32>
    %c3 = arith.constant 3 : index
    %c0_10 = arith.constant 0 : index
    %c0_11 = arith.constant 0 : index
    %18 = vector.load %arg2[%c3, %c0_10, %c0_11] : memref<4x32x64xbf16, #tpu.memory_space<vmem>>, vector<1x32x64xbf16>
    %19 = vector.shape_cast %18 : vector<1x32x64xbf16> to vector<32x64xbf16>
    %cst_12 = arith.constant dense<0.000000e+00> : vector<32x162xf32>
    %20 = tpu.matmul %19, %0, %cst_12 {dimension_numbers = #tpu.dot_dimension_numbers<[1], [0], [0], [1], [0, 0, 1, 1], [], []>} : vector<32x64xbf16>, vector<64x162xbf16>, vector<32x162xf32> -> vector<32x162xf32>
    %21 = vector.extract_strided_slice %20 {offsets = [0, 10], sizes = [32, 152], strides = [1, 1]} : vector<32x162xf32> to vector<32x152xf32>
    %22 = vector.extract_strided_slice %20 {offsets = [0, 0], sizes = [32, 10], strides = [1, 1]} : vector<32x162xf32> to vector<32x10xf32>
    %23 = tpu.concatenate %21, %22 in 1 : vector<32x152xf32>, vector<32x10xf32> -> vector<32x162xf32>
    %24 = arith.addf %17, %23 : vector<32x162xf32>
    %c0_13 = arith.constant 0 : index
    %c0_14 = arith.constant 0 : index
    %25 = vector.load %arg3[%c0_13, %c0_14] : memref<1x162xf32, #tpu.memory_space<vmem>>, vector<1x162xf32>
    %26 = vector.broadcast %25 : vector<1x162xf32> to vector<32x162xf32>
    %27 = arith.mulf %24, %26 : vector<32x162xf32>
    %cst_15 = arith.constant dense<0.000000e+00> : vector<32xf32>
    %28 = vector.multi_reduction <add>, %27, %cst_15 [1] : vector<32x162xf32> to vector<32xf32>
    %29 = vector.shape_cast %28 : vector<32xf32> to vector<32x1xf32>
    %cst_16 = arith.constant 7.812500e-03 : f32
    %30 = vector.broadcast %cst_16 : f32 to vector<32x1xf32>
    %31 = arith.mulf %29, %30 : vector<32x1xf32>
    %32 = vector.broadcast %31 : vector<32x1xf32> to vector<32x162xf32>
    %33 = arith.subf %24, %32 : vector<32x162xf32>
    %34 = vector.broadcast %25 : vector<1x162xf32> to vector<32x162xf32>
    %35 = arith.mulf %33, %34 : vector<32x162xf32>
    %36 = arith.mulf %35, %35 : vector<32x162xf32>
    %cst_17 = arith.constant dense<0.000000e+00> : vector<32xf32>
    %37 = vector.multi_reduction <add>, %36, %cst_17 [1] : vector<32x162xf32> to vector<32xf32>
    %38 = vector.shape_cast %37 : vector<32xf32> to vector<32x1xf32>
    %cst_18 = arith.constant 7.812500e-03 : f32
    %39 = vector.broadcast %cst_18 : f32 to vector<32x1xf32>
    %40 = arith.mulf %38, %39 : vector<32x1xf32>
    %41 = vector.broadcast %31 : vector<32x1xf32> to vector<32x162xf32>
    %42 = arith.subf %24, %41 : vector<32x162xf32>
    %cst_19 = arith.constant 9.99999974E-6 : f32
    %43 = vector.broadcast %cst_19 : f32 to vector<32x1xf32>
    %44 = arith.addf %40, %43 : vector<32x1xf32>
    %45 = math.rsqrt %44 : vector<32x1xf32>
    %46 = vector.broadcast %45 : vector<32x1xf32> to vector<32x162xf32>
    %47 = arith.mulf %42, %46 : vector<32x162xf32>
    %c0_20 = arith.constant 0 : index
    %c0_21 = arith.constant 0 : index
    %48 = vector.load %arg4[%c0_20, %c0_21] : memref<32x1xf32, #tpu.memory_space<vmem>>, vector<32x1xf32>
    %49 = vector.broadcast %48 : vector<32x1xf32> to vector<32x162xf32>
    %50 = arith.mulf %47, %49 : vector<32x162xf32>
    %c0_22 = arith.constant 0 : index
    %c0_23 = arith.constant 0 : index
    %51 = vector.load %arg5[%c0_22, %c0_23] : memref<32x1xf32, #tpu.memory_space<vmem>>, vector<32x1xf32>
    %52 = vector.broadcast %51 : vector<32x1xf32> to vector<32x162xf32>
    %53 = arith.addf %50, %52 : vector<32x162xf32>
    %cst_24 = arith.constant 0.000000e+00 : f32
    %54 = vector.broadcast %cst_24 : f32 to vector<32x162xf32>
    %55 = arith.cmpf oge, %53, %54 : vector<32x162xf32>
    %cst_25 = arith.constant 2.000000e-01 : f32
    %56 = vector.broadcast %cst_25 : f32 to vector<32x162xf32>
    %57 = arith.mulf %56, %53 : vector<32x162xf32>
    %58 = arith.select %55, %53, %57 : vector<32x162xi1>, vector<32x162xf32>
    %c0_26 = arith.constant 0 : index
    %c0_27 = arith.constant 0 : index
    %59 = vector.load %arg6[%c0_26, %c0_27] : memref<32x162xf32, #tpu.memory_space<vmem>>, vector<32x162xf32>
    tpu.vector_store %arg6[%c0_26, %c0_27], %58 {strides = array<i32>} : memref<32x162xf32, #tpu.memory_space<vmem>>, vector<32x162xf32>,
    return
  }
  func.func @transform_0(%arg0: i32) -> (i32, i32) {
    %c0_i32 = arith.constant 0 : i32
    %c0_i32_0 = arith.constant 0 : i32
    %c0_i32_1 = arith.constant 0 : i32
    return %c0_i32, %c0_i32_0 : i32, i32
  }
  func.func @transform_1(%arg0: i32) -> (i32, i32, i32) {
    %c0_i32 = arith.constant 0 : i32
    %c0_i32_0 = arith.constant 0 : i32
    %c0_i32_1 = arith.constant 0 : i32
    %c0_i32_2 = arith.constant 0 : i32
    return %c0_i32, %c0_i32_0, %c0_i32_1 : i32, i32, i32
  }
  func.func @transform_2(%arg0: i32) -> (i32, i32) {
    %c0_i32 = arith.constant 0 : i32
    %c0_i32_0 = arith.constant 0 : i32
    %c0_i32_1 = arith.constant 0 : i32
    return %c0_i32, %c0_i32_0 : i32, i32
  }
  func.func @transform_3(%arg0: i32) -> (i32, i32) {
    %c0_i32 = arith.constant 0 : i32
    %c0_i32_0 = arith.constant 0 : i32
    %c0_i32_1 = arith.constant 0 : i32
    return %c0_i32, %c0_i32_0 : i32, i32
  }
  func.func @transform_4(%arg0: i32) -> (i32, i32) {
    %c0_i32 = arith.constant 0 : i32
    %c0_i32_0 = arith.constant 0 : i32
    %c0_i32_1 = arith.constant 0 : i32
    return %c0_i32, %c0_i32_0 : i32, i32
  }
  func.func @transform_5(%arg0: i32) -> (i32, i32) {
    %c0_i32 = arith.constant 0 : i32
    %c0_i32_0 = arith.constant 0 : i32
    %c0_i32_1 = arith.constant 0 : i32
    return %c0_i32, %c0_i32_0 : i32, i32
  }
}

module attributes {stable_mosaic.version = 11 : i64} {
  func.func @_fused_conv_kernel(%arg0: i32, %arg1: memref<128x50xbf16, #tpu.memory_space<vmem>>, %arg2: memref<4x64x128xbf16, #tpu.memory_space<vmem>>, %arg3: memref<1x50xf32, #tpu.memory_space<vmem>>, %arg4: memref<64x1xf32, #tpu.memory_space<vmem>>, %arg5: memref<64x1xf32, #tpu.memory_space<vmem>>, %arg6: memref<64x50xf32, #tpu.memory_space<vmem>>) attributes {dimension_semantics = [#tpu.dimension_semantics<arbitrary>], iteration_bounds = array<i64: 1>, scalar_prefetch = 0 : i64, scratch_operands = 0 : i64, tpu.core_type = #tpu.core_type<tc>, window_params = [{pipeline_mode = #tpu.pipeline_mode<synchronous>, transform_indices = @transform_0, window_bounds = array<i64: 128, 50>}, {pipeline_mode = #tpu.pipeline_mode<synchronous>, transform_indices = @transform_1, window_bounds = array<i64: 4, 64, 128>}, {pipeline_mode = #tpu.pipeline_mode<synchronous>, transform_indices = @transform_2, window_bounds = array<i64: 1, 50>}, {pipeline_mode = #tpu.pipeline_mode<synchronous>, transform_indices = @transform_3, window_bounds = array<i64: 64, 1>}, {pipeline_mode = #tpu.pipeline_mode<synchronous>, transform_indices = @transform_4, window_bounds = array<i64: 64, 1>}, {pipeline_mode = #tpu.pipeline_mode<synchronous>, transform_indices = @transform_5, window_bounds = array<i64: 64, 50>}]} {
    %c0 = arith.constant 0 : index
    %c0_0 = arith.constant 0 : index
    %0 = vector.load %arg1[%c0, %c0_0] : memref<128x50xbf16, #tpu.memory_space<vmem>>, vector<128x50xbf16>
    %c0_1 = arith.constant 0 : index
    %c0_2 = arith.constant 0 : index
    %c0_3 = arith.constant 0 : index
    %1 = vector.load %arg2[%c0_1, %c0_2, %c0_3] : memref<4x64x128xbf16, #tpu.memory_space<vmem>>, vector<1x64x128xbf16>
    %2 = vector.shape_cast %1 : vector<1x64x128xbf16> to vector<64x128xbf16>
    %cst = arith.constant dense<0.000000e+00> : vector<64x50xf32>
    %3 = tpu.matmul %2, %0, %cst {dimension_numbers = #tpu.dot_dimension_numbers<[1], [0], [0], [1], [0, 0, 1, 1], [], []>} : vector<64x128xbf16>, vector<128x50xbf16>, vector<64x50xf32> -> vector<64x50xf32>
    %c1 = arith.constant 1 : index
    %c0_4 = arith.constant 0 : index
    %c0_5 = arith.constant 0 : index
    %4 = vector.load %arg2[%c1, %c0_4, %c0_5] : memref<4x64x128xbf16, #tpu.memory_space<vmem>>, vector<1x64x128xbf16>
    %5 = vector.shape_cast %4 : vector<1x64x128xbf16> to vector<64x128xbf16>
    %cst_6 = arith.constant dense<0.000000e+00> : vector<64x50xf32>
    %6 = tpu.matmul %5, %0, %cst_6 {dimension_numbers = #tpu.dot_dimension_numbers<[1], [0], [0], [1], [0, 0, 1, 1], [], []>} : vector<64x128xbf16>, vector<128x50xbf16>, vector<64x50xf32> -> vector<64x50xf32>
    %7 = vector.extract_strided_slice %6 {offsets = [0, 1], sizes = [64, 49], strides = [1, 1]} : vector<64x50xf32> to vector<64x49xf32>
    %8 = vector.extract_strided_slice %6 {offsets = [0, 0], sizes = [64, 1], strides = [1, 1]} : vector<64x50xf32> to vector<64x1xf32>
    %9 = tpu.concatenate %7, %8 in 1 : vector<64x49xf32>, vector<64x1xf32> -> vector<64x50xf32>
    %10 = arith.addf %3, %9 : vector<64x50xf32>
    %c2 = arith.constant 2 : index
    %c0_7 = arith.constant 0 : index
    %c0_8 = arith.constant 0 : index
    %11 = vector.load %arg2[%c2, %c0_7, %c0_8] : memref<4x64x128xbf16, #tpu.memory_space<vmem>>, vector<1x64x128xbf16>
    %12 = vector.shape_cast %11 : vector<1x64x128xbf16> to vector<64x128xbf16>
    %cst_9 = arith.constant dense<0.000000e+00> : vector<64x50xf32>
    %13 = tpu.matmul %12, %0, %cst_9 {dimension_numbers = #tpu.dot_dimension_numbers<[1], [0], [0], [1], [0, 0, 1, 1], [], []>} : vector<64x128xbf16>, vector<128x50xbf16>, vector<64x50xf32> -> vector<64x50xf32>
    %14 = vector.extract_strided_slice %13 {offsets = [0, 5], sizes = [64, 45], strides = [1, 1]} : vector<64x50xf32> to vector<64x45xf32>
    %15 = vector.extract_strided_slice %13 {offsets = [0, 0], sizes = [64, 5], strides = [1, 1]} : vector<64x50xf32> to vector<64x5xf32>
    %16 = tpu.concatenate %14, %15 in 1 : vector<64x45xf32>, vector<64x5xf32> -> vector<64x50xf32>
    %17 = arith.addf %10, %16 : vector<64x50xf32>
    %c3 = arith.constant 3 : index
    %c0_10 = arith.constant 0 : index
    %c0_11 = arith.constant 0 : index
    %18 = vector.load %arg2[%c3, %c0_10, %c0_11] : memref<4x64x128xbf16, #tpu.memory_space<vmem>>, vector<1x64x128xbf16>
    %19 = vector.shape_cast %18 : vector<1x64x128xbf16> to vector<64x128xbf16>
    %cst_12 = arith.constant dense<0.000000e+00> : vector<64x50xf32>
    %20 = tpu.matmul %19, %0, %cst_12 {dimension_numbers = #tpu.dot_dimension_numbers<[1], [0], [0], [1], [0, 0, 1, 1], [], []>} : vector<64x128xbf16>, vector<128x50xbf16>, vector<64x50xf32> -> vector<64x50xf32>
    %21 = vector.extract_strided_slice %20 {offsets = [0, 6], sizes = [64, 44], strides = [1, 1]} : vector<64x50xf32> to vector<64x44xf32>
    %22 = vector.extract_strided_slice %20 {offsets = [0, 0], sizes = [64, 6], strides = [1, 1]} : vector<64x50xf32> to vector<64x6xf32>
    %23 = tpu.concatenate %21, %22 in 1 : vector<64x44xf32>, vector<64x6xf32> -> vector<64x50xf32>
    %24 = arith.addf %17, %23 : vector<64x50xf32>
    %c0_13 = arith.constant 0 : index
    %c0_14 = arith.constant 0 : index
    %25 = vector.load %arg3[%c0_13, %c0_14] : memref<1x50xf32, #tpu.memory_space<vmem>>, vector<1x50xf32>
    %26 = vector.broadcast %25 : vector<1x50xf32> to vector<64x50xf32>
    %27 = arith.mulf %24, %26 : vector<64x50xf32>
    %cst_15 = arith.constant dense<0.000000e+00> : vector<64xf32>
    %28 = vector.multi_reduction <add>, %27, %cst_15 [1] : vector<64x50xf32> to vector<64xf32>
    %29 = vector.shape_cast %28 : vector<64xf32> to vector<64x1xf32>
    %cst_16 = arith.constant 3.125000e-02 : f32
    %30 = vector.broadcast %cst_16 : f32 to vector<64x1xf32>
    %31 = arith.mulf %29, %30 : vector<64x1xf32>
    %32 = vector.broadcast %31 : vector<64x1xf32> to vector<64x50xf32>
    %33 = arith.subf %24, %32 : vector<64x50xf32>
    %34 = vector.broadcast %25 : vector<1x50xf32> to vector<64x50xf32>
    %35 = arith.mulf %33, %34 : vector<64x50xf32>
    %36 = arith.mulf %35, %35 : vector<64x50xf32>
    %cst_17 = arith.constant dense<0.000000e+00> : vector<64xf32>
    %37 = vector.multi_reduction <add>, %36, %cst_17 [1] : vector<64x50xf32> to vector<64xf32>
    %38 = vector.shape_cast %37 : vector<64xf32> to vector<64x1xf32>
    %cst_18 = arith.constant 3.125000e-02 : f32
    %39 = vector.broadcast %cst_18 : f32 to vector<64x1xf32>
    %40 = arith.mulf %38, %39 : vector<64x1xf32>
    %41 = vector.broadcast %31 : vector<64x1xf32> to vector<64x50xf32>
    %42 = arith.subf %24, %41 : vector<64x50xf32>
    %cst_19 = arith.constant 9.99999974E-6 : f32
    %43 = vector.broadcast %cst_19 : f32 to vector<64x1xf32>
    %44 = arith.addf %40, %43 : vector<64x1xf32>
    %45 = math.rsqrt %44 : vector<64x1xf32>
    %46 = vector.broadcast %45 : vector<64x1xf32> to vector<64x50xf32>
    %47 = arith.mulf %42, %46 : vector<64x50xf32>
    %c0_20 = arith.constant 0 : index
    %c0_21 = arith.constant 0 : index
    %48 = vector.load %arg4[%c0_20, %c0_21] : memref<64x1xf32, #tpu.memory_space<vmem>>, vector<64x1xf32>
    %49 = vector.broadcast %48 : vector<64x1xf32> to vector<64x50xf32>
    %50 = arith.mulf %47, %49 : vector<64x50xf32>
    %c0_22 = arith.constant 0 : index
    %c0_23 = arith.constant 0 : index
    %51 = vector.load %arg5[%c0_22, %c0_23] : memref<64x1xf32, #tpu.memory_space<vmem>>, vector<64x1xf32>
    %52 = vector.broadcast %51 : vector<64x1xf32> to vector<64x50xf32>
    %53 = arith.addf %50, %52 : vector<64x50xf32>
    %cst_24 = arith.constant 0.000000e+00 : f32
    %54 = vector.broadcast %cst_24 : f32 to vector<64x50xf32>
    %55 = arith.cmpf oge, %53, %54 : vector<64x50xf32>
    %cst_25 = arith.constant 2.000000e-01 : f32
    %56 = vector.broadcast %cst_25 : f32 to vector<64x50xf32>
    %57 = arith.mulf %56, %53 : vector<64x50xf32>
    %58 = arith.select %55, %53, %57 : vector<64x50xi1>, vector<64x50xf32>
    %c0_26 = arith.constant 0 : index
    %c0_27 = arith.constant 0 : index
    %59 = vector.load %arg6[%c0_26, %c0_27] : memref<64x50xf32, #tpu.memory_space<vmem>>, vector<64x50xf32>
    tpu.vector_store %arg6[%c0_26, %c0_27], %58 {strides = array<i32>} : memref<64x50xf32, #tpu.memory_space<vmem>>, vector<64x50xf32>,
    return
  }
  func.func @transform_0(%arg0: i32) -> (i32, i32) {
    %c0_i32 = arith.constant 0 : i32
    %c0_i32_0 = arith.constant 0 : i32
    %c0_i32_1 = arith.constant 0 : i32
    return %c0_i32, %c0_i32_0 : i32, i32
  }
  func.func @transform_1(%arg0: i32) -> (i32, i32, i32) {
    %c0_i32 = arith.constant 0 : i32
    %c0_i32_0 = arith.constant 0 : i32
    %c0_i32_1 = arith.constant 0 : i32
    %c0_i32_2 = arith.constant 0 : i32
    return %c0_i32, %c0_i32_0, %c0_i32_1 : i32, i32, i32
  }
  func.func @transform_2(%arg0: i32) -> (i32, i32) {
    %c0_i32 = arith.constant 0 : i32
    %c0_i32_0 = arith.constant 0 : i32
    %c0_i32_1 = arith.constant 0 : i32
    return %c0_i32, %c0_i32_0 : i32, i32
  }
  func.func @transform_3(%arg0: i32) -> (i32, i32) {
    %c0_i32 = arith.constant 0 : i32
    %c0_i32_0 = arith.constant 0 : i32
    %c0_i32_1 = arith.constant 0 : i32
    return %c0_i32, %c0_i32_0 : i32, i32
  }
  func.func @transform_4(%arg0: i32) -> (i32, i32) {
    %c0_i32 = arith.constant 0 : i32
    %c0_i32_0 = arith.constant 0 : i32
    %c0_i32_1 = arith.constant 0 : i32
    return %c0_i32, %c0_i32_0 : i32, i32
  }
  func.func @transform_5(%arg0: i32) -> (i32, i32) {
    %c0_i32 = arith.constant 0 : i32
    %c0_i32_0 = arith.constant 0 : i32
    %c0_i32_1 = arith.constant 0 : i32
    return %c0_i32, %c0_i32_0 : i32, i32
  }
}

</mosaic_0001>

<llo_original>
// kernel: discriminator_forward.4
$region0: #{discriminator_forward.4}
  #allocation0 [shape = 'u32[]', space=smem, size = 0x4, offset = 0x4, fixed_abs, tag = 'smem constant byte address 0x4 - core index']
  #allocation1 [shape = 'u32[72,128]{1,0:T(1,128)}', space=vmem, size = 0x9000, scoped, tag = 'internal scratch']
  %s0 = inlined_call_operand.vmem [shape: bf16[16,2178], index: 0, kind: input, shape index: {}]
  %s1 = inlined_call_operand.vmem [shape: bf16[4,8,16], index: 1, kind: input, shape index: {}]
  %s2 = inlined_call_operand.vmem [shape: f32[1,2178], index: 2, kind: input, shape index: {}]
  %s3 = inlined_call_operand.vmem [shape: f32[8,1], index: 3, kind: input, shape index: {}]
  %s4 = inlined_call_operand.vmem [shape: f32[8,1], index: 4, kind: input, shape index: {}]
  %s5 = inlined_call_operand.vmem [shape: f32[8,2178], index: 5, kind: output, shape index: {}]
  %s6 = sld [smem:[#allocation0]]
  $region30: #{discriminator_forward.4} parent=0
    _
  %s8 = ssub.s32 1, %s6
  %s9 = scalar_select 0, %s8, %s6
  // Predicated region
  $region2: #{discriminator_forward.4} parent=0 // pred_check
    _
  $region3: #{discriminator_forward.4} parent=0 // pred_check_branch
    %11 = sbr.rel (0) target = $region5
  $region4: #{discriminator_forward.4} parent=0 // pred_region
    _
  $region5: #{discriminator_forward.4} parent=0 // pred_fallthru
    _
  // Predicated region
  $region6: #{discriminator_forward.4} parent=0 // pred_check
    _
  $region7: #{discriminator_forward.4} parent=0 // pred_check_branch
    %13 = sbr.rel (0) target = $region9
  $region8: #{discriminator_forward.4} parent=0 // pred_region
    _
  $region9: #{discriminator_forward.4} parent=0 // pred_fallthru
    _
  // Predicated region
  $region10: #{discriminator_forward.4} parent=0 // pred_check
    _
  $region11: #{discriminator_forward.4} parent=0 // pred_check_branch
    %15 = sbr.rel (0) target = $region13
  $region12: #{discriminator_forward.4} parent=0 // pred_region
    _
  $region13: #{discriminator_forward.4} parent=0 // pred_fallthru
    _
  // Predicated region
  $region14: #{discriminator_forward.4} parent=0 // pred_check
    _
  $region15: #{discriminator_forward.4} parent=0 // pred_check_branch
    %17 = sbr.rel (0) target = $region17
  $region16: #{discriminator_forward.4} parent=0 // pred_region
    _
  $region17: #{discriminator_forward.4} parent=0 // pred_fallthru
    _
  // Predicated region
  $region18: #{discriminator_forward.4} parent=0 // pred_check
    _
  $region19: #{discriminator_forward.4} parent=0 // pred_check_branch
    %19 = sbr.rel (0) target = $region21
  $region20: #{discriminator_forward.4} parent=0 // pred_region
    _
  $region21: #{discriminator_forward.4} parent=0 // pred_fallthru
    _
  %v21 = vld [vmem:[%s0] sm:$0xff]
  %v22 = vld [vmem:[%s0 + $0x8] sm:$0xff]
  %v23 = vld [vmem:[%s0 + $0x10] sm:$0xff]
  %v24 = vld [vmem:[%s0 + $0x18] sm:$0xff]
  %v25 = vld [vmem:[%s0 + $0x20] sm:$0xff]
  %v26 = vld [vmem:[%s0 + $0x28] sm:$0xff]
  %v27 = vld [vmem:[%s0 + $0x30] sm:$0xff]
  %v28 = vld [vmem:[%s0 + $0x38] sm:$0xff]
  %v29 = vld [vmem:[%s0 + $0x40] sm:$0xff]
  %v30 = vld [vmem:[%s0 + $0x48] sm:$0xff]
  %v31 = vld [vmem:[%s0 + $0x50] sm:$0xff]
  %v32 = vld [vmem:[%s0 + $0x58] sm:$0xff]
  %v33 = vld [vmem:[%s0 + $0x60] sm:$0xff]
  %v34 = vld [vmem:[%s0 + $0x68] sm:$0xff]
  %v35 = vld [vmem:[%s0 + $0x70] sm:$0xff]
  %v36 = vld [vmem:[%s0 + $0x78] sm:$0xff]
  %v37 = vld [vmem:[%s0 + $0x80] sm:$0xff]
  %v38 = vld [vmem:[%s0 + $0x88] sm:$0xff]
  %v39 = vld [vmem:[%s1] sm:$0xf]
  %s40 = scalar_lea.vmem %s1, 4
  %v41 = vld [vmem:[%s40] sm:$0xf]
  %v60 = vunpack.c.l.b16 %v21
  %v61 = vunpack.c.h.b16 %v21
  %v62 = vunpack.c.l.b16 %v22
  %v63 = vunpack.c.h.b16 %v22
  %v64 = vunpack.c.l.b16 %v23
  %v65 = vunpack.c.h.b16 %v23
  %v66 = vunpack.c.l.b16 %v24
  %v67 = vunpack.c.h.b16 %v24
  %v68 = vunpack.c.l.b16 %v25
  %v69 = vunpack.c.h.b16 %v25
  %v70 = vunpack.c.l.b16 %v26
  %v71 = vunpack.c.h.b16 %v26
  %v72 = vunpack.c.l.b16 %v27
  %v73 = vunpack.c.h.b16 %v27
  %v74 = vunpack.c.l.b16 %v28
  %v75 = vunpack.c.h.b16 %v28
  %v76 = vunpack.c.l.b16 %v29
  %v77 = vunpack.c.h.b16 %v29
  %v78 = vunpack.c.l.b16 %v30
  %v79 = vunpack.c.h.b16 %v30
  %v80 = vunpack.c.l.b16 %v31
  %v81 = vunpack.c.h.b16 %v31
  %v82 = vunpack.c.l.b16 %v32
  %v83 = vunpack.c.h.b16 %v32
  %v84 = vunpack.c.l.b16 %v33
  %v85 = vunpack.c.h.b16 %v33
  %v86 = vunpack.c.l.b16 %v34
  %v87 = vunpack.c.h.b16 %v34
  %v88 = vunpack.c.l.b16 %v35
  %v89 = vunpack.c.h.b16 %v35
  %v90 = vunpack.c.l.b16 %v36
  %v91 = vunpack.c.h.b16 %v36
  %v92 = vunpack.c.l.b16 %v37
  %v93 = vunpack.c.h.b16 %v37
  %v94 = vunpack.c.l.b16 %v38
  %v95 = vunpack.c.h.b16 %v38
  %v96 = vpack.c.b16 %v78, %v60
  %v97 = vpack.c.b16 %v79, %v61
  %v98 = vpack.c.b16 %v80, %v62
  %v99 = vpack.c.b16 %v81, %v63
  %v100 = vpack.c.b16 %v82, %v64
  %v101 = vpack.c.b16 %v83, %v65
  %v102 = vpack.c.b16 %v84, %v66
  %v103 = vpack.c.b16 %v85, %v67
  %v104 = vpack.c.b16 %v86, %v68
  %v105 = vpack.c.b16 %v87, %v69
  %v106 = vpack.c.b16 %v88, %v70
  %v107 = vpack.c.b16 %v89, %v71
  %v108 = vpack.c.b16 %v90, %v72
  %v109 = vpack.c.b16 %v91, %v73
  %v110 = vpack.c.b16 %v92, %v74
  %v111 = vpack.c.b16 %v93, %v75
  %v112 = vpack.c.b16 %v94, %v76
  %v113 = vpack.c.b16 %v95, %v77
  %vm132 = vcmask 130048
  %v134 = vsel %vm132, %v41, 0
  %136 = vmatpush.bf16.msra.mxu0 0
  %137 = vmatpush.bf16.msra.mxu0 0
  %138 = vmatpush.bf16.msra.mxu0 0
  %139 = vmatpush.bf16.msra.mxu0 0
  %140 = vmatpush.bf16.msra.mxu0 0
  %141 = vmatpush.bf16.msra.mxu0 0
  %142 = vmatpush.bf16.msra.mxu0 0
  %143 = vmatpush.bf16.msra.mxu0 %v96
  %144 = vmatmul.bf16.gmra.mxu0 %v134
  %v145 = vpop.f32.mrf.mxu0
  %v146 = vadd.f32 0.0, %v145
  %v147 = vpop.f32.mrf.mxu0
  %148 = vdwg.mxu0
  %149 = vmatpush.bf16.msra.mxu0 0
  %150 = vmatpush.bf16.msra.mxu0 0
  %151 = vmatpush.bf16.msra.mxu0 0
  %152 = vmatpush.bf16.msra.mxu0 0
  %153 = vmatpush.bf16.msra.mxu0 0
  %154 = vmatpush.bf16.msra.mxu0 0
  %155 = vmatpush.bf16.msra.mxu0 0
  %156 = vmatpush.bf16.msra.mxu0 %v97
  %157 = vmatmul.bf16.gmra.mxu0 %v134
  %v158 = vpop.f32.mrf.mxu0
  %v159 = vadd.f32 0.0, %v158
  %v160 = vpop.f32.mrf.mxu0
  %161 = vdwg.mxu0
  %162 = vmatpush.bf16.msra.mxu0 0
  %163 = vmatpush.bf16.msra.mxu0 0
  %164 = vmatpush.bf16.msra.mxu0 0
  %165 = vmatpush.bf16.msra.mxu0 0
  %166 = vmatpush.bf16.msra.mxu0 0
  %167 = vmatpush.bf16.msra.mxu0 0
  %168 = vmatpush.bf16.msra.mxu0 0
  %169 = vmatpush.bf16.msra.mxu0 %v98
  %170 = vmatmul.bf16.gmra.mxu0 %v134
  %v171 = vpop.f32.mrf.mxu0
  %v172 = vadd.f32 0.0, %v171
  %v173 = vpop.f32.mrf.mxu0
  %174 = vdwg.mxu0
  %175 = vmatpush.bf16.msra.mxu0 0
  %176 = vmatpush.bf16.msra.mxu0 0
  %177 = vmatpush.bf16.msra.mxu0 0
  %178 = vmatpush.bf16.msra.mxu0 0
  %179 = vmatpush.bf16.msra.mxu0 0
  %180 = vmatpush.bf16.msra.mxu0 0
  %181 = vmatpush.bf16.msra.mxu0 0
  %182 = vmatpush.bf16.msra.mxu0 %v99
  %183 = vmatmul.bf16.gmra.mxu0 %v134
  %v184 = vpop.f32.mrf.mxu0
  %v185 = vadd.f32 0.0, %v184
  %v186 = vpop.f32.mrf.mxu0
  %187 = vdwg.mxu0
  %188 = vmatpush.bf16.msra.mxu0 0
  %189 = vmatpush.bf16.msra.mxu0 0
  %190 = vmatpush.bf16.msra.mxu0 0
  %191 = vmatpush.bf16.msra.mxu0 0
  %192 = vmatpush.bf16.msra.mxu0 0
  %193 = vmatpush.bf16.msra.mxu0 0
  %194 = vmatpush.bf16.msra.mxu0 0
  %195 = vmatpush.bf16.msra.mxu0 %v100
  %196 = vmatmul.bf16.gmra.mxu0 %v134
  %v197 = vpop.f32.mrf.mxu0
  %v198 = vadd.f32 0.0, %v197
  %v199 = vpop.f32.mrf.mxu0
  %200 = vdwg.mxu0
  %201 = vmatpush.bf16.msra.mxu0 0
  %202 = vmatpush.bf16.msra.mxu0 0
  %203 = vmatpush.bf16.msra.mxu0 0
  %204 = vmatpush.bf16.msra.mxu0 0
  %205 = vmatpush.bf16.msra.mxu0 0
  %206 = vmatpush.bf16.msra.mxu0 0
  %207 = vmatpush.bf16.msra.mxu0 0
  %208 = vmatpush.bf16.msra.mxu0 %v101
  %209 = vmatmul.bf16.gmra.mxu0 %v134
  %v210 = vpop.f32.mrf.mxu0
  %v211 = vadd.f32 0.0, %v210
  %v212 = vpop.f32.mrf.mxu0
  %213 = vdwg.mxu0
  %214 = vmatpush.bf16.msra.mxu0 0
  %215 = vmatpush.bf16.msra.mxu0 0
  %216 = vmatpush.bf16.msra.mxu0 0
  %217 = vmatpush.bf16.msra.mxu0 0
  %218 = vmatpush.bf16.msra.mxu0 0
  %219 = vmatpush.bf16.msra.mxu0 0
  %220 = vmatpush.bf16.msra.mxu0 0
  %221 = vmatpush.bf16.msra.mxu0 %v102
  %222 = vmatmul.bf16.gmra.mxu0 %v134
  %v223 = vpop.f32.mrf.mxu0
  %v224 = vadd.f32 0.0, %v223
  %v225 = vpop.f32.mrf.mxu0
  %226 = vdwg.mxu0
  %227 = vmatpush.bf16.msra.mxu0 0
  %228 = vmatpush.bf16.msra.mxu0 0
  %229 = vmatpush.bf16.msra.mxu0 0
  %230 = vmatpush.bf16.msra.mxu0 0
  %231 = vmatpush.bf16.msra.mxu0 0
  %232 = vmatpush.bf16.msra.mxu0 0
  %233 = vmatpush.bf16.msra.mxu0 0
  %234 = vmatpush.bf16.msra.mxu0 %v103
  %235 = vmatmul.bf16.gmra.mxu0 %v134
  %v236 = vpop.f32.mrf.mxu0
  %v237 = vadd.f32 0.0, %v236
  %v238 = vpop.f32.mrf.mxu0
  %239 = vdwg.mxu0
  %240 = vmatpush.bf16.msra.mxu0 0
  %241 = vmatpush.bf16.msra.mxu0 0
  %242 = vmatpush.bf16.msra.mxu0 0
  %243 = vmatpush.bf16.msra.mxu0 0
  %244 = vmatpush.bf16.msra.mxu0 0
  %245 = vmatpush.bf16.msra.mxu0 0
  %246 = vmatpush.bf16.msra.mxu0 0
  %247 = vmatpush.bf16.msra.mxu0 %v104
  %248 = vmatmul.bf16.gmra.mxu0 %v134
  %v249 = vpop.f32.mrf.mxu0
  %v250 = vadd.f32 0.0, %v249
  %v251 = vpop.f32.mrf.mxu0
  %252 = vdwg.mxu0
  %253 = vmatpush.bf16.msra.mxu0 0
  %254 = vmatpush.bf16.msra.mxu0 0
  %255 = vmatpush.bf16.msra.mxu0 0
  %256 = vmatpush.bf16.msra.mxu0 0
  %257 = vmatpush.bf16.msra.mxu0 0
  %258 = vmatpush.bf16.msra.mxu0 0
  %259 = vmatpush.bf16.msra.mxu0 0
  %260 = vmatpush.bf16.msra.mxu0 %v105
  %261 = vmatmul.bf16.gmra.mxu0 %v134
  %v262 = vpop.f32.mrf.mxu0
  %v263 = vadd.f32 0.0, %v262
  %v264 = vpop.f32.mrf.mxu0
  %265 = vdwg.mxu0
  %266 = vmatpush.bf16.msra.mxu0 0
  %267 = vmatpush.bf16.msra.mxu0 0
  %268 = vmatpush.bf16.msra.mxu0 0
  %269 = vmatpush.bf16.msra.mxu0 0
  %270 = vmatpush.bf16.msra.mxu0 0
  %271 = vmatpush.bf16.msra.mxu0 0
  %272 = vmatpush.bf16.msra.mxu0 0
  %273 = vmatpush.bf16.msra.mxu0 %v106
  %274 = vmatmul.bf16.gmra.mxu0 %v134
  %v275 = vpop.f32.mrf.mxu0
  %v276 = vadd.f32 0.0, %v275
  %v277 = vpop.f32.mrf.mxu0
  %278 = vdwg.mxu0
  %279 = vmatpush.bf16.msra.mxu0 0
  %280 = vmatpush.bf16.msra.mxu0 0
  %281 = vmatpush.bf16.msra.mxu0 0
  %282 = vmatpush.bf16.msra.mxu0 0
  %283 = vmatpush.bf16.msra.mxu0 0
  %284 = vmatpush.bf16.msra.mxu0 0
  %285 = vmatpush.bf16.msra.mxu0 0
  %286 = vmatpush.bf16.msra.mxu0 %v107
  %287 = vmatmul.bf16.gmra.mxu0 %v134
  %v288 = vpop.f32.mrf.mxu0
  %v289 = vadd.f32 0.0, %v288
  %v290 = vpop.f32.mrf.mxu0
  %291 = vdwg.mxu0
  %292 = vmatpush.bf16.msra.mxu0 0
  %293 = vmatpush.bf16.msra.mxu0 0
  %294 = vmatpush.bf16.msra.mxu0 0
  %295 = vmatpush.bf16.msra.mxu0 0
  %296 = vmatpush.bf16.msra.mxu0 0
  %297 = vmatpush.bf16.msra.mxu0 0
  %298 = vmatpush.bf16.msra.mxu0 0
  %299 = vmatpush.bf16.msra.mxu0 %v108
  %300 = vmatmul.bf16.gmra.mxu0 %v134
  %v301 = vpop.f32.mrf.mxu0
  %v302 = vadd.f32 0.0, %v301
  %v303 = vpop.f32.mrf.mxu0
  %304 = vdwg.mxu0
  %305 = vmatpush.bf16.msra.mxu0 0
  %306 = vmatpush.bf16.msra.mxu0 0
  %307 = vmatpush.bf16.msra.mxu0 0
  %308 = vmatpush.bf16.msra.mxu0 0
  %309 = vmatpush.bf16.msra.mxu0 0
  %310 = vmatpush.bf16.msra.mxu0 0
  %311 = vmatpush.bf16.msra.mxu0 0
  %312 = vmatpush.bf16.msra.mxu0 %v109
  %313 = vmatmul.bf16.gmra.mxu0 %v134
  %v314 = vpop.f32.mrf.mxu0
  %v315 = vadd.f32 0.0, %v314
  %v316 = vpop.f32.mrf.mxu0
  %317 = vdwg.mxu0
  %318 = vmatpush.bf16.msra.mxu0 0
  %319 = vmatpush.bf16.msra.mxu0 0
  %320 = vmatpush.bf16.msra.mxu0 0
  %321 = vmatpush.bf16.msra.mxu0 0
  %322 = vmatpush.bf16.msra.mxu0 0
  %323 = vmatpush.bf16.msra.mxu0 0
  %324 = vmatpush.bf16.msra.mxu0 0
  %325 = vmatpush.bf16.msra.mxu0 %v110
  %326 = vmatmul.bf16.gmra.mxu0 %v134
  %v327 = vpop.f32.mrf.mxu0
  %v328 = vadd.f32 0.0, %v327
  %v329 = vpop.f32.mrf.mxu0
  %330 = vdwg.mxu0
  %331 = vmatpush.bf16.msra.mxu0 0
  %332 = vmatpush.bf16.msra.mxu0 0
  %333 = vmatpush.bf16.msra.mxu0 0
  %334 = vmatpush.bf16.msra.mxu0 0
  %335 = vmatpush.bf16.msra.mxu0 0
  %336 = vmatpush.bf16.msra.mxu0 0
  %337 = vmatpush.bf16.msra.mxu0 0
  %338 = vmatpush.bf16.msra.mxu0 %v111
  %339 = vmatmul.bf16.gmra.mxu0 %v134
  %v340 = vpop.f32.mrf.mxu0
  %v341 = vadd.f32 0.0, %v340
  %v342 = vpop.f32.mrf.mxu0
  %343 = vdwg.mxu0
  %344 = vmatpush.bf16.msra.mxu0 0
  %345 = vmatpush.bf16.msra.mxu0 0
  %346 = vmatpush.bf16.msra.mxu0 0
  %347 = vmatpush.bf16.msra.mxu0 0
  %348 = vmatpush.bf16.msra.mxu0 0
  %349 = vmatpush.bf16.msra.mxu0 0
  %350 = vmatpush.bf16.msra.mxu0 0
  %351 = vmatpush.bf16.msra.mxu0 %v112
  %352 = vmatmul.bf16.gmra.mxu0 %v134
  %v353 = vpop.f32.mrf.mxu0
  %v354 = vadd.f32 0.0, %v353
  %v355 = vpop.f32.mrf.mxu0
  %356 = vdwg.mxu0
  %357 = vmatpush.bf16.msra.mxu0 0
  %358 = vmatpush.bf16.msra.mxu0 0
  %359 = vmatpush.bf16.msra.mxu0 0
  %360 = vmatpush.bf16.msra.mxu0 0
  %361 = vmatpush.bf16.msra.mxu0 0
  %362 = vmatpush.bf16.msra.mxu0 0
  %363 = vmatpush.bf16.msra.mxu0 0
  %364 = vmatpush.bf16.msra.mxu0 %v113
  %365 = vmatmul.bf16.gmra.mxu0 %v134
  %v366 = vpop.f32.mrf.mxu0
  %v367 = vadd.f32 0.0, %v366
  %v368 = vpop.f32.mrf.mxu0
  %369 = vdwg.mxu0
  %388 = vrot.lane.b32.xlu0 %v146, 127
  %v389 = vpop.permute.xlu0 %388
  %390 = vrot.lane.b32.xlu0 %v159, 127
  %v391 = vpop.permute.xlu0 %390
  %392 = vrot.lane.b32.xlu0 %v172, 127
  %v393 = vpop.permute.xlu0 %392
  %394 = vrot.lane.b32.xlu0 %v185, 127
  %v395 = vpop.permute.xlu0 %394
  %396 = vrot.lane.b32.xlu0 %v198, 127
  %v397 = vpop.permute.xlu0 %396
  %398 = vrot.lane.b32.xlu0 %v211, 127
  %v399 = vpop.permute.xlu0 %398
  %400 = vrot.lane.b32.xlu0 %v224, 127
  %v401 = vpop.permute.xlu0 %400
  %402 = vrot.lane.b32.xlu0 %v237, 127
  %v403 = vpop.permute.xlu0 %402
  %404 = vrot.lane.b32.xlu0 %v250, 127
  %v405 = vpop.permute.xlu0 %404
  %406 = vrot.lane.b32.xlu0 %v263, 127
  %v407 = vpop.permute.xlu0 %406
  %408 = vrot.lane.b32.xlu0 %v276, 127
  %v409 = vpop.permute.xlu0 %408
  %410 = vrot.lane.b32.xlu0 %v289, 127
  %v411 = vpop.permute.xlu0 %410
  %412 = vrot.lane.b32.xlu0 %v302, 127
  %v413 = vpop.permute.xlu0 %412
  %414 = vrot.lane.b32.xlu0 %v315, 127
  %v415 = vpop.permute.xlu0 %414
  %416 = vrot.lane.b32.xlu0 %v328, 127
  %v417 = vpop.permute.xlu0 %416
  %418 = vrot.lane.b32.xlu0 %v341, 127
  %v419 = vpop.permute.xlu0 %418
  %420 = vrot.lane.b32.xlu0 %v354, 127
  %v421 = vpop.permute.xlu0 %420
  %422 = vrot.lane.b32.xlu0 %v367, 127
  %v423 = vpop.permute.xlu0 %422
  %vm424 = vcmask 1039360
  %v425 = vsel %vm424, %v389, %v391
  %v426 = vsel %vm424, %v391, %v393
  %v427 = vsel %vm424, %v393, %v395
  %v428 = vsel %vm424, %v395, %v397
  %v429 = vsel %vm424, %v397, %v399
  %v430 = vsel %vm424, %v399, %v401
  %v431 = vsel %vm424, %v401, %v403
  %v432 = vsel %vm424, %v403, %v405
  %v433 = vsel %vm424, %v405, %v407
  %v434 = vsel %vm424, %v407, %v409
  %v435 = vsel %vm424, %v409, %v411
  %v436 = vsel %vm424, %v411, %v413
  %v437 = vsel %vm424, %v413, %v415
  %v438 = vsel %vm424, %v415, %v417
  %v439 = vsel %vm424, %v417, %v419
  %v440 = vsel %vm424, %v419, %v421
  %v441 = vsel %vm424, %v421, %v423
  %460 = vrot.lane.b32.xlu0 %v146, 1
  %v461 = vpop.permute.xlu0 %460
  %vm463 = vcmask 7168
  %v464 = vsel %vm463, %v423, %v461
  %v466 = vsel %vm132, %v39, 0
  %468 = vmatpush.bf16.msra.mxu0 0
  %469 = vmatpush.bf16.msra.mxu0 0
  %470 = vmatpush.bf16.msra.mxu0 0
  %471 = vmatpush.bf16.msra.mxu0 0
  %472 = vmatpush.bf16.msra.mxu0 0
  %473 = vmatpush.bf16.msra.mxu0 0
  %474 = vmatpush.bf16.msra.mxu0 0
  %475 = vmatpush.bf16.msra.mxu0 %v96
  %476 = vmatmul.bf16.gmra.mxu0 %v466
  %v477 = vpop.f32.mrf.mxu0
  %v478 = vadd.f32 %v425, %v477
  %v479 = vpop.f32.mrf.mxu0
  %480 = vdwg.mxu0
  %481 = vmatpush.bf16.msra.mxu0 0
  %482 = vmatpush.bf16.msra.mxu0 0
  %483 = vmatpush.bf16.msra.mxu0 0
  %484 = vmatpush.bf16.msra.mxu0 0
  %485 = vmatpush.bf16.msra.mxu0 0
  %486 = vmatpush.bf16.msra.mxu0 0
  %487 = vmatpush.bf16.msra.mxu0 0
  %488 = vmatpush.bf16.msra.mxu0 %v97
  %489 = vmatmul.bf16.gmra.mxu0 %v466
  %v490 = vpop.f32.mrf.mxu0
  %v491 = vadd.f32 %v426, %v490
  %v492 = vpop.f32.mrf.mxu0
  %493 = vdwg.mxu0
  %494 = vmatpush.bf16.msra.mxu0 0
  %495 = vmatpush.bf16.msra.mxu0 0
  %496 = vmatpush.bf16.msra.mxu0 0
  %497 = vmatpush.bf16.msra.mxu0 0
  %498 = vmatpush.bf16.msra.mxu0 0
  %499 = vmatpush.bf16.msra.mxu0 0
  %500 = vmatpush.bf16.msra.mxu0 0
  %501 = vmatpush.bf16.msra.mxu0 %v98
  %502 = vmatmul.bf16.gmra.mxu0 %v466
  %v503 = vpop.f32.mrf.mxu0
  %v504 = vadd.f32 %v427, %v503
  %v505 = vpop.f32.mrf.mxu0
  %506 = vdwg.mxu0
  %507 = vmatpush.bf16.msra.mxu0 0
  %508 = vmatpush.bf16.msra.mxu0 0
  %509 = vmatpush.bf16.msra.mxu0 0
  %510 = vmatpush.bf16.msra.mxu0 0
  %511 = vmatpush.bf16.msra.mxu0 0
  %512 = vmatpush.bf16.msra.mxu0 0
  %513 = vmatpush.bf16.msra.mxu0 0
  %514 = vmatpush.bf16.msra.mxu0 %v99
  %515 = vmatmul.bf16.gmra.mxu0 %v466
  %v516 = vpop.f32.mrf.mxu0
  %v517 = vadd.f32 %v428, %v516
  %v518 = vpop.f32.mrf.mxu0
  %519 = vdwg.mxu0
  %520 = vmatpush.bf16.msra.mxu0 0
  %521 = vmatpush.bf16.msra.mxu0 0
  %522 = vmatpush.bf16.msra.mxu0 0
  %523 = vmatpush.bf16.msra.mxu0 0
  %524 = vmatpush.bf16.msra.mxu0 0
  %525 = vmatpush.bf16.msra.mxu0 0
  %526 = vmatpush.bf16.msra.mxu0 0
  %527 = vmatpush.bf16.msra.mxu0 %v100
  %528 = vmatmul.bf16.gmra.mxu0 %v466
  %v529 = vpop.f32.mrf.mxu0
  %v530 = vadd.f32 %v429, %v529
  %v531 = vpop.f32.mrf.mxu0
  %532 = vdwg.mxu0
  %533 = vmatpush.bf16.msra.mxu0 0
  %534 = vmatpush.bf16.msra.mxu0 0
  %535 = vmatpush.bf16.msra.mxu0 0
  %536 = vmatpush.bf16.msra.mxu0 0
  %537 = vmatpush.bf16.msra.mxu0 0
  %538 = vmatpush.bf16.msra.mxu0 0
  %539 = vmatpush.bf16.msra.mxu0 0
  %540 = vmatpush.bf16.msra.mxu0 %v101
  %541 = vmatmul.bf16.gmra.mxu0 %v466
  %v542 = vpop.f32.mrf.mxu0
  %v543 = vadd.f32 %v430, %v542
  %v544 = vpop.f32.mrf.mxu0
  %545 = vdwg.mxu0
  %546 = vmatpush.bf16.msra.mxu0 0
  %547 = vmatpush.bf16.msra.mxu0 0
  %548 = vmatpush.bf16.msra.mxu0 0
  %549 = vmatpush.bf16.msra.mxu0 0
  %550 = vmatpush.bf16.msra.mxu0 0
  %551 = vmatpush.bf16.msra.mxu0 0
  %552 = vmatpush.bf16.msra.mxu0 0
  %553 = vmatpush.bf16.msra.mxu0 %v102
  %554 = vmatmul.bf16.gmra.mxu0 %v466
  %v555 = vpop.f32.mrf.mxu0
  %v556 = vadd.f32 %v431, %v555
  %v557 = vpop.f32.mrf.mxu0
  %558 = vdwg.mxu0
  %559 = vmatpush.bf16.msra.mxu0 0
  %560 = vmatpush.bf16.msra.mxu0 0
  %561 = vmatpush.bf16.msra.mxu0 0
  %562 = vmatpush.bf16.msra.mxu0 0
  %563 = vmatpush.bf16.msra.mxu0 0
  %564 = vmatpush.bf16.msra.mxu0 0
  %565 = vmatpush.bf16.msra.mxu0 0
  %566 = vmatpush.bf16.msra.mxu0 %v103
  %567 = vmatmul.bf16.gmra.mxu0 %v466
  %v568 = vpop.f32.mrf.mxu0
  %v569 = vadd.f32 %v432, %v568
  %v570 = vpop.f32.mrf.mxu0
  %571 = vdwg.mxu0
  %572 = vmatpush.bf16.msra.mxu0 0
  %573 = vmatpush.bf16.msra.mxu0 0
  %574 = vmatpush.bf16.msra.mxu0 0
  %575 = vmatpush.bf16.msra.mxu0 0
  %576 = vmatpush.bf16.msra.mxu0 0
  %577 = vmatpush.bf16.msra.mxu0 0
  %578 = vmatpush.bf16.msra.mxu0 0
  %579 = vmatpush.bf16.msra.mxu0 %v104
  %580 = vmatmul.bf16.gmra.mxu0 %v466
  %v581 = vpop.f32.mrf.mxu0
  %v582 = vadd.f32 %v433, %v581
  %v583 = vpop.f32.mrf.mxu0
  %584 = vdwg.mxu0
  %585 = vmatpush.bf16.msra.mxu0 0
  %586 = vmatpush.bf16.msra.mxu0 0
  %587 = vmatpush.bf16.msra.mxu0 0
  %588 = vmatpush.bf16.msra.mxu0 0
  %589 = vmatpush.bf16.msra.mxu0 0
  %590 = vmatpush.bf16.msra.mxu0 0
  %591 = vmatpush.bf16.msra.mxu0 0
  %592 = vmatpush.bf16.msra.mxu0 %v105
  %593 = vmatmul.bf16.gmra.mxu0 %v466
  %v594 = vpop.f32.mrf.mxu0
  %v595 = vadd.f32 %v434, %v594
  %v596 = vpop.f32.mrf.mxu0
  %597 = vdwg.mxu0
  %598 = vmatpush.bf16.msra.mxu0 0
  %599 = vmatpush.bf16.msra.mxu0 0
  %600 = vmatpush.bf16.msra.mxu0 0
  %601 = vmatpush.bf16.msra.mxu0 0
  %602 = vmatpush.bf16.msra.mxu0 0
  %603 = vmatpush.bf16.msra.mxu0 0
  %604 = vmatpush.bf16.msra.mxu0 0
  %605 = vmatpush.bf16.msra.mxu0 %v106
  %606 = vmatmul.bf16.gmra.mxu0 %v466
  %v607 = vpop.f32.mrf.mxu0
  %v608 = vadd.f32 %v435, %v607
  %v609 = vpop.f32.mrf.mxu0
  %610 = vdwg.mxu0
  %611 = vmatpush.bf16.msra.mxu0 0
  %612 = vmatpush.bf16.msra.mxu0 0
  %613 = vmatpush.bf16.msra.mxu0 0
  %614 = vmatpush.bf16.msra.mxu0 0
  %615 = vmatpush.bf16.msra.mxu0 0
  %616 = vmatpush.bf16.msra.mxu0 0
  %617 = vmatpush.bf16.msra.mxu0 0
  %618 = vmatpush.bf16.msra.mxu0 %v107
  %619 = vmatmul.bf16.gmra.mxu0 %v466
  %v620 = vpop.f32.mrf.mxu0
  %v621 = vadd.f32 %v436, %v620
  %v622 = vpop.f32.mrf.mxu0
  %623 = vdwg.mxu0
  %624 = vmatpush.bf16.msra.mxu0 0
  %625 = vmatpush.bf16.msra.mxu0 0
  %626 = vmatpush.bf16.msra.mxu0 0
  %627 = vmatpush.bf16.msra.mxu0 0
  %628 = vmatpush.bf16.msra.mxu0 0
  %629 = vmatpush.bf16.msra.mxu0 0
  %630 = vmatpush.bf16.msra.mxu0 0
  %631 = vmatpush.bf16.msra.mxu0 %v108
  %632 = vmatmul.bf16.gmra.mxu0 %v466
  %v633 = vpop.f32.mrf.mxu0
  %v634 = vadd.f32 %v437, %v633
  %v635 = vpop.f32.mrf.mxu0
  %636 = vdwg.mxu0
  %637 = vmatpush.bf16.msra.mxu0 0
  %638 = vmatpush.bf16.msra.mxu0 0
  %639 = vmatpush.bf16.msra.mxu0 0
  %640 = vmatpush.bf16.msra.mxu0 0
  %641 = vmatpush.bf16.msra.mxu0 0
  %642 = vmatpush.bf16.msra.mxu0 0
  %643 = vmatpush.bf16.msra.mxu0 0
  %644 = vmatpush.bf16.msra.mxu0 %v109
  %645 = vmatmul.bf16.gmra.mxu0 %v466
  %v646 = vpop.f32.mrf.mxu0
  %v647 = vadd.f32 %v438, %v646
  %v648 = vpop.f32.mrf.mxu0
  %649 = vdwg.mxu0
  %650 = vmatpush.bf16.msra.mxu0 0
  %651 = vmatpush.bf16.msra.mxu0 0
  %652 = vmatpush.bf16.msra.mxu0 0
  %653 = vmatpush.bf16.msra.mxu0 0
  %654 = vmatpush.bf16.msra.mxu0 0
  %655 = vmatpush.bf16.msra.mxu0 0
  %656 = vmatpush.bf16.msra.mxu0 0
  %657 = vmatpush.bf16.msra.mxu0 %v110
  %658 = vmatmul.bf16.gmra.mxu0 %v466
  %v659 = vpop.f32.mrf.mxu0
  %v660 = vadd.f32 %v439, %v659
  %v661 = vpop.f32.mrf.mxu0
  %662 = vdwg.mxu0
  %663 = vmatpush.bf16.msra.mxu0 0
  %664 = vmatpush.bf16.msra.mxu0 0
  %665 = vmatpush.bf16.msra.mxu0 0
  %666 = vmatpush.bf16.msra.mxu0 0
  %667 = vmatpush.bf16.msra.mxu0 0
  %668 = vmatpush.bf16.msra.mxu0 0
  %669 = vmatpush.bf16.msra.mxu0 0
  %670 = vmatpush.bf16.msra.mxu0 %v111
  %671 = vmatmul.bf16.gmra.mxu0 %v466
  %v672 = vpop.f32.mrf.mxu0
  %v673 = vadd.f32 %v440, %v672
  %v674 = vpop.f32.mrf.mxu0
  %675 = vdwg.mxu0
  %676 = vmatpush.bf16.msra.mxu0 0
  %677 = vmatpush.bf16.msra.mxu0 0
  %678 = vmatpush.bf16.msra.mxu0 0
  %679 = vmatpush.bf16.msra.mxu0 0
  %680 = vmatpush.bf16.msra.mxu0 0
  %681 = vmatpush.bf16.msra.mxu0 0
  %682 = vmatpush.bf16.msra.mxu0 0
  %683 = vmatpush.bf16.msra.mxu0 %v112
  %684 = vmatmul.bf16.gmra.mxu0 %v466
  %v685 = vpop.f32.mrf.mxu0
  %v686 = vadd.f32 %v441, %v685
  %v687 = vpop.f32.mrf.mxu0
  %688 = vdwg.mxu0
  %689 = vmatpush.bf16.msra.mxu0 0
  %690 = vmatpush.bf16.msra.mxu0 0
  %691 = vmatpush.bf16.msra.mxu0 0
  %692 = vmatpush.bf16.msra.mxu0 0
  %693 = vmatpush.bf16.msra.mxu0 0
  %694 = vmatpush.bf16.msra.mxu0 0
  %695 = vmatpush.bf16.msra.mxu0 0
  %696 = vmatpush.bf16.msra.mxu0 %v113
  %697 = vmatmul.bf16.gmra.mxu0 %v466
  %v698 = vpop.f32.mrf.mxu0
  %v699 = vadd.f32 %v464, %v698
  %v700 = vpop.f32.mrf.mxu0
  %701 = vdwg.mxu0
  %s702 = scalar_lea.vmem %s1, 8
  %v703 = vld [vmem:[%s702] sm:$0xf]
  %v705 = vsel %vm132, %v703, 0
  %707 = vmatpush.bf16.msra.mxu0 0
  %708 = vmatpush.bf16.msra.mxu0 0
  %709 = vmatpush.bf16.msra.mxu0 0
  %710 = vmatpush.bf16.msra.mxu0 0
  %711 = vmatpush.bf16.msra.mxu0 0
  %712 = vmatpush.bf16.msra.mxu0 0
  %713 = vmatpush.bf16.msra.mxu0 0
  %714 = vmatpush.bf16.msra.mxu0 %v96
  %715 = vmatmul.bf16.gmra.mxu0 %v705
  %v716 = vpop.f32.mrf.mxu0
  %v717 = vadd.f32 0.0, %v716
  %v718 = vpop.f32.mrf.mxu0
  %719 = vdwg.mxu0
  %720 = vmatpush.bf16.msra.mxu0 0
  %721 = vmatpush.bf16.msra.mxu0 0
  %722 = vmatpush.bf16.msra.mxu0 0
  %723 = vmatpush.bf16.msra.mxu0 0
  %724 = vmatpush.bf16.msra.mxu0 0
  %725 = vmatpush.bf16.msra.mxu0 0
  %726 = vmatpush.bf16.msra.mxu0 0
  %727 = vmatpush.bf16.msra.mxu0 %v97
  %728 = vmatmul.bf16.gmra.mxu0 %v705
  %v729 = vpop.f32.mrf.mxu0
  %v730 = vadd.f32 0.0, %v729
  %v731 = vpop.f32.mrf.mxu0
  %732 = vdwg.mxu0
  %733 = vmatpush.bf16.msra.mxu0 0
  %734 = vmatpush.bf16.msra.mxu0 0
  %735 = vmatpush.bf16.msra.mxu0 0
  %736 = vmatpush.bf16.msra.mxu0 0
  %737 = vmatpush.bf16.msra.mxu0 0
  %738 = vmatpush.bf16.msra.mxu0 0
  %739 = vmatpush.bf16.msra.mxu0 0
  %740 = vmatpush.bf16.msra.mxu0 %v98
  %741 = vmatmul.bf16.gmra.mxu0 %v705
  %v742 = vpop.f32.mrf.mxu0
  %v743 = vadd.f32 0.0, %v742
  %v744 = vpop.f32.mrf.mxu0
  %745 = vdwg.mxu0
  %746 = vmatpush.bf16.msra.mxu0 0
  %747 = vmatpush.bf16.msra.mxu0 0
  %748 = vmatpush.bf16.msra.mxu0 0
  %749 = vmatpush.bf16.msra.mxu0 0
  %750 = vmatpush.bf16.msra.mxu0 0
  %751 = vmatpush.bf16.msra.mxu0 0
  %752 = vmatpush.bf16.msra.mxu0 0
  %753 = vmatpush.bf16.msra.mxu0 %v99
  %754 = vmatmul.bf16.gmra.mxu0 %v705
  %v755 = vpop.f32.mrf.mxu0
  %v756 = vadd.f32 0.0, %v755
  %v757 = vpop.f32.mrf.mxu0
  %758 = vdwg.mxu0
  %759 = vmatpush.bf16.msra.mxu0 0
  %760 = vmatpush.bf16.msra.mxu0 0
  %761 = vmatpush.bf16.msra.mxu0 0
  %762 = vmatpush.bf16.msra.mxu0 0
  %763 = vmatpush.bf16.msra.mxu0 0
  %764 = vmatpush.bf16.msra.mxu0 0
  %765 = vmatpush.bf16.msra.mxu0 0
  %766 = vmatpush.bf16.msra.mxu0 %v100
  %767 = vmatmul.bf16.gmra.mxu0 %v705
  %v768 = vpop.f32.mrf.mxu0
  %v769 = vadd.f32 0.0, %v768
  %v770 = vpop.f32.mrf.mxu0
  %771 = vdwg.mxu0
  %772 = vmatpush.bf16.msra.mxu0 0
  %773 = vmatpush.bf16.msra.mxu0 0
  %774 = vmatpush.bf16.msra.mxu0 0
  %775 = vmatpush.bf16.msra.mxu0 0
  %776 = vmatpush.bf16.msra.mxu0 0
  %777 = vmatpush.bf16.msra.mxu0 0
  %778 = vmatpush.bf16.msra.mxu0 0
  %779 = vmatpush.bf16.msra.mxu0 %v101
  %780 = vmatmul.bf16.gmra.mxu0 %v705
  %v781 = vpop.f32.mrf.mxu0
  %v782 = vadd.f32 0.0, %v781
  %v783 = vpop.f32.mrf.mxu0
  %784 = vdwg.mxu0
  %785 = vmatpush.bf16.msra.mxu0 0
  %786 = vmatpush.bf16.msra.mxu0 0
  %787 = vmatpush.bf16.msra.mxu0 0
  %788 = vmatpush.bf16.msra.mxu0 0
  %789 = vmatpush.bf16.msra.mxu0 0
  %790 = vmatpush.bf16.msra.mxu0 0
  %791 = vmatpush.bf16.msra.mxu0 0
  %792 = vmatpush.bf16.msra.mxu0 %v102
  %793 = vmatmul.bf16.gmra.mxu0 %v705
  %v794 = vpop.f32.mrf.mxu0
  %v795 = vadd.f32 0.0, %v794
  %v796 = vpop.f32.mrf.mxu0
  %797 = vdwg.mxu0
  %798 = vmatpush.bf16.msra.mxu0 0
  %799 = vmatpush.bf16.msra.mxu0 0
  %800 = vmatpush.bf16.msra.mxu0 0
  %801 = vmatpush.bf16.msra.mxu0 0
  %802 = vmatpush.bf16.msra.mxu0 0
  %803 = vmatpush.bf16.msra.mxu0 0
  %804 = vmatpush.bf16.msra.mxu0 0
  %805 = vmatpush.bf16.msra.mxu0 %v103
  %806 = vmatmul.bf16.gmra.mxu0 %v705
  %v807 = vpop.f32.mrf.mxu0
  %v808 = vadd.f32 0.0, %v807
  %v809 = vpop.f32.mrf.mxu0
  %810 = vdwg.mxu0
  %811 = vmatpush.bf16.msra.mxu0 0
  %812 = vmatpush.bf16.msra.mxu0 0
  %813 = vmatpush.bf16.msra.mxu0 0
  %814 = vmatpush.bf16.msra.mxu0 0
  %815 = vmatpush.bf16.msra.mxu0 0
  %816 = vmatpush.bf16.msra.mxu0 0
  %817 = vmatpush.bf16.msra.mxu0 0
  %818 = vmatpush.bf16.msra.mxu0 %v104
  %819 = vmatmul.bf16.gmra.mxu0 %v705
  %v820 = vpop.f32.mrf.mxu0
  %v821 = vadd.f32 0.0, %v820
  %v822 = vpop.f32.mrf.mxu0
  %823 = vdwg.mxu0
  %824 = vmatpush.bf16.msra.mxu0 0
  %825 = vmatpush.bf16.msra.mxu0 0
  %826 = vmatpush.bf16.msra.mxu0 0
  %827 = vmatpush.bf16.msra.mxu0 0
  %828 = vmatpush.bf16.msra.mxu0 0
  %829 = vmatpush.bf16.msra.mxu0 0
  %830 = vmatpush.bf16.msra.mxu0 0
  %831 = vmatpush.bf16.msra.mxu0 %v105
  %832 = vmatmul.bf16.gmra.mxu0 %v705
  %v833 = vpop.f32.mrf.mxu0
  %v834 = vadd.f32 0.0, %v833
  %v835 = vpop.f32.mrf.mxu0
  %836 = vdwg.mxu0
  %837 = vmatpush.bf16.msra.mxu0 0
  %838 = vmatpush.bf16.msra.mxu0 0
  %839 = vmatpush.bf16.msra.mxu0 0
  %840 = vmatpush.bf16.msra.mxu0 0
  %841 = vmatpush.bf16.msra.mxu0 0
  %842 = vmatpush.bf16.msra.mxu0 0
  %843 = vmatpush.bf16.msra.mxu0 0
  %844 = vmatpush.bf16.msra.mxu0 %v106
  %845 = vmatmul.bf16.gmra.mxu0 %v705
  %v846 = vpop.f32.mrf.mxu0
  %v847 = vadd.f32 0.0, %v846
  %v848 = vpop.f32.mrf.mxu0
  %849 = vdwg.mxu0
  %850 = vmatpush.bf16.msra.mxu0 0
  %851 = vmatpush.bf16.msra.mxu0 0
  %852 = vmatpush.bf16.msra.mxu0 0
  %853 = vmatpush.bf16.msra.mxu0 0
  %854 = vmatpush.bf16.msra.mxu0 0
  %855 = vmatpush.bf16.msra.mxu0 0
  %856 = vmatpush.bf16.msra.mxu0 0
  %857 = vmatpush.bf16.msra.mxu0 %v107
  %858 = vmatmul.bf16.gmra.mxu0 %v705
  %v859 = vpop.f32.mrf.mxu0
  %v860 = vadd.f32 0.0, %v859
  %v861 = vpop.f32.mrf.mxu0
  %862 = vdwg.mxu0
  %863 = vmatpush.bf16.msra.mxu0 0
  %864 = vmatpush.bf16.msra.mxu0 0
  %865 = vmatpush.bf16.msra.mxu0 0
  %866 = vmatpush.bf16.msra.mxu0 0
  %867 = vmatpush.bf16.msra.mxu0 0
  %868 = vmatpush.bf16.msra.mxu0 0
  %869 = vmatpush.bf16.msra.mxu0 0
  %870 = vmatpush.bf16.msra.mxu0 %v108
  %871 = vmatmul.bf16.gmra.mxu0 %v705
  %v872 = vpop.f32.mrf.mxu0
  %v873 = vadd.f32 0.0, %v872
  %v874 = vpop.f32.mrf.mxu0
  %875 = vdwg.mxu0
  %876 = vmatpush.bf16.msra.mxu0 0
  %877 = vmatpush.bf16.msra.mxu0 0
  %878 = vmatpush.bf16.msra.mxu0 0
  %879 = vmatpush.bf16.msra.mxu0 0
  %880 = vmatpush.bf16.msra.mxu0 0
  %881 = vmatpush.bf16.msra.mxu0 0
  %882 = vmatpush.bf16.msra.mxu0 0
  %883 = vmatpush.bf16.msra.mxu0 %v109
  %884 = vmatmul.bf16.gmra.mxu0 %v705
  %v885 = vpop.f32.mrf.mxu0
  %v886 = vadd.f32 0.0, %v885
  %v887 = vpop.f32.mrf.mxu0
  %888 = vdwg.mxu0
  %889 = vmatpush.bf16.msra.mxu0 0
  %890 = vmatpush.bf16.msra.mxu0 0
  %891 = vmatpush.bf16.msra.mxu0 0
  %892 = vmatpush.bf16.msra.mxu0 0
  %893 = vmatpush.bf16.msra.mxu0 0
  %894 = vmatpush.bf16.msra.mxu0 0
  %895 = vmatpush.bf16.msra.mxu0 0
  %896 = vmatpush.bf16.msra.mxu0 %v110
  %897 = vmatmul.bf16.gmra.mxu0 %v705
  %v898 = vpop.f32.mrf.mxu0
  %v899 = vadd.f32 0.0, %v898
  %v900 = vpop.f32.mrf.mxu0
  %901 = vdwg.mxu0
  %902 = vmatpush.bf16.msra.mxu0 0
  %903 = vmatpush.bf16.msra.mxu0 0
  %904 = vmatpush.bf16.msra.mxu0 0
  %905 = vmatpush.bf16.msra.mxu0 0
  %906 = vmatpush.bf16.msra.mxu0 0
  %907 = vmatpush.bf16.msra.mxu0 0
  %908 = vmatpush.bf16.msra.mxu0 0
  %909 = vmatpush.bf16.msra.mxu0 %v111
  %910 = vmatmul.bf16.gmra.mxu0 %v705
  %v911 = vpop.f32.mrf.mxu0
  %v912 = vadd.f32 0.0, %v911
  %v913 = vpop.f32.mrf.mxu0
  %914 = vdwg.mxu0
  %915 = vmatpush.bf16.msra.mxu0 0
  %916 = vmatpush.bf16.msra.mxu0 0
  %917 = vmatpush.bf16.msra.mxu0 0
  %918 = vmatpush.bf16.msra.mxu0 0
  %919 = vmatpush.bf16.msra.mxu0 0
  %920 = vmatpush.bf16.msra.mxu0 0
  %921 = vmatpush.bf16.msra.mxu0 0
  %922 = vmatpush.bf16.msra.mxu0 %v112
  %923 = vmatmul.bf16.gmra.mxu0 %v705
  %v924 = vpop.f32.mrf.mxu0
  %v925 = vadd.f32 0.0, %v924
  %v926 = vpop.f32.mrf.mxu0
  %927 = vdwg.mxu0
  %928 = vmatpush.bf16.msra.mxu0 0
  %929 = vmatpush.bf16.msra.mxu0 0
  %930 = vmatpush.bf16.msra.mxu0 0
  %931 = vmatpush.bf16.msra.mxu0 0
  %932 = vmatpush.bf16.msra.mxu0 0
  %933 = vmatpush.bf16.msra.mxu0 0
  %934 = vmatpush.bf16.msra.mxu0 0
  %935 = vmatpush.bf16.msra.mxu0 %v113
  %936 = vmatmul.bf16.gmra.mxu0 %v705
  %v937 = vpop.f32.mrf.mxu0
  %v938 = vadd.f32 0.0, %v937
  %v939 = vpop.f32.mrf.mxu0
  %940 = vdwg.mxu0
  %959 = vrot.lane.b32.xlu0 %v717, 95
  %v960 = vpop.permute.xlu0 %959
  %961 = vrot.lane.b32.xlu0 %v730, 95
  %v962 = vpop.permute.xlu0 %961
  %963 = vrot.lane.b32.xlu0 %v743, 95
  %v964 = vpop.permute.xlu0 %963
  %965 = vrot.lane.b32.xlu0 %v756, 95
  %v966 = vpop.permute.xlu0 %965
  %967 = vrot.lane.b32.xlu0 %v769, 95
  %v968 = vpop.permute.xlu0 %967
  %969 = vrot.lane.b32.xlu0 %v782, 95
  %v970 = vpop.permute.xlu0 %969
  %971 = vrot.lane.b32.xlu0 %v795, 95
  %v972 = vpop.permute.xlu0 %971
  %973 = vrot.lane.b32.xlu0 %v808, 95
  %v974 = vpop.permute.xlu0 %973
  %975 = vrot.lane.b32.xlu0 %v821, 95
  %v976 = vpop.permute.xlu0 %975
  %977 = vrot.lane.b32.xlu0 %v834, 95
  %v978 = vpop.permute.xlu0 %977
  %979 = vrot.lane.b32.xlu0 %v847, 95
  %v980 = vpop.permute.xlu0 %979
  %981 = vrot.lane.b32.xlu0 %v860, 95
  %v982 = vpop.permute.xlu0 %981
  %983 = vrot.lane.b32.xlu0 %v873, 95
  %v984 = vpop.permute.xlu0 %983
  %985 = vrot.lane.b32.xlu0 %v886, 95
  %v986 = vpop.permute.xlu0 %985
  %987 = vrot.lane.b32.xlu0 %v899, 95
  %v988 = vpop.permute.xlu0 %987
  %989 = vrot.lane.b32.xlu0 %v912, 95
  %v990 = vpop.permute.xlu0 %989
  %991 = vrot.lane.b32.xlu0 %v925, 95
  %v992 = vpop.permute.xlu0 %991
  %993 = vrot.lane.b32.xlu0 %v938, 95
  %v994 = vpop.permute.xlu0 %993
  %vm995 = vcmask 777216
  %v996 = vsel %vm995, %v960, %v962
  %v997 = vsel %vm995, %v962, %v964
  %v998 = vsel %vm995, %v964, %v966
  %v999 = vsel %vm995, %v966, %v968
  %v1000 = vsel %vm995, %v968, %v970
  %v1001 = vsel %vm995, %v970, %v972
  %v1002 = vsel %vm995, %v972, %v974
  %v1003 = vsel %vm995, %v974, %v976
  %v1004 = vsel %vm995, %v976, %v978
  %v1005 = vsel %vm995, %v978, %v980
  %v1006 = vsel %vm995, %v980, %v982
  %v1007 = vsel %vm995, %v982, %v984
  %v1008 = vsel %vm995, %v984, %v986
  %v1009 = vsel %vm995, %v986, %v988
  %v1010 = vsel %vm995, %v988, %v990
  %v1011 = vsel %vm995, %v990, %v992
  %v1012 = vsel %vm995, %v992, %v994
  %1030 = vrot.lane.b32.xlu0 %v717, 97
  %v1031 = vpop.permute.xlu0 %1030
  %vm1033 = vcmask 793600
  %v1034 = vsel %vm1033, %v1012, %v1031
  %v1035 = vadd.f32 %v478, %v996
  %v1036 = vadd.f32 %v491, %v997
  %v1037 = vadd.f32 %v504, %v998
  %v1038 = vadd.f32 %v517, %v999
  %v1039 = vadd.f32 %v530, %v1000
  %v1040 = vadd.f32 %v543, %v1001
  %v1041 = vadd.f32 %v556, %v1002
  %v1042 = vadd.f32 %v569, %v1003
  %v1043 = vadd.f32 %v582, %v1004
  %v1044 = vadd.f32 %v595, %v1005
  %v1045 = vadd.f32 %v608, %v1006
  %v1046 = vadd.f32 %v621, %v1007
  %v1047 = vadd.f32 %v634, %v1008
  %v1048 = vadd.f32 %v647, %v1009
  %v1049 = vadd.f32 %v660, %v1010
  %v1050 = vadd.f32 %v673, %v1011
  %v1051 = vadd.f32 %v686, %v1034
  %v1052 = vadd.f32 %v699, %v1031
  %s1053 = scalar_lea.vmem %s1, 12
  %v1054 = vld [vmem:[%s1053] sm:$0xf]
  %v1056 = vsel %vm132, %v1054, 0
  %1058 = vmatpush.bf16.msra.mxu0 0
  %1059 = vmatpush.bf16.msra.mxu0 0
  %1060 = vmatpush.bf16.msra.mxu0 0
  %1061 = vmatpush.bf16.msra.mxu0 0
  %1062 = vmatpush.bf16.msra.mxu0 0
  %1063 = vmatpush.bf16.msra.mxu0 0
  %1064 = vmatpush.bf16.msra.mxu0 0
  %1065 = vmatpush.bf16.msra.mxu0 %v96
  %1066 = vmatmul.bf16.gmra.mxu0 %v1056
  %v1067 = vpop.f32.mrf.mxu0
  %v1068 = vadd.f32 0.0, %v1067
  %v1069 = vpop.f32.mrf.mxu0
  %1070 = vdwg.mxu0
  %1071 = vmatpush.bf16.msra.mxu0 0
  %1072 = vmatpush.bf16.msra.mxu0 0
  %1073 = vmatpush.bf16.msra.mxu0 0
  %1074 = vmatpush.bf16.msra.mxu0 0
  %1075 = vmatpush.bf16.msra.mxu0 0
  %1076 = vmatpush.bf16.msra.mxu0 0
  %1077 = vmatpush.bf16.msra.mxu0 0
  %1078 = vmatpush.bf16.msra.mxu0 %v97
  %1079 = vmatmul.bf16.gmra.mxu0 %v1056
  %v1080 = vpop.f32.mrf.mxu0
  %v1081 = vadd.f32 0.0, %v1080
  %v1082 = vpop.f32.mrf.mxu0
  %1083 = vdwg.mxu0
  %1084 = vmatpush.bf16.msra.mxu0 0
  %1085 = vmatpush.bf16.msra.mxu0 0
  %1086 = vmatpush.bf16.msra.mxu0 0
  %1087 = vmatpush.bf16.msra.mxu0 0
  %1088 = vmatpush.bf16.msra.mxu0 0
  %1089 = vmatpush.bf16.msra.mxu0 0
  %1090 = vmatpush.bf16.msra.mxu0 0
  %1091 = vmatpush.bf16.msra.mxu0 %v98
  %1092 = vmatmul.bf16.gmra.mxu0 %v1056
  %v1093 = vpop.f32.mrf.mxu0
  %v1094 = vadd.f32 0.0, %v1093
  %v1095 = vpop.f32.mrf.mxu0
  %1096 = vdwg.mxu0
  %1097 = vmatpush.bf16.msra.mxu0 0
  %1098 = vmatpush.bf16.msra.mxu0 0
  %1099 = vmatpush.bf16.msra.mxu0 0
  %1100 = vmatpush.bf16.msra.mxu0 0
  %1101 = vmatpush.bf16.msra.mxu0 0
  %1102 = vmatpush.bf16.msra.mxu0 0
  %1103 = vmatpush.bf16.msra.mxu0 0
  %1104 = vmatpush.bf16.msra.mxu0 %v99
  %1105 = vmatmul.bf16.gmra.mxu0 %v1056
  %v1106 = vpop.f32.mrf.mxu0
  %v1107 = vadd.f32 0.0, %v1106
  %v1108 = vpop.f32.mrf.mxu0
  %1109 = vdwg.mxu0
  %1110 = vmatpush.bf16.msra.mxu0 0
  %1111 = vmatpush.bf16.msra.mxu0 0
  %1112 = vmatpush.bf16.msra.mxu0 0
  %1113 = vmatpush.bf16.msra.mxu0 0
  %1114 = vmatpush.bf16.msra.mxu0 0
  %1115 = vmatpush.bf16.msra.mxu0 0
  %1116 = vmatpush.bf16.msra.mxu0 0
  %1117 = vmatpush.bf16.msra.mxu0 %v100
  %1118 = vmatmul.bf16.gmra.mxu0 %v1056
  %v1119 = vpop.f32.mrf.mxu0
  %v1120 = vadd.f32 0.0, %v1119
  %v1121 = vpop.f32.mrf.mxu0
  %1122 = vdwg.mxu0
  %1123 = vmatpush.bf16.msra.mxu0 0
  %1124 = vmatpush.bf16.msra.mxu0 0
  %1125 = vmatpush.bf16.msra.mxu0 0
  %1126 = vmatpush.bf16.msra.mxu0 0
  %1127 = vmatpush.bf16.msra.mxu0 0
  %1128 = vmatpush.bf16.msra.mxu0 0
  %1129 = vmatpush.bf16.msra.mxu0 0
  %1130 = vmatpush.bf16.msra.mxu0 %v101
  %1131 = vmatmul.bf16.gmra.mxu0 %v1056
  %v1132 = vpop.f32.mrf.mxu0
  %v1133 = vadd.f32 0.0, %v1132
  %v1134 = vpop.f32.mrf.mxu0
  %1135 = vdwg.mxu0
  %1136 = vmatpush.bf16.msra.mxu0 0
  %1137 = vmatpush.bf16.msra.mxu0 0
  %1138 = vmatpush.bf16.msra.mxu0 0
  %1139 = vmatpush.bf16.msra.mxu0 0
  %1140 = vmatpush.bf16.msra.mxu0 0
  %1141 = vmatpush.bf16.msra.mxu0 0
  %1142 = vmatpush.bf16.msra.mxu0 0
  %1143 = vmatpush.bf16.msra.mxu0 %v102
  %1144 = vmatmul.bf16.gmra.mxu0 %v1056
  %v1145 = vpop.f32.mrf.mxu0
  %v1146 = vadd.f32 0.0, %v1145
  %v1147 = vpop.f32.mrf.mxu0
  %1148 = vdwg.mxu0
  %1149 = vmatpush.bf16.msra.mxu0 0
  %1150 = vmatpush.bf16.msra.mxu0 0
  %1151 = vmatpush.bf16.msra.mxu0 0
  %1152 = vmatpush.bf16.msra.mxu0 0
  %1153 = vmatpush.bf16.msra.mxu0 0
  %1154 = vmatpush.bf16.msra.mxu0 0
  %1155 = vmatpush.bf16.msra.mxu0 0
  %1156 = vmatpush.bf16.msra.mxu0 %v103
  %1157 = vmatmul.bf16.gmra.mxu0 %v1056
  %v1158 = vpop.f32.mrf.mxu0
  %v1159 = vadd.f32 0.0, %v1158
  %v1160 = vpop.f32.mrf.mxu0
  %1161 = vdwg.mxu0
  %1162 = vmatpush.bf16.msra.mxu0 0
  %1163 = vmatpush.bf16.msra.mxu0 0
  %1164 = vmatpush.bf16.msra.mxu0 0
  %1165 = vmatpush.bf16.msra.mxu0 0
  %1166 = vmatpush.bf16.msra.mxu0 0
  %1167 = vmatpush.bf16.msra.mxu0 0
  %1168 = vmatpush.bf16.msra.mxu0 0
  %1169 = vmatpush.bf16.msra.mxu0 %v104
  %1170 = vmatmul.bf16.gmra.mxu0 %v1056
  %v1171 = vpop.f32.mrf.mxu0
  %v1172 = vadd.f32 0.0, %v1171
  %v1173 = vpop.f32.mrf.mxu0
  %1174 = vdwg.mxu0
  %1175 = vmatpush.bf16.msra.mxu0 0
  %1176 = vmatpush.bf16.msra.mxu0 0
  %1177 = vmatpush.bf16.msra.mxu0 0
  %1178 = vmatpush.bf16.msra.mxu0 0
  %1179 = vmatpush.bf16.msra.mxu0 0
  %1180 = vmatpush.bf16.msra.mxu0 0
  %1181 = vmatpush.bf16.msra.mxu0 0
  %1182 = vmatpush.bf16.msra.mxu0 %v105
  %1183 = vmatmul.bf16.gmra.mxu0 %v1056
  %v1184 = vpop.f32.mrf.mxu0
  %v1185 = vadd.f32 0.0, %v1184
  %v1186 = vpop.f32.mrf.mxu0
  %1187 = vdwg.mxu0
  %1188 = vmatpush.bf16.msra.mxu0 0
  %1189 = vmatpush.bf16.msra.mxu0 0
  %1190 = vmatpush.bf16.msra.mxu0 0
  %1191 = vmatpush.bf16.msra.mxu0 0
  %1192 = vmatpush.bf16.msra.mxu0 0
  %1193 = vmatpush.bf16.msra.mxu0 0
  %1194 = vmatpush.bf16.msra.mxu0 0
  %1195 = vmatpush.bf16.msra.mxu0 %v106
  %1196 = vmatmul.bf16.gmra.mxu0 %v1056
  %v1197 = vpop.f32.mrf.mxu0
  %v1198 = vadd.f32 0.0, %v1197
  %v1199 = vpop.f32.mrf.mxu0
  %1200 = vdwg.mxu0
  %1201 = vmatpush.bf16.msra.mxu0 0
  %1202 = vmatpush.bf16.msra.mxu0 0
  %1203 = vmatpush.bf16.msra.mxu0 0
  %1204 = vmatpush.bf16.msra.mxu0 0
  %1205 = vmatpush.bf16.msra.mxu0 0
  %1206 = vmatpush.bf16.msra.mxu0 0
  %1207 = vmatpush.bf16.msra.mxu0 0
  %1208 = vmatpush.bf16.msra.mxu0 %v107
  %1209 = vmatmul.bf16.gmra.mxu0 %v1056
  %v1210 = vpop.f32.mrf.mxu0
  %v1211 = vadd.f32 0.0, %v1210
  %v1212 = vpop.f32.mrf.mxu0
  %1213 = vdwg.mxu0
  %1214 = vmatpush.bf16.msra.mxu0 0
  %1215 = vmatpush.bf16.msra.mxu0 0
  %1216 = vmatpush.bf16.msra.mxu0 0
  %1217 = vmatpush.bf16.msra.mxu0 0
  %1218 = vmatpush.bf16.msra.mxu0 0
  %1219 = vmatpush.bf16.msra.mxu0 0
  %1220 = vmatpush.bf16.msra.mxu0 0
  %1221 = vmatpush.bf16.msra.mxu0 %v108
  %1222 = vmatmul.bf16.gmra.mxu0 %v1056
  %v1223 = vpop.f32.mrf.mxu0
  %v1224 = vadd.f32 0.0, %v1223
  %v1225 = vpop.f32.mrf.mxu0
  %1226 = vdwg.mxu0
  %1227 = vmatpush.bf16.msra.mxu0 0
  %1228 = vmatpush.bf16.msra.mxu0 0
  %1229 = vmatpush.bf16.msra.mxu0 0
  %1230 = vmatpush.bf16.msra.mxu0 0
  %1231 = vmatpush.bf16.msra.mxu0 0
  %1232 = vmatpush.bf16.msra.mxu0 0
  %1233 = vmatpush.bf16.msra.mxu0 0
  %1234 = vmatpush.bf16.msra.mxu0 %v109
  %1235 = vmatmul.bf16.gmra.mxu0 %v1056
  %v1236 = vpop.f32.mrf.mxu0
  %v1237 = vadd.f32 0.0, %v1236
  %v1238 = vpop.f32.mrf.mxu0
  %1239 = vdwg.mxu0
  %1240 = vmatpush.bf16.msra.mxu0 0
  %1241 = vmatpush.bf16.msra.mxu0 0
  %1242 = vmatpush.bf16.msra.mxu0 0
  %1243 = vmatpush.bf16.msra.mxu0 0
  %1244 = vmatpush.bf16.msra.mxu0 0
  %1245 = vmatpush.bf16.msra.mxu0 0
  %1246 = vmatpush.bf16.msra.mxu0 0
  %1247 = vmatpush.bf16.msra.mxu0 %v110
  %1248 = vmatmul.bf16.gmra.mxu0 %v1056
  %v1249 = vpop.f32.mrf.mxu0
  %v1250 = vadd.f32 0.0, %v1249
  %v1251 = vpop.f32.mrf.mxu0
  %1252 = vdwg.mxu0
  %1253 = vmatpush.bf16.msra.mxu0 0
  %1254 = vmatpush.bf16.msra.mxu0 0
  %1255 = vmatpush.bf16.msra.mxu0 0
  %1256 = vmatpush.bf16.msra.mxu0 0
  %1257 = vmatpush.bf16.msra.mxu0 0
  %1258 = vmatpush.bf16.msra.mxu0 0
  %1259 = vmatpush.bf16.msra.mxu0 0
  %1260 = vmatpush.bf16.msra.mxu0 %v111
  %1261 = vmatmul.bf16.gmra.mxu0 %v1056
  %v1262 = vpop.f32.mrf.mxu0
  %v1263 = vadd.f32 0.0, %v1262
  %v1264 = vpop.f32.mrf.mxu0
  %1265 = vdwg.mxu0
  %1266 = vmatpush.bf16.msra.mxu0 0
  %1267 = vmatpush.bf16.msra.mxu0 0
  %1268 = vmatpush.bf16.msra.mxu0 0
  %1269 = vmatpush.bf16.msra.mxu0 0
  %1270 = vmatpush.bf16.msra.mxu0 0
  %1271 = vmatpush.bf16.msra.mxu0 0
  %1272 = vmatpush.bf16.msra.mxu0 0
  %1273 = vmatpush.bf16.msra.mxu0 %v112
  %1274 = vmatmul.bf16.gmra.mxu0 %v1056
  %v1275 = vpop.f32.mrf.mxu0
  %v1276 = vadd.f32 0.0, %v1275
  %v1277 = vpop.f32.mrf.mxu0
  %1278 = vdwg.mxu0
  %1279 = vmatpush.bf16.msra.mxu0 0
  %1280 = vmatpush.bf16.msra.mxu0 0
  %1281 = vmatpush.bf16.msra.mxu0 0
  %1282 = vmatpush.bf16.msra.mxu0 0
  %1283 = vmatpush.bf16.msra.mxu0 0
  %1284 = vmatpush.bf16.msra.mxu0 0
  %1285 = vmatpush.bf16.msra.mxu0 0
  %1286 = vmatpush.bf16.msra.mxu0 %v113
  %1287 = vmatmul.bf16.gmra.mxu0 %v1056
  %v1288 = vpop.f32.mrf.mxu0
  %v1289 = vadd.f32 0.0, %v1288
  %v1290 = vpop.f32.mrf.mxu0
  %1291 = vdwg.mxu0
  %1310 = vrot.lane.b32.xlu0 %v1068, 94
  %v1311 = vpop.permute.xlu0 %1310
  %1312 = vrot.lane.b32.xlu0 %v1081, 94
  %v1313 = vpop.permute.xlu0 %1312
  %1314 = vrot.lane.b32.xlu0 %v1094, 94
  %v1315 = vpop.permute.xlu0 %1314
  %1316 = vrot.lane.b32.xlu0 %v1107, 94
  %v1317 = vpop.permute.xlu0 %1316
  %1318 = vrot.lane.b32.xlu0 %v1120, 94
  %v1319 = vpop.permute.xlu0 %1318
  %1320 = vrot.lane.b32.xlu0 %v1133, 94
  %v1321 = vpop.permute.xlu0 %1320
  %1322 = vrot.lane.b32.xlu0 %v1146, 94
  %v1323 = vpop.permute.xlu0 %1322
  %1324 = vrot.lane.b32.xlu0 %v1159, 94
  %v1325 = vpop.permute.xlu0 %1324
  %1326 = vrot.lane.b32.xlu0 %v1172, 94
  %v1327 = vpop.permute.xlu0 %1326
  %1328 = vrot.lane.b32.xlu0 %v1185, 94
  %v1329 = vpop.permute.xlu0 %1328
  %1330 = vrot.lane.b32.xlu0 %v1198, 94
  %v1331 = vpop.permute.xlu0 %1330
  %1332 = vrot.lane.b32.xlu0 %v1211, 94
  %v1333 = vpop.permute.xlu0 %1332
  %1334 = vrot.lane.b32.xlu0 %v1224, 94
  %v1335 = vpop.permute.xlu0 %1334
  %1336 = vrot.lane.b32.xlu0 %v1237, 94
  %v1337 = vpop.permute.xlu0 %1336
  %1338 = vrot.lane.b32.xlu0 %v1250, 94
  %v1339 = vpop.permute.xlu0 %1338
  %1340 = vrot.lane.b32.xlu0 %v1263, 94
  %v1341 = vpop.permute.xlu0 %1340
  %1342 = vrot.lane.b32.xlu0 %v1276, 94
  %v1343 = vpop.permute.xlu0 %1342
  %1344 = vrot.lane.b32.xlu0 %v1289, 94
  %v1345 = vpop.permute.xlu0 %1344
  %vm1346 = vcmask 769024
  %v1347 = vsel %vm1346, %v1311, %v1313
  %v1348 = vsel %vm1346, %v1313, %v1315
  %v1349 = vsel %vm1346, %v1315, %v1317
  %v1350 = vsel %vm1346, %v1317, %v1319
  %v1351 = vsel %vm1346, %v1319, %v1321
  %v1352 = vsel %vm1346, %v1321, %v1323
  %v1353 = vsel %vm1346, %v1323, %v1325
  %v1354 = vsel %vm1346, %v1325, %v1327
  %v1355 = vsel %vm1346, %v1327, %v1329
  %v1356 = vsel %vm1346, %v1329, %v1331
  %v1357 = vsel %vm1346, %v1331, %v1333
  %v1358 = vsel %vm1346, %v1333, %v1335
  %v1359 = vsel %vm1346, %v1335, %v1337
  %v1360 = vsel %vm1346, %v1337, %v1339
  %v1361 = vsel %vm1346, %v1339, %v1341
  %v1362 = vsel %vm1346, %v1341, %v1343
  %v1363 = vsel %vm1346, %v1343, %v1345
  %1381 = vrot.lane.b32.xlu0 %v1068, 96
  %v1382 = vpop.permute.xlu0 %1381
  %vm1384 = vcmask 785408
  %v1385 = vsel %vm1384, %v1363, %v1382
  %v1386 = vadd.f32 %v1035, %v1347
  %v1387 = vadd.f32 %v1036, %v1348
  %v1388 = vadd.f32 %v1037, %v1349
  %v1389 = vadd.f32 %v1038, %v1350
  %v1390 = vadd.f32 %v1039, %v1351
  %v1391 = vadd.f32 %v1040, %v1352
  %v1392 = vadd.f32 %v1041, %v1353
  %v1393 = vadd.f32 %v1042, %v1354
  %v1394 = vadd.f32 %v1043, %v1355
  %v1395 = vadd.f32 %v1044, %v1356
  %v1396 = vadd.f32 %v1045, %v1357
  %v1397 = vadd.f32 %v1046, %v1358
  %v1398 = vadd.f32 %v1047, %v1359
  %v1399 = vadd.f32 %v1048, %v1360
  %v1400 = vadd.f32 %v1049, %v1361
  %v1401 = vadd.f32 %v1050, %v1362
  %v1402 = vadd.f32 %v1051, %v1385
  %v1403 = vadd.f32 %v1052, %v1382
  %vm1404 = vcmp.ge.f32.partialorder %v1386, 0.0
  %vm1405 = vcmp.ge.f32.partialorder %v1387, 0.0
  %vm1406 = vcmp.ge.f32.partialorder %v1388, 0.0
  %vm1407 = vcmp.ge.f32.partialorder %v1389, 0.0
  %vm1408 = vcmp.ge.f32.partialorder %v1390, 0.0
  %vm1409 = vcmp.ge.f32.partialorder %v1391, 0.0
  %vm1410 = vcmp.ge.f32.partialorder %v1392, 0.0
  %vm1411 = vcmp.ge.f32.partialorder %v1393, 0.0
  %vm1412 = vcmp.ge.f32.partialorder %v1394, 0.0
  %vm1413 = vcmp.ge.f32.partialorder %v1395, 0.0
  %vm1414 = vcmp.ge.f32.partialorder %v1396, 0.0
  %vm1415 = vcmp.ge.f32.partialorder %v1397, 0.0
  %vm1416 = vcmp.ge.f32.partialorder %v1398, 0.0
  %vm1417 = vcmp.ge.f32.partialorder %v1399, 0.0
  %vm1418 = vcmp.ge.f32.partialorder %v1400, 0.0
  %vm1419 = vcmp.ge.f32.partialorder %v1401, 0.0
  %vm1420 = vcmp.ge.f32.partialorder %v1402, 0.0
  %vm1421 = vcmp.ge.f32.partialorder %v1403, 0.0
  %v1422 = vmul.f32 %v1386, 0.2
  %v1423 = vmul.f32 %v1387, 0.2
  %v1424 = vmul.f32 %v1388, 0.2
  %v1425 = vmul.f32 %v1389, 0.2
  %v1426 = vmul.f32 %v1390, 0.2
  %v1427 = vmul.f32 %v1391, 0.2
  %v1428 = vmul.f32 %v1392, 0.2
  %v1429 = vmul.f32 %v1393, 0.2
  %v1430 = vmul.f32 %v1394, 0.2
  %v1431 = vmul.f32 %v1395, 0.2
  %v1432 = vmul.f32 %v1396, 0.2
  %v1433 = vmul.f32 %v1397, 0.2
  %v1434 = vmul.f32 %v1398, 0.2
  %v1435 = vmul.f32 %v1399, 0.2
  %v1436 = vmul.f32 %v1400, 0.2
  %v1437 = vmul.f32 %v1401, 0.2
  %v1438 = vmul.f32 %v1402, 0.2
  %v1439 = vmul.f32 %v1403, 0.2
  %v1440 = vsel %vm1404, %v1386, %v1422
  %v1441 = vsel %vm1405, %v1387, %v1423
  %v1442 = vsel %vm1406, %v1388, %v1424
  %v1443 = vsel %vm1407, %v1389, %v1425
  %v1444 = vsel %vm1408, %v1390, %v1426
  %v1445 = vsel %vm1409, %v1391, %v1427
  %v1446 = vsel %vm1410, %v1392, %v1428
  %v1447 = vsel %vm1411, %v1393, %v1429
  %v1448 = vsel %vm1412, %v1394, %v1430
  %v1449 = vsel %vm1413, %v1395, %v1431
  %v1450 = vsel %vm1414, %v1396, %v1432
  %v1451 = vsel %vm1415, %v1397, %v1433
  %v1452 = vsel %vm1416, %v1398, %v1434
  %v1453 = vsel %vm1417, %v1399, %v1435
  %v1454 = vsel %vm1418, %v1400, %v1436
  %v1455 = vsel %vm1419, %v1401, %v1437
  %v1456 = vsel %vm1420, %v1402, %v1438
  %v1457 = vsel %vm1421, %v1403, %v1439
  %1458 = vst [vmem:[%s5] sm:$0xff] %v1440
  %1459 = vst [vmem:[%s5 + $0x8] sm:$0xff] %v1441
  %1460 = vst [vmem:[%s5 + $0x10] sm:$0xff] %v1442
  %1461 = vst [vmem:[%s5 + $0x18] sm:$0xff] %v1443
  %1462 = vst [vmem:[%s5 + $0x20] sm:$0xff] %v1444
  %1463 = vst [vmem:[%s5 + $0x28] sm:$0xff] %v1445
  %1464 = vst [vmem:[%s5 + $0x30] sm:$0xff] %v1446
  %1465 = vst [vmem:[%s5 + $0x38] sm:$0xff] %v1447
  %1466 = vst [vmem:[%s5 + $0x40] sm:$0xff] %v1448
  %1467 = vst [vmem:[%s5 + $0x48] sm:$0xff] %v1449
  %1468 = vst [vmem:[%s5 + $0x50] sm:$0xff] %v1450
  %1469 = vst [vmem:[%s5 + $0x58] sm:$0xff] %v1451
  %1470 = vst [vmem:[%s5 + $0x60] sm:$0xff] %v1452
  %1471 = vst [vmem:[%s5 + $0x68] sm:$0xff] %v1453
  %1472 = vst [vmem:[%s5 + $0x70] sm:$0xff] %v1454
  %1473 = vst [vmem:[%s5 + $0x78] sm:$0xff] %v1455
  %1474 = vst [vmem:[%s5 + $0x80] sm:$0xff] %v1456
  %vm1475 = vcmask 15360
  %1476 = vst.msk [vmem:[%s5 + $0x88] sm:$0xff] %vm1475, %v1457
  // Predicated region
  $region22: #{discriminator_forward.4} parent=0 // pred_check
    _
  $region23: #{discriminator_forward.4} parent=0 // pred_check_branch
    %1478 = sbr.rel (0) target = $region25
  $region24: #{discriminator_forward.4} parent=0 // pred_region
    _
  $region25: #{discriminator_forward.4} parent=0 // pred_fallthru
    _
  // Predicated region
  $region26: #{discriminator_forward.4} parent=0 // pred_check
    _
  $region27: #{discriminator_forward.4} parent=0 // pred_check_branch
    %1480 = sbr.rel (0) target = $region29
  $region28: #{discriminator_forward.4} parent=0 // pred_region
    _
  $region29: #{discriminator_forward.4} parent=0 // pred_fallthru
    _

// kernel: discriminator_forward.5
$region0: #{discriminator_forward.5}
  #allocation0 [shape = 'u32[]', space=smem, size = 0x4, offset = 0x4, fixed_abs, tag = 'smem constant byte address 0x4 - core index']
  #allocation1 [shape = 'u32[72,128]{1,0:T(1,128)}', space=vmem, size = 0x9000, scoped, tag = 'internal scratch']
  %s0 = inlined_call_operand.vmem [shape: bf16[32,578], index: 0, kind: input, shape index: {}]
  %s1 = inlined_call_operand.vmem [shape: bf16[4,16,32], index: 1, kind: input, shape index: {}]
  %s2 = inlined_call_operand.vmem [shape: f32[1,578], index: 2, kind: input, shape index: {}]
  %s3 = inlined_call_operand.vmem [shape: f32[16,1], index: 3, kind: input, shape index: {}]
  %s4 = inlined_call_operand.vmem [shape: f32[16,1], index: 4, kind: input, shape index: {}]
  %s5 = inlined_call_operand.vmem [shape: f32[16,578], index: 5, kind: output, shape index: {}]
  %s6 = sld [smem:[#allocation0]]
  $region30: #{discriminator_forward.5} parent=0
    _
  %s8 = ssub.s32 1, %s6
  %s9 = scalar_select 0, %s8, %s6
  // Predicated region
  $region2: #{discriminator_forward.5} parent=0 // pred_check
    _
  $region3: #{discriminator_forward.5} parent=0 // pred_check_branch
    %11 = sbr.rel (0) target = $region5
  $region4: #{discriminator_forward.5} parent=0 // pred_region
    _
  $region5: #{discriminator_forward.5} parent=0 // pred_fallthru
    _
  // Predicated region
  $region6: #{discriminator_forward.5} parent=0 // pred_check
    _
  $region7: #{discriminator_forward.5} parent=0 // pred_check_branch
    %13 = sbr.rel (0) target = $region9
  $region8: #{discriminator_forward.5} parent=0 // pred_region
    _
  $region9: #{discriminator_forward.5} parent=0 // pred_fallthru
    _
  // Predicated region
  $region10: #{discriminator_forward.5} parent=0 // pred_check
    _
  $region11: #{discriminator_forward.5} parent=0 // pred_check_branch
    %15 = sbr.rel (0) target = $region13
  $region12: #{discriminator_forward.5} parent=0 // pred_region
    _
  $region13: #{discriminator_forward.5} parent=0 // pred_fallthru
    _
  // Predicated region
  $region14: #{discriminator_forward.5} parent=0 // pred_check
    _
  $region15: #{discriminator_forward.5} parent=0 // pred_check_branch
    %17 = sbr.rel (0) target = $region17
  $region16: #{discriminator_forward.5} parent=0 // pred_region
    _
  $region17: #{discriminator_forward.5} parent=0 // pred_fallthru
    _
  // Predicated region
  $region18: #{discriminator_forward.5} parent=0 // pred_check
    _
  $region19: #{discriminator_forward.5} parent=0 // pred_check_branch
    %19 = sbr.rel (0) target = $region21
  $region20: #{discriminator_forward.5} parent=0 // pred_region
    _
  $region21: #{discriminator_forward.5} parent=0 // pred_fallthru
    _
  %v21 = vld [vmem:[%s0] sm:$0xff]
  %v22 = vld [vmem:[%s0 + $0x8] sm:$0xff]
  %v23 = vld [vmem:[%s0 + $0x10] sm:$0xf]
  %v24 = vld [vmem:[%s0 + $0x14] sm:$0xff]
  %v25 = vld [vmem:[%s0 + $0x1c] sm:$0xff]
  %v26 = vld [vmem:[%s0 + $0x24] sm:$0xf]
  %v27 = vld [vmem:[%s0 + $0x28] sm:$0xff]
  %v28 = vld [vmem:[%s0 + $0x30] sm:$0xff]
  %v29 = vld [vmem:[%s0 + $0x38] sm:$0xf]
  %v30 = vld [vmem:[%s0 + $0x3c] sm:$0xff]
  %v31 = vld [vmem:[%s0 + $0x44] sm:$0xff]
  %v32 = vld [vmem:[%s0 + $0x4c] sm:$0xf]
  %v33 = vld [vmem:[%s1] sm:$0xf]
  %v34 = vld [vmem:[%s1 + $0x4] sm:$0xf]
  %s35 = scalar_lea.vmem %s1, 8
  %v36 = vld [vmem:[%s35] sm:$0xf]
  %v37 = vld [vmem:[%s35 + $0x4] sm:$0xf]
  %v40 = vunpack.c.l.b16 %v36
  %v41 = vunpack.c.l.b16 %v37
  %v42 = vpack.c.b16 %v41, %v40
  %v55 = vunpack.c.l.b16 %v21
  %v56 = vunpack.c.h.b16 %v21
  %v57 = vunpack.c.l.b16 %v22
  %v58 = vunpack.c.h.b16 %v22
  %v59 = vunpack.c.l.b16 %v23
  %v60 = vunpack.c.l.b16 %v24
  %v61 = vunpack.c.h.b16 %v24
  %v62 = vunpack.c.l.b16 %v25
  %v63 = vunpack.c.h.b16 %v25
  %v64 = vunpack.c.l.b16 %v26
  %v65 = vunpack.c.l.b16 %v27
  %v66 = vunpack.c.h.b16 %v27
  %v67 = vunpack.c.l.b16 %v28
  %v68 = vunpack.c.h.b16 %v28
  %v69 = vunpack.c.l.b16 %v29
  %v70 = vunpack.c.l.b16 %v30
  %v71 = vunpack.c.h.b16 %v30
  %v72 = vunpack.c.l.b16 %v31
  %v73 = vunpack.c.h.b16 %v31
  %v74 = vunpack.c.l.b16 %v32
  %v75 = vpack.c.b16 %v60, %v55
  %v76 = vpack.c.b16 %v61, %v56
  %v77 = vpack.c.b16 %v62, %v57
  %v78 = vpack.c.b16 %v63, %v58
  %v79 = vpack.c.b16 %v64, %v59
  %v80 = vpack.c.b16 %v70, %v65
  %v81 = vpack.c.b16 %v71, %v66
  %v82 = vpack.c.b16 %v72, %v67
  %v83 = vpack.c.b16 %v73, %v68
  %v84 = vpack.c.b16 %v74, %v69
  %vm95 = vcmask 261120
  %v97 = vsel %vm95, %v42, 0
  %99 = vmatpush.bf16.msra.mxu0 0
  %100 = vmatpush.bf16.msra.mxu0 0
  %101 = vmatpush.bf16.msra.mxu0 0
  %102 = vmatpush.bf16.msra.mxu0 0
  %103 = vmatpush.bf16.msra.mxu0 0
  %104 = vmatpush.bf16.msra.mxu0 0
  %105 = vmatpush.bf16.msra.mxu0 %v80
  %106 = vmatpush.bf16.msra.mxu0 %v75
  %107 = vmatmul.bf16.gmra.mxu0 %v97
  %v108 = vpop.f32.mrf.mxu0
  %v109 = vadd.f32 0.0, %v108
  %v110 = vpop.f32.mrf.mxu0
  %v111 = vadd.f32 0.0, %v110
  %112 = vdwg.mxu0
  %113 = vmatpush.bf16.msra.mxu0 0
  %114 = vmatpush.bf16.msra.mxu0 0
  %115 = vmatpush.bf16.msra.mxu0 0
  %116 = vmatpush.bf16.msra.mxu0 0
  %117 = vmatpush.bf16.msra.mxu0 0
  %118 = vmatpush.bf16.msra.mxu0 0
  %119 = vmatpush.bf16.msra.mxu0 %v81
  %120 = vmatpush.bf16.msra.mxu0 %v76
  %121 = vmatmul.bf16.gmra.mxu0 %v97
  %v122 = vpop.f32.mrf.mxu0
  %v123 = vadd.f32 0.0, %v122
  %v124 = vpop.f32.mrf.mxu0
  %v125 = vadd.f32 0.0, %v124
  %126 = vdwg.mxu0
  %127 = vmatpush.bf16.msra.mxu0 0
  %128 = vmatpush.bf16.msra.mxu0 0
  %129 = vmatpush.bf16.msra.mxu0 0
  %130 = vmatpush.bf16.msra.mxu0 0
  %131 = vmatpush.bf16.msra.mxu0 0
  %132 = vmatpush.bf16.msra.mxu0 0
  %133 = vmatpush.bf16.msra.mxu0 %v82
  %134 = vmatpush.bf16.msra.mxu0 %v77
  %135 = vmatmul.bf16.gmra.mxu0 %v97
  %v136 = vpop.f32.mrf.mxu0
  %v137 = vadd.f32 0.0, %v136
  %v138 = vpop.f32.mrf.mxu0
  %v139 = vadd.f32 0.0, %v138
  %140 = vdwg.mxu0
  %141 = vmatpush.bf16.msra.mxu0 0
  %142 = vmatpush.bf16.msra.mxu0 0
  %143 = vmatpush.bf16.msra.mxu0 0
  %144 = vmatpush.bf16.msra.mxu0 0
  %145 = vmatpush.bf16.msra.mxu0 0
  %146 = vmatpush.bf16.msra.mxu0 0
  %147 = vmatpush.bf16.msra.mxu0 %v83
  %148 = vmatpush.bf16.msra.mxu0 %v78
  %149 = vmatmul.bf16.gmra.mxu0 %v97
  %v150 = vpop.f32.mrf.mxu0
  %v151 = vadd.f32 0.0, %v150
  %v152 = vpop.f32.mrf.mxu0
  %v153 = vadd.f32 0.0, %v152
  %154 = vdwg.mxu0
  %155 = vmatpush.bf16.msra.mxu0 0
  %156 = vmatpush.bf16.msra.mxu0 0
  %157 = vmatpush.bf16.msra.mxu0 0
  %158 = vmatpush.bf16.msra.mxu0 0
  %159 = vmatpush.bf16.msra.mxu0 0
  %160 = vmatpush.bf16.msra.mxu0 0
  %161 = vmatpush.bf16.msra.mxu0 %v84
  %162 = vmatpush.bf16.msra.mxu0 %v79
  %163 = vmatmul.bf16.gmra.mxu0 %v97
  %v164 = vpop.f32.mrf.mxu0
  %v165 = vadd.f32 0.0, %v164
  %v166 = vpop.f32.mrf.mxu0
  %v167 = vadd.f32 0.0, %v166
  %168 = vdwg.mxu0
  %179 = vrot.lane.b32.xlu0 %v109, 127
  %v180 = vpop.permute.xlu0 %179
  %181 = vrot.lane.b32.xlu0 %v123, 127
  %v182 = vpop.permute.xlu0 %181
  %183 = vrot.lane.b32.xlu0 %v137, 127
  %v184 = vpop.permute.xlu0 %183
  %185 = vrot.lane.b32.xlu0 %v151, 127
  %v186 = vpop.permute.xlu0 %185
  %187 = vrot.lane.b32.xlu0 %v165, 127
  %v188 = vpop.permute.xlu0 %187
  %189 = vrot.lane.b32.xlu0 %v111, 127
  %v190 = vpop.permute.xlu0 %189
  %191 = vrot.lane.b32.xlu0 %v125, 127
  %v192 = vpop.permute.xlu0 %191
  %193 = vrot.lane.b32.xlu0 %v139, 127
  %v194 = vpop.permute.xlu0 %193
  %195 = vrot.lane.b32.xlu0 %v153, 127
  %v196 = vpop.permute.xlu0 %195
  %197 = vrot.lane.b32.xlu0 %v167, 127
  %v198 = vpop.permute.xlu0 %197
  %vm199 = vcmask 1039360
  %v200 = vsel %vm199, %v180, %v182
  %v201 = vsel %vm199, %v182, %v184
  %v202 = vsel %vm199, %v184, %v186
  %v203 = vsel %vm199, %v186, %v188
  %v204 = vsel %vm199, %v190, %v192
  %v205 = vsel %vm199, %v192, %v194
  %v206 = vsel %vm199, %v194, %v196
  %v207 = vsel %vm199, %v196, %v198
  %218 = vrot.lane.b32.xlu0 %v109, 65
  %v219 = vpop.permute.xlu0 %218
  %220 = vrot.lane.b32.xlu0 %v111, 65
  %v221 = vpop.permute.xlu0 %220
  %vm224 = vcmask 531456
  %v225 = vsel %vm224, %v188, %v219
  %v226 = vsel %vm224, %v198, %v221
  %v229 = vunpack.c.l.b16 %v33
  %v230 = vunpack.c.l.b16 %v34
  %v231 = vpack.c.b16 %v230, %v229
  %v233 = vsel %vm95, %v231, 0
  %235 = vmatpush.bf16.msra.mxu0 0
  %236 = vmatpush.bf16.msra.mxu0 0
  %237 = vmatpush.bf16.msra.mxu0 0
  %238 = vmatpush.bf16.msra.mxu0 0
  %239 = vmatpush.bf16.msra.mxu0 0
  %240 = vmatpush.bf16.msra.mxu0 0
  %241 = vmatpush.bf16.msra.mxu0 %v80
  %242 = vmatpush.bf16.msra.mxu0 %v75
  %243 = vmatmul.bf16.gmra.mxu0 %v233
  %v244 = vpop.f32.mrf.mxu0
  %v245 = vadd.f32 %v200, %v244
  %v246 = vpop.f32.mrf.mxu0
  %v247 = vadd.f32 %v204, %v246
  %248 = vdwg.mxu0
  %249 = vmatpush.bf16.msra.mxu0 0
  %250 = vmatpush.bf16.msra.mxu0 0
  %251 = vmatpush.bf16.msra.mxu0 0
  %252 = vmatpush.bf16.msra.mxu0 0
  %253 = vmatpush.bf16.msra.mxu0 0
  %254 = vmatpush.bf16.msra.mxu0 0
  %255 = vmatpush.bf16.msra.mxu0 %v81
  %256 = vmatpush.bf16.msra.mxu0 %v76
  %257 = vmatmul.bf16.gmra.mxu0 %v233
  %v258 = vpop.f32.mrf.mxu0
  %v259 = vadd.f32 %v201, %v258
  %v260 = vpop.f32.mrf.mxu0
  %v261 = vadd.f32 %v205, %v260
  %262 = vdwg.mxu0
  %263 = vmatpush.bf16.msra.mxu0 0
  %264 = vmatpush.bf16.msra.mxu0 0
  %265 = vmatpush.bf16.msra.mxu0 0
  %266 = vmatpush.bf16.msra.mxu0 0
  %267 = vmatpush.bf16.msra.mxu0 0
  %268 = vmatpush.bf16.msra.mxu0 0
  %269 = vmatpush.bf16.msra.mxu0 %v82
  %270 = vmatpush.bf16.msra.mxu0 %v77
  %271 = vmatmul.bf16.gmra.mxu0 %v233
  %v272 = vpop.f32.mrf.mxu0
  %v273 = vadd.f32 %v202, %v272
  %v274 = vpop.f32.mrf.mxu0
  %v275 = vadd.f32 %v206, %v274
  %276 = vdwg.mxu0
  %277 = vmatpush.bf16.msra.mxu0 0
  %278 = vmatpush.bf16.msra.mxu0 0
  %279 = vmatpush.bf16.msra.mxu0 0
  %280 = vmatpush.bf16.msra.mxu0 0
  %281 = vmatpush.bf16.msra.mxu0 0
  %282 = vmatpush.bf16.msra.mxu0 0
  %283 = vmatpush.bf16.msra.mxu0 %v83
  %284 = vmatpush.bf16.msra.mxu0 %v78
  %285 = vmatmul.bf16.gmra.mxu0 %v233
  %v286 = vpop.f32.mrf.mxu0
  %v287 = vadd.f32 %v203, %v286
  %v288 = vpop.f32.mrf.mxu0
  %v289 = vadd.f32 %v207, %v288
  %290 = vdwg.mxu0
  %291 = vmatpush.bf16.msra.mxu0 0
  %292 = vmatpush.bf16.msra.mxu0 0
  %293 = vmatpush.bf16.msra.mxu0 0
  %294 = vmatpush.bf16.msra.mxu0 0
  %295 = vmatpush.bf16.msra.mxu0 0
  %296 = vmatpush.bf16.msra.mxu0 0
  %297 = vmatpush.bf16.msra.mxu0 %v84
  %298 = vmatpush.bf16.msra.mxu0 %v79
  %299 = vmatmul.bf16.gmra.mxu0 %v233
  %v300 = vpop.f32.mrf.mxu0
  %v301 = vadd.f32 %v225, %v300
  %v302 = vpop.f32.mrf.mxu0
  %v303 = vadd.f32 %v226, %v302
  %304 = vdwg.mxu0
  %s305 = scalar_lea.vmem %s1, 16
  %v306 = vld [vmem:[%s305] sm:$0xf]
  %v307 = vld [vmem:[%s305 + $0x4] sm:$0xf]
  %v310 = vunpack.c.l.b16 %v306
  %v311 = vunpack.c.l.b16 %v307
  %v312 = vpack.c.b16 %v311, %v310
  %v314 = vsel %vm95, %v312, 0
  %316 = vmatpush.bf16.msra.mxu0 0
  %317 = vmatpush.bf16.msra.mxu0 0
  %318 = vmatpush.bf16.msra.mxu0 0
  %319 = vmatpush.bf16.msra.mxu0 0
  %320 = vmatpush.bf16.msra.mxu0 0
  %321 = vmatpush.bf16.msra.mxu0 0
  %322 = vmatpush.bf16.msra.mxu0 %v80
  %323 = vmatpush.bf16.msra.mxu0 %v75
  %324 = vmatmul.bf16.gmra.mxu0 %v314
  %v325 = vpop.f32.mrf.mxu0
  %v326 = vadd.f32 0.0, %v325
  %v327 = vpop.f32.mrf.mxu0
  %v328 = vadd.f32 0.0, %v327
  %329 = vdwg.mxu0
  %330 = vmatpush.bf16.msra.mxu0 0
  %331 = vmatpush.bf16.msra.mxu0 0
  %332 = vmatpush.bf16.msra.mxu0 0
  %333 = vmatpush.bf16.msra.mxu0 0
  %334 = vmatpush.bf16.msra.mxu0 0
  %335 = vmatpush.bf16.msra.mxu0 0
  %336 = vmatpush.bf16.msra.mxu0 %v81
  %337 = vmatpush.bf16.msra.mxu0 %v76
  %338 = vmatmul.bf16.gmra.mxu0 %v314
  %v339 = vpop.f32.mrf.mxu0
  %v340 = vadd.f32 0.0, %v339
  %v341 = vpop.f32.mrf.mxu0
  %v342 = vadd.f32 0.0, %v341
  %343 = vdwg.mxu0
  %344 = vmatpush.bf16.msra.mxu0 0
  %345 = vmatpush.bf16.msra.mxu0 0
  %346 = vmatpush.bf16.msra.mxu0 0
  %347 = vmatpush.bf16.msra.mxu0 0
  %348 = vmatpush.bf16.msra.mxu0 0
  %349 = vmatpush.bf16.msra.mxu0 0
  %350 = vmatpush.bf16.msra.mxu0 %v82
  %351 = vmatpush.bf16.msra.mxu0 %v77
  %352 = vmatmul.bf16.gmra.mxu0 %v314
  %v353 = vpop.f32.mrf.mxu0
  %v354 = vadd.f32 0.0, %v353
  %v355 = vpop.f32.mrf.mxu0
  %v356 = vadd.f32 0.0, %v355
  %357 = vdwg.mxu0
  %358 = vmatpush.bf16.msra.mxu0 0
  %359 = vmatpush.bf16.msra.mxu0 0
  %360 = vmatpush.bf16.msra.mxu0 0
  %361 = vmatpush.bf16.msra.mxu0 0
  %362 = vmatpush.bf16.msra.mxu0 0
  %363 = vmatpush.bf16.msra.mxu0 0
  %364 = vmatpush.bf16.msra.mxu0 %v83
  %365 = vmatpush.bf16.msra.mxu0 %v78
  %366 = vmatmul.bf16.gmra.mxu0 %v314
  %v367 = vpop.f32.mrf.mxu0
  %v368 = vadd.f32 0.0, %v367
  %v369 = vpop.f32.mrf.mxu0
  %v370 = vadd.f32 0.0, %v369
  %371 = vdwg.mxu0
  %372 = vmatpush.bf16.msra.mxu0 0
  %373 = vmatpush.bf16.msra.mxu0 0
  %374 = vmatpush.bf16.msra.mxu0 0
  %375 = vmatpush.bf16.msra.mxu0 0
  %376 = vmatpush.bf16.msra.mxu0 0
  %377 = vmatpush.bf16.msra.mxu0 0
  %378 = vmatpush.bf16.msra.mxu0 %v84
  %379 = vmatpush.bf16.msra.mxu0 %v79
  %380 = vmatmul.bf16.gmra.mxu0 %v314
  %v381 = vpop.f32.mrf.mxu0
  %v382 = vadd.f32 0.0, %v381
  %v383 = vpop.f32.mrf.mxu0
  %v384 = vadd.f32 0.0, %v383
  %385 = vdwg.mxu0
  %396 = vrot.lane.b32.xlu0 %v326, 111
  %v397 = vpop.permute.xlu0 %396
  %398 = vrot.lane.b32.xlu0 %v340, 111
  %v399 = vpop.permute.xlu0 %398
  %400 = vrot.lane.b32.xlu0 %v354, 111
  %v401 = vpop.permute.xlu0 %400
  %402 = vrot.lane.b32.xlu0 %v368, 111
  %v403 = vpop.permute.xlu0 %402
  %404 = vrot.lane.b32.xlu0 %v382, 111
  %v405 = vpop.permute.xlu0 %404
  %406 = vrot.lane.b32.xlu0 %v328, 111
  %v407 = vpop.permute.xlu0 %406
  %408 = vrot.lane.b32.xlu0 %v342, 111
  %v409 = vpop.permute.xlu0 %408
  %410 = vrot.lane.b32.xlu0 %v356, 111
  %v411 = vpop.permute.xlu0 %410
  %412 = vrot.lane.b32.xlu0 %v370, 111
  %v413 = vpop.permute.xlu0 %412
  %414 = vrot.lane.b32.xlu0 %v384, 111
  %v415 = vpop.permute.xlu0 %414
  %vm416 = vcmask 908288
  %v417 = vsel %vm416, %v397, %v399
  %v418 = vsel %vm416, %v399, %v401
  %v419 = vsel %vm416, %v401, %v403
  %v420 = vsel %vm416, %v403, %v405
  %v421 = vsel %vm416, %v407, %v409
  %v422 = vsel %vm416, %v409, %v411
  %v423 = vsel %vm416, %v411, %v413
  %v424 = vsel %vm416, %v413, %v415
  %435 = vrot.lane.b32.xlu0 %v326, 49
  %v436 = vpop.permute.xlu0 %435
  %437 = vrot.lane.b32.xlu0 %v328, 49
  %v438 = vpop.permute.xlu0 %437
  %vm441 = vcmask 400384
  %v442 = vsel %vm441, %v405, %v436
  %v443 = vsel %vm441, %v415, %v438
  %v444 = vadd.f32 %v245, %v417
  %v445 = vadd.f32 %v259, %v418
  %v446 = vadd.f32 %v273, %v419
  %v447 = vadd.f32 %v287, %v420
  %v448 = vadd.f32 %v301, %v442
  %v449 = vadd.f32 %v247, %v421
  %v450 = vadd.f32 %v261, %v422
  %v451 = vadd.f32 %v275, %v423
  %v452 = vadd.f32 %v289, %v424
  %v453 = vadd.f32 %v303, %v443
  %s454 = scalar_lea.vmem %s1, 24
  %v455 = vld [vmem:[%s454] sm:$0xf]
  %v456 = vld [vmem:[%s454 + $0x4] sm:$0xf]
  %v459 = vunpack.c.l.b16 %v455
  %v460 = vunpack.c.l.b16 %v456
  %v461 = vpack.c.b16 %v460, %v459
  %v463 = vsel %vm95, %v461, 0
  %465 = vmatpush.bf16.msra.mxu0 0
  %466 = vmatpush.bf16.msra.mxu0 0
  %467 = vmatpush.bf16.msra.mxu0 0
  %468 = vmatpush.bf16.msra.mxu0 0
  %469 = vmatpush.bf16.msra.mxu0 0
  %470 = vmatpush.bf16.msra.mxu0 0
  %471 = vmatpush.bf16.msra.mxu0 %v80
  %472 = vmatpush.bf16.msra.mxu0 %v75
  %473 = vmatmul.bf16.gmra.mxu0 %v463
  %v474 = vpop.f32.mrf.mxu0
  %v475 = vadd.f32 0.0, %v474
  %v476 = vpop.f32.mrf.mxu0
  %v477 = vadd.f32 0.0, %v476
  %478 = vdwg.mxu0
  %479 = vmatpush.bf16.msra.mxu0 0
  %480 = vmatpush.bf16.msra.mxu0 0
  %481 = vmatpush.bf16.msra.mxu0 0
  %482 = vmatpush.bf16.msra.mxu0 0
  %483 = vmatpush.bf16.msra.mxu0 0
  %484 = vmatpush.bf16.msra.mxu0 0
  %485 = vmatpush.bf16.msra.mxu0 %v81
  %486 = vmatpush.bf16.msra.mxu0 %v76
  %487 = vmatmul.bf16.gmra.mxu0 %v463
  %v488 = vpop.f32.mrf.mxu0
  %v489 = vadd.f32 0.0, %v488
  %v490 = vpop.f32.mrf.mxu0
  %v491 = vadd.f32 0.0, %v490
  %492 = vdwg.mxu0
  %493 = vmatpush.bf16.msra.mxu0 0
  %494 = vmatpush.bf16.msra.mxu0 0
  %495 = vmatpush.bf16.msra.mxu0 0
  %496 = vmatpush.bf16.msra.mxu0 0
  %497 = vmatpush.bf16.msra.mxu0 0
  %498 = vmatpush.bf16.msra.mxu0 0
  %499 = vmatpush.bf16.msra.mxu0 %v82
  %500 = vmatpush.bf16.msra.mxu0 %v77
  %501 = vmatmul.bf16.gmra.mxu0 %v463
  %v502 = vpop.f32.mrf.mxu0
  %v503 = vadd.f32 0.0, %v502
  %v504 = vpop.f32.mrf.mxu0
  %v505 = vadd.f32 0.0, %v504
  %506 = vdwg.mxu0
  %507 = vmatpush.bf16.msra.mxu0 0
  %508 = vmatpush.bf16.msra.mxu0 0
  %509 = vmatpush.bf16.msra.mxu0 0
  %510 = vmatpush.bf16.msra.mxu0 0
  %511 = vmatpush.bf16.msra.mxu0 0
  %512 = vmatpush.bf16.msra.mxu0 0
  %513 = vmatpush.bf16.msra.mxu0 %v83
  %514 = vmatpush.bf16.msra.mxu0 %v78
  %515 = vmatmul.bf16.gmra.mxu0 %v463
  %v516 = vpop.f32.mrf.mxu0
  %v517 = vadd.f32 0.0, %v516
  %v518 = vpop.f32.mrf.mxu0
  %v519 = vadd.f32 0.0, %v518
  %520 = vdwg.mxu0
  %521 = vmatpush.bf16.msra.mxu0 0
  %522 = vmatpush.bf16.msra.mxu0 0
  %523 = vmatpush.bf16.msra.mxu0 0
  %524 = vmatpush.bf16.msra.mxu0 0
  %525 = vmatpush.bf16.msra.mxu0 0
  %526 = vmatpush.bf16.msra.mxu0 0
  %527 = vmatpush.bf16.msra.mxu0 %v84
  %528 = vmatpush.bf16.msra.mxu0 %v79
  %529 = vmatmul.bf16.gmra.mxu0 %v463
  %v530 = vpop.f32.mrf.mxu0
  %v531 = vadd.f32 0.0, %v530
  %v532 = vpop.f32.mrf.mxu0
  %v533 = vadd.f32 0.0, %v532
  %534 = vdwg.mxu0
  %545 = vrot.lane.b32.xlu0 %v475, 110
  %v546 = vpop.permute.xlu0 %545
  %547 = vrot.lane.b32.xlu0 %v489, 110
  %v548 = vpop.permute.xlu0 %547
  %549 = vrot.lane.b32.xlu0 %v503, 110
  %v550 = vpop.permute.xlu0 %549
  %551 = vrot.lane.b32.xlu0 %v517, 110
  %v552 = vpop.permute.xlu0 %551
  %553 = vrot.lane.b32.xlu0 %v531, 110
  %v554 = vpop.permute.xlu0 %553
  %555 = vrot.lane.b32.xlu0 %v477, 110
  %v556 = vpop.permute.xlu0 %555
  %557 = vrot.lane.b32.xlu0 %v491, 110
  %v558 = vpop.permute.xlu0 %557
  %559 = vrot.lane.b32.xlu0 %v505, 110
  %v560 = vpop.permute.xlu0 %559
  %561 = vrot.lane.b32.xlu0 %v519, 110
  %v562 = vpop.permute.xlu0 %561
  %563 = vrot.lane.b32.xlu0 %v533, 110
  %v564 = vpop.permute.xlu0 %563
  %vm565 = vcmask 900096
  %v566 = vsel %vm565, %v546, %v548
  %v567 = vsel %vm565, %v548, %v550
  %v568 = vsel %vm565, %v550, %v552
  %v569 = vsel %vm565, %v552, %v554
  %v570 = vsel %vm565, %v556, %v558
  %v571 = vsel %vm565, %v558, %v560
  %v572 = vsel %vm565, %v560, %v562
  %v573 = vsel %vm565, %v562, %v564
  %584 = vrot.lane.b32.xlu0 %v475, 48
  %v585 = vpop.permute.xlu0 %584
  %586 = vrot.lane.b32.xlu0 %v477, 48
  %v587 = vpop.permute.xlu0 %586
  %vm590 = vcmask 392192
  %v591 = vsel %vm590, %v554, %v585
  %v592 = vsel %vm590, %v564, %v587
  %v593 = vadd.f32 %v444, %v566
  %v594 = vadd.f32 %v445, %v567
  %v595 = vadd.f32 %v446, %v568
  %v596 = vadd.f32 %v447, %v569
  %v597 = vadd.f32 %v448, %v591
  %v598 = vadd.f32 %v449, %v570
  %v599 = vadd.f32 %v450, %v571
  %v600 = vadd.f32 %v451, %v572
  %v601 = vadd.f32 %v452, %v573
  %v602 = vadd.f32 %v453, %v592
  %v603 = vld [vmem:[%s2] sm:$0x1f]
  %v605 = vperm.slane %v603, 0
  %v606 = vperm.slane %v603, 1
  %v607 = vperm.slane %v603, 2
  %v608 = vperm.slane %v603, 3
  %v609 = vperm.slane %v603, 4
  %v615 = vmul.f32 %v593, %v605
  %v616 = vmul.f32 %v594, %v606
  %v617 = vmul.f32 %v595, %v607
  %v618 = vmul.f32 %v596, %v608
  %v619 = vmul.f32 %v597, %v609
  %v620 = vmul.f32 %v598, %v605
  %v621 = vmul.f32 %v599, %v606
  %v622 = vmul.f32 %v600, %v607
  %v623 = vmul.f32 %v601, %v608
  %v624 = vmul.f32 %v602, %v609
  %v625 = vadd.f32 %v615, %v616
  %v626 = vadd.f32 %v625, %v617
  %v627 = vadd.f32 %v626, %v618
  %vm628 = vcmask 539648
  %v629 = vsel %vm628, %v619, 0.0
  %v630 = vadd.f32 %v627, %v629
  %631 = vadd.xlane.f32.xlu0 %v630
  %v632 = vpop.xlane.xlu0 %631
  %v633 = vadd.f32 %v620, %v621
  %v634 = vadd.f32 %v633, %v622
  %v635 = vadd.f32 %v634, %v623
  %v636 = vsel %vm628, %v624, 0.0
  %v637 = vadd.f32 %v635, %v636
  %638 = vadd.xlane.f32.xlu0 %v637
  %v639 = vpop.xlane.xlu0 %638
  %v640 = vmul.f32 %v632, 0.001953125
  %v641 = vmul.f32 %v639, 0.001953125
  %v642 = vsub.f32 %v593, %v640
  %v643 = vsub.f32 %v594, %v640
  %v644 = vsub.f32 %v595, %v640
  %v645 = vsub.f32 %v596, %v640
  %v646 = vsub.f32 %v597, %v640
  %v647 = vsub.f32 %v598, %v641
  %v648 = vsub.f32 %v599, %v641
  %v649 = vsub.f32 %v600, %v641
  %v650 = vsub.f32 %v601, %v641
  %v651 = vsub.f32 %v602, %v641
  %v652 = vmul.f32 %v642, %v605
  %v653 = vmul.f32 %v643, %v606
  %v654 = vmul.f32 %v644, %v607
  %v655 = vmul.f32 %v645, %v608
  %v656 = vmul.f32 %v646, %v609
  %v657 = vmul.f32 %v647, %v605
  %v658 = vmul.f32 %v648, %v606
  %v659 = vmul.f32 %v649, %v607
  %v660 = vmul.f32 %v650, %v608
  %v661 = vmul.f32 %v651, %v609
  %v662 = vmul.f32 %v652, %v652
  %v663 = vmul.f32 %v653, %v653
  %v664 = vmul.f32 %v654, %v654
  %v665 = vmul.f32 %v655, %v655
  %v666 = vmul.f32 %v656, %v656
  %v667 = vmul.f32 %v657, %v657
  %v668 = vmul.f32 %v658, %v658
  %v669 = vmul.f32 %v659, %v659
  %v670 = vmul.f32 %v660, %v660
  %v671 = vmul.f32 %v661, %v661
  %v672 = vadd.f32 %v662, %v663
  %v673 = vadd.f32 %v672, %v664
  %v674 = vadd.f32 %v673, %v665
  %v675 = vsel %vm628, %v666, 0.0
  %v676 = vadd.f32 %v674, %v675
  %677 = vadd.xlane.f32.xlu0 %v676
  %v678 = vpop.xlane.xlu0 %677
  %v679 = vadd.f32 %v667, %v668
  %v680 = vadd.f32 %v679, %v669
  %v681 = vadd.f32 %v680, %v670
  %v682 = vsel %vm628, %v671, 0.0
  %v683 = vadd.f32 %v681, %v682
  %684 = vadd.xlane.f32.xlu0 %v683
  %v685 = vpop.xlane.xlu0 %684
  %v686 = vmul.f32 %v678, 0.001953125
  %v687 = vmul.f32 %v685, 0.001953125
  %v688 = vadd.f32 %v686, 1e-05
  %v689 = vadd.f32 %v687, 1e-05
  %v690 = vrsqrt.pop %v688
  %v691 = vmul.f32 %v690, %v688
  %v692 = vmul.f32 %v691, %v690
  %v693 = vmul.f32 0.5, %v692
  %v694 = vsub.f32 1.5, %v693
  %v695 = vmul.f32 %v690, %v694
  %vm696 = vweird.f32 %v688
  %vm697 = vweird.f32 %v690
  %vm698 = vmor %vm696, %vm697
  %v699 = vsel %vm698, %v690, %v695
  %v700 = vrsqrt.pop %v689
  %v701 = vmul.f32 %v700, %v689
  %v702 = vmul.f32 %v701, %v700
  %v703 = vmul.f32 0.5, %v702
  %v704 = vsub.f32 1.5, %v703
  %v705 = vmul.f32 %v700, %v704
  %vm706 = vweird.f32 %v689
  %vm707 = vweird.f32 %v700
  %vm708 = vmor %vm706, %vm707
  %v709 = vsel %vm708, %v700, %v705
  %v710 = vmul.f32 %v642, %v699
  %v711 = vmul.f32 %v643, %v699
  %v712 = vmul.f32 %v644, %v699
  %v713 = vmul.f32 %v645, %v699
  %v714 = vmul.f32 %v646, %v699
  %v715 = vmul.f32 %v647, %v709
  %v716 = vmul.f32 %v648, %v709
  %v717 = vmul.f32 %v649, %v709
  %v718 = vmul.f32 %v650, %v709
  %v719 = vmul.f32 %v651, %v709
  %v720 = vld [vmem:[%s3] sm:$0xff]
  %v721 = vld [vmem:[%s3 + $0x8] sm:$0xff]
  %723 = vset.pattern.permute.xlu0 0
  %724 = vperm.xlu0 %723, %v720
  %v725 = vpop.permute.xlu0 %724
  %728 = vset.pattern.permute.xlu0 0
  %729 = vperm.xlu0 %728, %v721
  %v730 = vpop.permute.xlu0 %729
  %v732 = vmul.f32 %v710, %v725
  %v733 = vmul.f32 %v711, %v725
  %v734 = vmul.f32 %v712, %v725
  %v735 = vmul.f32 %v713, %v725
  %v736 = vmul.f32 %v714, %v725
  %v737 = vmul.f32 %v715, %v730
  %v738 = vmul.f32 %v716, %v730
  %v739 = vmul.f32 %v717, %v730
  %v740 = vmul.f32 %v718, %v730
  %v741 = vmul.f32 %v719, %v730
  %v742 = vld [vmem:[%s4] sm:$0xff]
  %v743 = vld [vmem:[%s4 + $0x8] sm:$0xff]
  %745 = vset.pattern.permute.xlu0 0
  %746 = vperm.xlu0 %745, %v742
  %v747 = vpop.permute.xlu0 %746
  %750 = vset.pattern.permute.xlu0 0
  %751 = vperm.xlu0 %750, %v743
  %v752 = vpop.permute.xlu0 %751
  %v754 = vadd.f32 %v732, %v747
  %v755 = vadd.f32 %v733, %v747
  %v756 = vadd.f32 %v734, %v747
  %v757 = vadd.f32 %v735, %v747
  %v758 = vadd.f32 %v736, %v747
  %v759 = vadd.f32 %v737, %v752
  %v760 = vadd.f32 %v738, %v752
  %v761 = vadd.f32 %v739, %v752
  %v762 = vadd.f32 %v740, %v752
  %v763 = vadd.f32 %v741, %v752
  %vm764 = vcmp.ge.f32.partialorder %v754, 0.0
  %vm765 = vcmp.ge.f32.partialorder %v755, 0.0
  %vm766 = vcmp.ge.f32.partialorder %v756, 0.0
  %vm767 = vcmp.ge.f32.partialorder %v757, 0.0
  %vm768 = vcmp.ge.f32.partialorder %v758, 0.0
  %vm769 = vcmp.ge.f32.partialorder %v759, 0.0
  %vm770 = vcmp.ge.f32.partialorder %v760, 0.0
  %vm771 = vcmp.ge.f32.partialorder %v761, 0.0
  %vm772 = vcmp.ge.f32.partialorder %v762, 0.0
  %vm773 = vcmp.ge.f32.partialorder %v763, 0.0
  %v774 = vmul.f32 %v754, 0.2
  %v775 = vmul.f32 %v755, 0.2
  %v776 = vmul.f32 %v756, 0.2
  %v777 = vmul.f32 %v757, 0.2
  %v778 = vmul.f32 %v758, 0.2
  %v779 = vmul.f32 %v759, 0.2
  %v780 = vmul.f32 %v760, 0.2
  %v781 = vmul.f32 %v761, 0.2
  %v782 = vmul.f32 %v762, 0.2
  %v783 = vmul.f32 %v763, 0.2
  %v784 = vsel %vm764, %v754, %v774
  %v785 = vsel %vm765, %v755, %v775
  %v786 = vsel %vm766, %v756, %v776
  %v787 = vsel %vm767, %v757, %v777
  %v788 = vsel %vm768, %v758, %v778
  %v789 = vsel %vm769, %v759, %v779
  %v790 = vsel %vm770, %v760, %v780
  %v791 = vsel %vm771, %v761, %v781
  %v792 = vsel %vm772, %v762, %v782
  %v793 = vsel %vm773, %v763, %v783
  %794 = vst [vmem:[%s5] sm:$0xff] %v784
  %795 = vst [vmem:[%s5 + $0x8] sm:$0xff] %v785
  %796 = vst [vmem:[%s5 + $0x10] sm:$0xff] %v786
  %797 = vst [vmem:[%s5 + $0x18] sm:$0xff] %v787
  %798 = vst.msk [vmem:[%s5 + $0x20] sm:$0xff] %vm628, %v788
  %799 = vst [vmem:[%s5 + $0x28] sm:$0xff] %v789
  %800 = vst [vmem:[%s5 + $0x30] sm:$0xff] %v790
  %801 = vst [vmem:[%s5 + $0x38] sm:$0xff] %v791
  %802 = vst [vmem:[%s5 + $0x40] sm:$0xff] %v792
  %803 = vst.msk [vmem:[%s5 + $0x48] sm:$0xff] %vm628, %v793
  // Predicated region
  $region22: #{discriminator_forward.5} parent=0 // pred_check
    _
  $region23: #{discriminator_forward.5} parent=0 // pred_check_branch
    %805 = sbr.rel (0) target = $region25
  $region24: #{discriminator_forward.5} parent=0 // pred_region
    _
  $region25: #{discriminator_forward.5} parent=0 // pred_fallthru
    _
  // Predicated region
  $region26: #{discriminator_forward.5} parent=0 // pred_check
    _
  $region27: #{discriminator_forward.5} parent=0 // pred_check_branch
    %807 = sbr.rel (0) target = $region29
  $region28: #{discriminator_forward.5} parent=0 // pred_region
    _
  $region29: #{discriminator_forward.5} parent=0 // pred_fallthru
    _

// kernel: discriminator_forward.6
$region0: #{discriminator_forward.6}
  #allocation0 [shape = 'u32[]', space=smem, size = 0x4, offset = 0x4, fixed_abs, tag = 'smem constant byte address 0x4 - core index']
  #allocation1 [shape = 'u32[72,128]{1,0:T(1,128)}', space=vmem, size = 0x9000, scoped, tag = 'internal scratch']
  %s0 = inlined_call_operand.vmem [shape: bf16[64,162], index: 0, kind: input, shape index: {}]
  %s1 = inlined_call_operand.vmem [shape: bf16[4,32,64], index: 1, kind: input, shape index: {}]
  %s2 = inlined_call_operand.vmem [shape: f32[1,162], index: 2, kind: input, shape index: {}]
  %s3 = inlined_call_operand.vmem [shape: f32[32,1], index: 3, kind: input, shape index: {}]
  %s4 = inlined_call_operand.vmem [shape: f32[32,1], index: 4, kind: input, shape index: {}]
  %s5 = inlined_call_operand.vmem [shape: f32[32,162], index: 5, kind: output, shape index: {}]
  %s6 = sld [smem:[#allocation0]]
  $region30: #{discriminator_forward.6} parent=0
    _
  %s8 = ssub.s32 1, %s6
  %s9 = scalar_select 0, %s8, %s6
  // Predicated region
  $region2: #{discriminator_forward.6} parent=0 // pred_check
    _
  $region3: #{discriminator_forward.6} parent=0 // pred_check_branch
    %11 = sbr.rel (0) target = $region5
  $region4: #{discriminator_forward.6} parent=0 // pred_region
    _
  $region5: #{discriminator_forward.6} parent=0 // pred_fallthru
    _
  // Predicated region
  $region6: #{discriminator_forward.6} parent=0 // pred_check
    _
  $region7: #{discriminator_forward.6} parent=0 // pred_check_branch
    %13 = sbr.rel (0) target = $region9
  $region8: #{discriminator_forward.6} parent=0 // pred_region
    _
  $region9: #{discriminator_forward.6} parent=0 // pred_fallthru
    _
  // Predicated region
  $region10: #{discriminator_forward.6} parent=0 // pred_check
    _
  $region11: #{discriminator_forward.6} parent=0 // pred_check_branch
    %15 = sbr.rel (0) target = $region13
  $region12: #{discriminator_forward.6} parent=0 // pred_region
    _
  $region13: #{discriminator_forward.6} parent=0 // pred_fallthru
    _
  // Predicated region
  $region14: #{discriminator_forward.6} parent=0 // pred_check
    _
  $region15: #{discriminator_forward.6} parent=0 // pred_check_branch
    %17 = sbr.rel (0) target = $region17
  $region16: #{discriminator_forward.6} parent=0 // pred_region
    _
  $region17: #{discriminator_forward.6} parent=0 // pred_fallthru
    _
  // Predicated region
  $region18: #{discriminator_forward.6} parent=0 // pred_check
    _
  $region19: #{discriminator_forward.6} parent=0 // pred_check_branch
    %19 = sbr.rel (0) target = $region21
  $region20: #{discriminator_forward.6} parent=0 // pred_region
    _
  $region21: #{discriminator_forward.6} parent=0 // pred_fallthru
    _
  %v21 = vld [vmem:[%s0] sm:$0xff]
  %v22 = vld [vmem:[%s0 + $0x8] sm:$0xff]
  %v23 = vld [vmem:[%s0 + $0x10] sm:$0xff]
  %v24 = vld [vmem:[%s0 + $0x18] sm:$0xff]
  %v25 = vld [vmem:[%s0 + $0x20] sm:$0xff]
  %v26 = vld [vmem:[%s0 + $0x28] sm:$0xff]
  %v27 = vld [vmem:[%s0 + $0x30] sm:$0xff]
  %v28 = vld [vmem:[%s0 + $0x38] sm:$0xff]
  %v29 = vld [vmem:[%s1] sm:$0xf]
  %v30 = vld [vmem:[%s1 + $0x4] sm:$0xf]
  %v31 = vld [vmem:[%s1 + $0x8] sm:$0xf]
  %v32 = vld [vmem:[%s1 + $0xc] sm:$0xf]
  %s33 = scalar_lea.vmem %s1, 16
  %v34 = vld [vmem:[%s33] sm:$0xf]
  %v35 = vld [vmem:[%s33 + $0x4] sm:$0xf]
  %v36 = vld [vmem:[%s33 + $0x8] sm:$0xf]
  %v37 = vld [vmem:[%s33 + $0xc] sm:$0xf]
  %v42 = vunpack.c.l.b16 %v34
  %v43 = vunpack.c.l.b16 %v35
  %v44 = vunpack.c.l.b16 %v36
  %v45 = vunpack.c.l.b16 %v37
  %v46 = vpack.c.b16 %v43, %v42
  %v47 = vpack.c.b16 %v45, %v44
  %v56 = vunpack.c.l.b16 %v21
  %v57 = vunpack.c.h.b16 %v21
  %v58 = vunpack.c.l.b16 %v22
  %v59 = vunpack.c.h.b16 %v22
  %v60 = vunpack.c.l.b16 %v23
  %v61 = vunpack.c.h.b16 %v23
  %v62 = vunpack.c.l.b16 %v24
  %v63 = vunpack.c.h.b16 %v24
  %v64 = vunpack.c.l.b16 %v25
  %v65 = vunpack.c.h.b16 %v25
  %v66 = vunpack.c.l.b16 %v26
  %v67 = vunpack.c.h.b16 %v26
  %v68 = vunpack.c.l.b16 %v27
  %v69 = vunpack.c.h.b16 %v27
  %v70 = vunpack.c.l.b16 %v28
  %v71 = vunpack.c.h.b16 %v28
  %v72 = vpack.c.b16 %v58, %v56
  %v73 = vpack.c.b16 %v59, %v57
  %v74 = vpack.c.b16 %v62, %v60
  %v75 = vpack.c.b16 %v63, %v61
  %v76 = vpack.c.b16 %v66, %v64
  %v77 = vpack.c.b16 %v67, %v65
  %v78 = vpack.c.b16 %v70, %v68
  %v79 = vpack.c.b16 %v71, %v69
  %vm88 = vcmask 523264
  %v90 = vsel %vm88, %v46, 0
  %v93 = vsel %vm88, %v47, 0
  %95 = vmatpush.bf16.msra.mxu0 0
  %96 = vmatpush.bf16.msra.mxu0 0
  %97 = vmatpush.bf16.msra.mxu0 0
  %98 = vmatpush.bf16.msra.mxu0 0
  %99 = vmatpush.bf16.msra.mxu0 %v78
  %100 = vmatpush.bf16.msra.mxu0 %v76
  %101 = vmatpush.bf16.msra.mxu0 %v74
  %102 = vmatpush.bf16.msra.mxu0 %v72
  %103 = vmatmul.bf16.gmra.mxu0 %v90
  %v104 = vpop.f32.mrf.mxu0
  %v105 = vadd.f32 0.0, %v104
  %v106 = vpop.f32.mrf.mxu0
  %v107 = vadd.f32 0.0, %v106
  %108 = vmatmul.bf16.gmra.mxu0 %v93
  %v109 = vpop.f32.mrf.mxu0
  %v110 = vadd.f32 0.0, %v109
  %v111 = vpop.f32.mrf.mxu0
  %v112 = vadd.f32 0.0, %v111
  %113 = vdwg.mxu0
  %114 = vmatpush.bf16.msra.mxu0 0
  %115 = vmatpush.bf16.msra.mxu0 0
  %116 = vmatpush.bf16.msra.mxu0 0
  %117 = vmatpush.bf16.msra.mxu0 0
  %118 = vmatpush.bf16.msra.mxu0 %v79
  %119 = vmatpush.bf16.msra.mxu0 %v77
  %120 = vmatpush.bf16.msra.mxu0 %v75
  %121 = vmatpush.bf16.msra.mxu0 %v73
  %122 = vmatmul.bf16.gmra.mxu0 %v90
  %v123 = vpop.f32.mrf.mxu0
  %v124 = vadd.f32 0.0, %v123
  %v125 = vpop.f32.mrf.mxu0
  %v126 = vadd.f32 0.0, %v125
  %127 = vmatmul.bf16.gmra.mxu0 %v93
  %v128 = vpop.f32.mrf.mxu0
  %v129 = vadd.f32 0.0, %v128
  %v130 = vpop.f32.mrf.mxu0
  %v131 = vadd.f32 0.0, %v130
  %132 = vdwg.mxu0
  %141 = vrot.lane.b32.xlu0 %v105, 127
  %v142 = vpop.permute.xlu0 %141
  %143 = vrot.lane.b32.xlu0 %v124, 127
  %v144 = vpop.permute.xlu0 %143
  %145 = vrot.lane.b32.xlu0 %v107, 127
  %v146 = vpop.permute.xlu0 %145
  %147 = vrot.lane.b32.xlu0 %v126, 127
  %v148 = vpop.permute.xlu0 %147
  %149 = vrot.lane.b32.xlu0 %v110, 127
  %v150 = vpop.permute.xlu0 %149
  %151 = vrot.lane.b32.xlu0 %v129, 127
  %v152 = vpop.permute.xlu0 %151
  %153 = vrot.lane.b32.xlu0 %v112, 127
  %v154 = vpop.permute.xlu0 %153
  %155 = vrot.lane.b32.xlu0 %v131, 127
  %v156 = vpop.permute.xlu0 %155
  %vm157 = vcmask 1039360
  %v158 = vsel %vm157, %v142, %v144
  %v159 = vsel %vm157, %v146, %v148
  %v160 = vsel %vm157, %v150, %v152
  %v161 = vsel %vm157, %v154, %v156
  %170 = vrot.lane.b32.xlu0 %v105, 33
  %v171 = vpop.permute.xlu0 %170
  %172 = vrot.lane.b32.xlu0 %v107, 33
  %v173 = vpop.permute.xlu0 %172
  %174 = vrot.lane.b32.xlu0 %v110, 33
  %v175 = vpop.permute.xlu0 %174
  %176 = vrot.lane.b32.xlu0 %v112, 33
  %v177 = vpop.permute.xlu0 %176
  %vm182 = vcmask 269312
  %v183 = vsel %vm182, %v144, %v171
  %v184 = vsel %vm182, %v148, %v173
  %v185 = vsel %vm182, %v152, %v175
  %v186 = vsel %vm182, %v156, %v177
  %v191 = vunpack.c.l.b16 %v29
  %v192 = vunpack.c.l.b16 %v30
  %v193 = vunpack.c.l.b16 %v31
  %v194 = vunpack.c.l.b16 %v32
  %v195 = vpack.c.b16 %v192, %v191
  %v196 = vpack.c.b16 %v194, %v193
  %v198 = vsel %vm88, %v195, 0
  %v201 = vsel %vm88, %v196, 0
  %203 = vmatpush.bf16.msra.mxu0 0
  %204 = vmatpush.bf16.msra.mxu0 0
  %205 = vmatpush.bf16.msra.mxu0 0
  %206 = vmatpush.bf16.msra.mxu0 0
  %207 = vmatpush.bf16.msra.mxu0 %v78
  %208 = vmatpush.bf16.msra.mxu0 %v76
  %209 = vmatpush.bf16.msra.mxu0 %v74
  %210 = vmatpush.bf16.msra.mxu0 %v72
  %211 = vmatmul.bf16.gmra.mxu0 %v198
  %v212 = vpop.f32.mrf.mxu0
  %v213 = vadd.f32 %v158, %v212
  %v214 = vpop.f32.mrf.mxu0
  %v215 = vadd.f32 %v159, %v214
  %216 = vmatmul.bf16.gmra.mxu0 %v201
  %v217 = vpop.f32.mrf.mxu0
  %v218 = vadd.f32 %v160, %v217
  %v219 = vpop.f32.mrf.mxu0
  %v220 = vadd.f32 %v161, %v219
  %221 = vdwg.mxu0
  %222 = vmatpush.bf16.msra.mxu0 0
  %223 = vmatpush.bf16.msra.mxu0 0
  %224 = vmatpush.bf16.msra.mxu0 0
  %225 = vmatpush.bf16.msra.mxu0 0
  %226 = vmatpush.bf16.msra.mxu0 %v79
  %227 = vmatpush.bf16.msra.mxu0 %v77
  %228 = vmatpush.bf16.msra.mxu0 %v75
  %229 = vmatpush.bf16.msra.mxu0 %v73
  %230 = vmatmul.bf16.gmra.mxu0 %v198
  %v231 = vpop.f32.mrf.mxu0
  %v232 = vadd.f32 %v183, %v231
  %v233 = vpop.f32.mrf.mxu0
  %v234 = vadd.f32 %v184, %v233
  %235 = vmatmul.bf16.gmra.mxu0 %v201
  %v236 = vpop.f32.mrf.mxu0
  %v237 = vadd.f32 %v185, %v236
  %v238 = vpop.f32.mrf.mxu0
  %v239 = vadd.f32 %v186, %v238
  %240 = vdwg.mxu0
  %s241 = scalar_lea.vmem %s1, 32
  %v242 = vld [vmem:[%s241] sm:$0xf]
  %v243 = vld [vmem:[%s241 + $0x4] sm:$0xf]
  %v244 = vld [vmem:[%s241 + $0x8] sm:$0xf]
  %v245 = vld [vmem:[%s241 + $0xc] sm:$0xf]
  %v250 = vunpack.c.l.b16 %v242
  %v251 = vunpack.c.l.b16 %v243
  %v252 = vunpack.c.l.b16 %v244
  %v253 = vunpack.c.l.b16 %v245
  %v254 = vpack.c.b16 %v251, %v250
  %v255 = vpack.c.b16 %v253, %v252
  %v257 = vsel %vm88, %v254, 0
  %v260 = vsel %vm88, %v255, 0
  %262 = vmatpush.bf16.msra.mxu0 0
  %263 = vmatpush.bf16.msra.mxu0 0
  %264 = vmatpush.bf16.msra.mxu0 0
  %265 = vmatpush.bf16.msra.mxu0 0
  %266 = vmatpush.bf16.msra.mxu0 %v78
  %267 = vmatpush.bf16.msra.mxu0 %v76
  %268 = vmatpush.bf16.msra.mxu0 %v74
  %269 = vmatpush.bf16.msra.mxu0 %v72
  %270 = vmatmul.bf16.gmra.mxu0 %v257
  %v271 = vpop.f32.mrf.mxu0
  %v272 = vadd.f32 0.0, %v271
  %v273 = vpop.f32.mrf.mxu0
  %v274 = vadd.f32 0.0, %v273
  %275 = vmatmul.bf16.gmra.mxu0 %v260
  %v276 = vpop.f32.mrf.mxu0
  %v277 = vadd.f32 0.0, %v276
  %v278 = vpop.f32.mrf.mxu0
  %v279 = vadd.f32 0.0, %v278
  %280 = vdwg.mxu0
  %281 = vmatpush.bf16.msra.mxu0 0
  %282 = vmatpush.bf16.msra.mxu0 0
  %283 = vmatpush.bf16.msra.mxu0 0
  %284 = vmatpush.bf16.msra.mxu0 0
  %285 = vmatpush.bf16.msra.mxu0 %v79
  %286 = vmatpush.bf16.msra.mxu0 %v77
  %287 = vmatpush.bf16.msra.mxu0 %v75
  %288 = vmatpush.bf16.msra.mxu0 %v73
  %289 = vmatmul.bf16.gmra.mxu0 %v257
  %v290 = vpop.f32.mrf.mxu0
  %v291 = vadd.f32 0.0, %v290
  %v292 = vpop.f32.mrf.mxu0
  %v293 = vadd.f32 0.0, %v292
  %294 = vmatmul.bf16.gmra.mxu0 %v260
  %v295 = vpop.f32.mrf.mxu0
  %v296 = vadd.f32 0.0, %v295
  %v297 = vpop.f32.mrf.mxu0
  %v298 = vadd.f32 0.0, %v297
  %299 = vdwg.mxu0
  %308 = vrot.lane.b32.xlu0 %v272, 119
  %v309 = vpop.permute.xlu0 %308
  %310 = vrot.lane.b32.xlu0 %v291, 119
  %v311 = vpop.permute.xlu0 %310
  %312 = vrot.lane.b32.xlu0 %v274, 119
  %v313 = vpop.permute.xlu0 %312
  %314 = vrot.lane.b32.xlu0 %v293, 119
  %v315 = vpop.permute.xlu0 %314
  %316 = vrot.lane.b32.xlu0 %v277, 119
  %v317 = vpop.permute.xlu0 %316
  %318 = vrot.lane.b32.xlu0 %v296, 119
  %v319 = vpop.permute.xlu0 %318
  %320 = vrot.lane.b32.xlu0 %v279, 119
  %v321 = vpop.permute.xlu0 %320
  %322 = vrot.lane.b32.xlu0 %v298, 119
  %v323 = vpop.permute.xlu0 %322
  %vm324 = vcmask 973824
  %v325 = vsel %vm324, %v309, %v311
  %v326 = vsel %vm324, %v313, %v315
  %v327 = vsel %vm324, %v317, %v319
  %v328 = vsel %vm324, %v321, %v323
  %337 = vrot.lane.b32.xlu0 %v272, 25
  %v338 = vpop.permute.xlu0 %337
  %339 = vrot.lane.b32.xlu0 %v274, 25
  %v340 = vpop.permute.xlu0 %339
  %341 = vrot.lane.b32.xlu0 %v277, 25
  %v342 = vpop.permute.xlu0 %341
  %343 = vrot.lane.b32.xlu0 %v279, 25
  %v344 = vpop.permute.xlu0 %343
  %vm349 = vcmask 203776
  %v350 = vsel %vm349, %v311, %v338
  %v351 = vsel %vm349, %v315, %v340
  %v352 = vsel %vm349, %v319, %v342
  %v353 = vsel %vm349, %v323, %v344
  %v354 = vadd.f32 %v213, %v325
  %v355 = vadd.f32 %v232, %v350
  %v356 = vadd.f32 %v215, %v326
  %v357 = vadd.f32 %v234, %v351
  %v358 = vadd.f32 %v218, %v327
  %v359 = vadd.f32 %v237, %v352
  %v360 = vadd.f32 %v220, %v328
  %v361 = vadd.f32 %v239, %v353
  %s362 = scalar_lea.vmem %s1, 48
  %v363 = vld [vmem:[%s362] sm:$0xf]
  %v364 = vld [vmem:[%s362 + $0x4] sm:$0xf]
  %v365 = vld [vmem:[%s362 + $0x8] sm:$0xf]
  %v366 = vld [vmem:[%s362 + $0xc] sm:$0xf]
  %v371 = vunpack.c.l.b16 %v363
  %v372 = vunpack.c.l.b16 %v364
  %v373 = vunpack.c.l.b16 %v365
  %v374 = vunpack.c.l.b16 %v366
  %v375 = vpack.c.b16 %v372, %v371
  %v376 = vpack.c.b16 %v374, %v373
  %v378 = vsel %vm88, %v375, 0
  %v381 = vsel %vm88, %v376, 0
  %383 = vmatpush.bf16.msra.mxu0 0
  %384 = vmatpush.bf16.msra.mxu0 0
  %385 = vmatpush.bf16.msra.mxu0 0
  %386 = vmatpush.bf16.msra.mxu0 0
  %387 = vmatpush.bf16.msra.mxu0 %v78
  %388 = vmatpush.bf16.msra.mxu0 %v76
  %389 = vmatpush.bf16.msra.mxu0 %v74
  %390 = vmatpush.bf16.msra.mxu0 %v72
  %391 = vmatmul.bf16.gmra.mxu0 %v378
  %v392 = vpop.f32.mrf.mxu0
  %v393 = vadd.f32 0.0, %v392
  %v394 = vpop.f32.mrf.mxu0
  %v395 = vadd.f32 0.0, %v394
  %396 = vmatmul.bf16.gmra.mxu0 %v381
  %v397 = vpop.f32.mrf.mxu0
  %v398 = vadd.f32 0.0, %v397
  %v399 = vpop.f32.mrf.mxu0
  %v400 = vadd.f32 0.0, %v399
  %401 = vdwg.mxu0
  %402 = vmatpush.bf16.msra.mxu0 0
  %403 = vmatpush.bf16.msra.mxu0 0
  %404 = vmatpush.bf16.msra.mxu0 0
  %405 = vmatpush.bf16.msra.mxu0 0
  %406 = vmatpush.bf16.msra.mxu0 %v79
  %407 = vmatpush.bf16.msra.mxu0 %v77
  %408 = vmatpush.bf16.msra.mxu0 %v75
  %409 = vmatpush.bf16.msra.mxu0 %v73
  %410 = vmatmul.bf16.gmra.mxu0 %v378
  %v411 = vpop.f32.mrf.mxu0
  %v412 = vadd.f32 0.0, %v411
  %v413 = vpop.f32.mrf.mxu0
  %v414 = vadd.f32 0.0, %v413
  %415 = vmatmul.bf16.gmra.mxu0 %v381
  %v416 = vpop.f32.mrf.mxu0
  %v417 = vadd.f32 0.0, %v416
  %v418 = vpop.f32.mrf.mxu0
  %v419 = vadd.f32 0.0, %v418
  %420 = vdwg.mxu0
  %429 = vrot.lane.b32.xlu0 %v393, 118
  %v430 = vpop.permute.xlu0 %429
  %431 = vrot.lane.b32.xlu0 %v412, 118
  %v432 = vpop.permute.xlu0 %431
  %433 = vrot.lane.b32.xlu0 %v395, 118
  %v434 = vpop.permute.xlu0 %433
  %435 = vrot.lane.b32.xlu0 %v414, 118
  %v436 = vpop.permute.xlu0 %435
  %437 = vrot.lane.b32.xlu0 %v398, 118
  %v438 = vpop.permute.xlu0 %437
  %439 = vrot.lane.b32.xlu0 %v417, 118
  %v440 = vpop.permute.xlu0 %439
  %441 = vrot.lane.b32.xlu0 %v400, 118
  %v442 = vpop.permute.xlu0 %441
  %443 = vrot.lane.b32.xlu0 %v419, 118
  %v444 = vpop.permute.xlu0 %443
  %vm445 = vcmask 965632
  %v446 = vsel %vm445, %v430, %v432
  %v447 = vsel %vm445, %v434, %v436
  %v448 = vsel %vm445, %v438, %v440
  %v449 = vsel %vm445, %v442, %v444
  %458 = vrot.lane.b32.xlu0 %v393, 24
  %v459 = vpop.permute.xlu0 %458
  %460 = vrot.lane.b32.xlu0 %v395, 24
  %v461 = vpop.permute.xlu0 %460
  %462 = vrot.lane.b32.xlu0 %v398, 24
  %v463 = vpop.permute.xlu0 %462
  %464 = vrot.lane.b32.xlu0 %v400, 24
  %v465 = vpop.permute.xlu0 %464
  %vm470 = vcmask 195584
  %v471 = vsel %vm470, %v432, %v459
  %v472 = vsel %vm470, %v436, %v461
  %v473 = vsel %vm470, %v440, %v463
  %v474 = vsel %vm470, %v444, %v465
  %v475 = vadd.f32 %v354, %v446
  %v476 = vadd.f32 %v355, %v471
  %v477 = vadd.f32 %v356, %v447
  %v478 = vadd.f32 %v357, %v472
  %v479 = vadd.f32 %v358, %v448
  %v480 = vadd.f32 %v359, %v473
  %v481 = vadd.f32 %v360, %v449
  %v482 = vadd.f32 %v361, %v474
  %v483 = vld [vmem:[%s2] sm:$0x3]
  %v485 = vperm.slane %v483, 0
  %v486 = vperm.slane %v483, 1
  %v489 = vmul.f32 %v475, %v485
  %v490 = vmul.f32 %v476, %v486
  %v491 = vmul.f32 %v477, %v485
  %v492 = vmul.f32 %v478, %v486
  %v493 = vmul.f32 %v479, %v485
  %v494 = vmul.f32 %v480, %v486
  %v495 = vmul.f32 %v481, %v485
  %v496 = vmul.f32 %v482, %v486
  %vm497 = vcmask 277504
  %v498 = vsel %vm497, %v490, 0.0
  %v499 = vadd.f32 %v489, %v498
  %500 = vadd.xlane.f32.xlu0 %v499
  %v501 = vpop.xlane.xlu0 %500
  %v502 = vsel %vm497, %v492, 0.0
  %v503 = vadd.f32 %v491, %v502
  %504 = vadd.xlane.f32.xlu0 %v503
  %v505 = vpop.xlane.xlu0 %504
  %v506 = vsel %vm497, %v494, 0.0
  %v507 = vadd.f32 %v493, %v506
  %508 = vadd.xlane.f32.xlu0 %v507
  %v509 = vpop.xlane.xlu0 %508
  %v510 = vsel %vm497, %v496, 0.0
  %v511 = vadd.f32 %v495, %v510
  %512 = vadd.xlane.f32.xlu0 %v511
  %v513 = vpop.xlane.xlu0 %512
  %v514 = vmul.f32 %v501, 0.0078125
  %v515 = vmul.f32 %v505, 0.0078125
  %v516 = vmul.f32 %v509, 0.0078125
  %v517 = vmul.f32 %v513, 0.0078125
  %v518 = vsub.f32 %v475, %v514
  %v519 = vsub.f32 %v476, %v514
  %v520 = vsub.f32 %v477, %v515
  %v521 = vsub.f32 %v478, %v515
  %v522 = vsub.f32 %v479, %v516
  %v523 = vsub.f32 %v480, %v516
  %v524 = vsub.f32 %v481, %v517
  %v525 = vsub.f32 %v482, %v517
  %v526 = vmul.f32 %v518, %v485
  %v527 = vmul.f32 %v519, %v486
  %v528 = vmul.f32 %v520, %v485
  %v529 = vmul.f32 %v521, %v486
  %v530 = vmul.f32 %v522, %v485
  %v531 = vmul.f32 %v523, %v486
  %v532 = vmul.f32 %v524, %v485
  %v533 = vmul.f32 %v525, %v486
  %v534 = vmul.f32 %v526, %v526
  %v535 = vmul.f32 %v527, %v527
  %v536 = vmul.f32 %v528, %v528
  %v537 = vmul.f32 %v529, %v529
  %v538 = vmul.f32 %v530, %v530
  %v539 = vmul.f32 %v531, %v531
  %v540 = vmul.f32 %v532, %v532
  %v541 = vmul.f32 %v533, %v533
  %v542 = vsel %vm497, %v535, 0.0
  %v543 = vadd.f32 %v534, %v542
  %544 = vadd.xlane.f32.xlu0 %v543
  %v545 = vpop.xlane.xlu0 %544
  %v546 = vsel %vm497, %v537, 0.0
  %v547 = vadd.f32 %v536, %v546
  %548 = vadd.xlane.f32.xlu0 %v547
  %v549 = vpop.xlane.xlu0 %548
  %v550 = vsel %vm497, %v539, 0.0
  %v551 = vadd.f32 %v538, %v550
  %552 = vadd.xlane.f32.xlu0 %v551
  %v553 = vpop.xlane.xlu0 %552
  %v554 = vsel %vm497, %v541, 0.0
  %v555 = vadd.f32 %v540, %v554
  %556 = vadd.xlane.f32.xlu0 %v555
  %v557 = vpop.xlane.xlu0 %556
  %v558 = vmul.f32 %v545, 0.0078125
  %v559 = vmul.f32 %v549, 0.0078125
  %v560 = vmul.f32 %v553, 0.0078125
  %v561 = vmul.f32 %v557, 0.0078125
  %v562 = vadd.f32 %v558, 1e-05
  %v563 = vadd.f32 %v559, 1e-05
  %v564 = vadd.f32 %v560, 1e-05
  %v565 = vadd.f32 %v561, 1e-05
  %v566 = vrsqrt.pop %v562
  %v567 = vmul.f32 %v566, %v562
  %v568 = vmul.f32 %v567, %v566
  %v569 = vmul.f32 0.5, %v568
  %v570 = vsub.f32 1.5, %v569
  %v571 = vmul.f32 %v566, %v570
  %vm572 = vweird.f32 %v562
  %vm573 = vweird.f32 %v566
  %vm574 = vmor %vm572, %vm573
  %v575 = vsel %vm574, %v566, %v571
  %v576 = vrsqrt.pop %v563
  %v577 = vmul.f32 %v576, %v563
  %v578 = vmul.f32 %v577, %v576
  %v579 = vmul.f32 0.5, %v578
  %v580 = vsub.f32 1.5, %v579
  %v581 = vmul.f32 %v576, %v580
  %vm582 = vweird.f32 %v563
  %vm583 = vweird.f32 %v576
  %vm584 = vmor %vm582, %vm583
  %v585 = vsel %vm584, %v576, %v581
  %v586 = vrsqrt.pop %v564
  %v587 = vmul.f32 %v586, %v564
  %v588 = vmul.f32 %v587, %v586
  %v589 = vmul.f32 0.5, %v588
  %v590 = vsub.f32 1.5, %v589
  %v591 = vmul.f32 %v586, %v590
  %vm592 = vweird.f32 %v564
  %vm593 = vweird.f32 %v586
  %vm594 = vmor %vm592, %vm593
  %v595 = vsel %vm594, %v586, %v591
  %v596 = vrsqrt.pop %v565
  %v597 = vmul.f32 %v596, %v565
  %v598 = vmul.f32 %v597, %v596
  %v599 = vmul.f32 0.5, %v598
  %v600 = vsub.f32 1.5, %v599
  %v601 = vmul.f32 %v596, %v600
  %vm602 = vweird.f32 %v565
  %vm603 = vweird.f32 %v596
  %vm604 = vmor %vm602, %vm603
  %v605 = vsel %vm604, %v596, %v601
  %v606 = vmul.f32 %v518, %v575
  %v607 = vmul.f32 %v519, %v575
  %v608 = vmul.f32 %v520, %v585
  %v609 = vmul.f32 %v521, %v585
  %v610 = vmul.f32 %v522, %v595
  %v611 = vmul.f32 %v523, %v595
  %v612 = vmul.f32 %v524, %v605
  %v613 = vmul.f32 %v525, %v605
  %v614 = vld [vmem:[%s3] sm:$0xff]
  %v615 = vld [vmem:[%s3 + $0x8] sm:$0xff]
  %v616 = vld [vmem:[%s3 + $0x10] sm:$0xff]
  %v617 = vld [vmem:[%s3 + $0x18] sm:$0xff]
  %619 = vset.pattern.permute.xlu0 0
  %620 = vperm.xlu0 %619, %v614
  %v621 = vpop.permute.xlu0 %620
  %624 = vset.pattern.permute.xlu0 0
  %625 = vperm.xlu0 %624, %v615
  %v626 = vpop.permute.xlu0 %625
  %629 = vset.pattern.permute.xlu0 0
  %630 = vperm.xlu0 %629, %v616
  %v631 = vpop.permute.xlu0 %630
  %634 = vset.pattern.permute.xlu0 0
  %635 = vperm.xlu0 %634, %v617
  %v636 = vpop.permute.xlu0 %635
  %v638 = vmul.f32 %v606, %v621
  %v639 = vmul.f32 %v607, %v621
  %v640 = vmul.f32 %v608, %v626
  %v641 = vmul.f32 %v609, %v626
  %v642 = vmul.f32 %v610, %v631
  %v643 = vmul.f32 %v611, %v631
  %v644 = vmul.f32 %v612, %v636
  %v645 = vmul.f32 %v613, %v636
  %v646 = vld [vmem:[%s4] sm:$0xff]
  %v647 = vld [vmem:[%s4 + $0x8] sm:$0xff]
  %v648 = vld [vmem:[%s4 + $0x10] sm:$0xff]
  %v649 = vld [vmem:[%s4 + $0x18] sm:$0xff]
  %651 = vset.pattern.permute.xlu0 0
  %652 = vperm.xlu0 %651, %v646
  %v653 = vpop.permute.xlu0 %652
  %656 = vset.pattern.permute.xlu0 0
  %657 = vperm.xlu0 %656, %v647
  %v658 = vpop.permute.xlu0 %657
  %661 = vset.pattern.permute.xlu0 0
  %662 = vperm.xlu0 %661, %v648
  %v663 = vpop.permute.xlu0 %662
  %666 = vset.pattern.permute.xlu0 0
  %667 = vperm.xlu0 %666, %v649
  %v668 = vpop.permute.xlu0 %667
  %v670 = vadd.f32 %v638, %v653
  %v671 = vadd.f32 %v639, %v653
  %v672 = vadd.f32 %v640, %v658
  %v673 = vadd.f32 %v641, %v658
  %v674 = vadd.f32 %v642, %v663
  %v675 = vadd.f32 %v643, %v663
  %v676 = vadd.f32 %v644, %v668
  %v677 = vadd.f32 %v645, %v668
  %vm678 = vcmp.ge.f32.partialorder %v670, 0.0
  %vm679 = vcmp.ge.f32.partialorder %v671, 0.0
  %vm680 = vcmp.ge.f32.partialorder %v672, 0.0
  %vm681 = vcmp.ge.f32.partialorder %v673, 0.0
  %vm682 = vcmp.ge.f32.partialorder %v674, 0.0
  %vm683 = vcmp.ge.f32.partialorder %v675, 0.0
  %vm684 = vcmp.ge.f32.partialorder %v676, 0.0
  %vm685 = vcmp.ge.f32.partialorder %v677, 0.0
  %v686 = vmul.f32 %v670, 0.2
  %v687 = vmul.f32 %v671, 0.2
  %v688 = vmul.f32 %v672, 0.2
  %v689 = vmul.f32 %v673, 0.2
  %v690 = vmul.f32 %v674, 0.2
  %v691 = vmul.f32 %v675, 0.2
  %v692 = vmul.f32 %v676, 0.2
  %v693 = vmul.f32 %v677, 0.2
  %v694 = vsel %vm678, %v670, %v686
  %v695 = vsel %vm679, %v671, %v687
  %v696 = vsel %vm680, %v672, %v688
  %v697 = vsel %vm681, %v673, %v689
  %v698 = vsel %vm682, %v674, %v690
  %v699 = vsel %vm683, %v675, %v691
  %v700 = vsel %vm684, %v676, %v692
  %v701 = vsel %vm685, %v677, %v693
  %702 = vst [vmem:[%s5] sm:$0xff] %v694
  %703 = vst.msk [vmem:[%s5 + $0x8] sm:$0xff] %vm497, %v695
  %704 = vst [vmem:[%s5 + $0x10] sm:$0xff] %v696
  %705 = vst.msk [vmem:[%s5 + $0x18] sm:$0xff] %vm497, %v697
  %706 = vst [vmem:[%s5 + $0x20] sm:$0xff] %v698
  %707 = vst.msk [vmem:[%s5 + $0x28] sm:$0xff] %vm497, %v699
  %708 = vst [vmem:[%s5 + $0x30] sm:$0xff] %v700
  %709 = vst.msk [vmem:[%s5 + $0x38] sm:$0xff] %vm497, %v701
  // Predicated region
  $region22: #{discriminator_forward.6} parent=0 // pred_check
    _
  $region23: #{discriminator_forward.6} parent=0 // pred_check_branch
    %711 = sbr.rel (0) target = $region25
  $region24: #{discriminator_forward.6} parent=0 // pred_region
    _
  $region25: #{discriminator_forward.6} parent=0 // pred_fallthru
    _
  // Predicated region
  $region26: #{discriminator_forward.6} parent=0 // pred_check
    _
  $region27: #{discriminator_forward.6} parent=0 // pred_check_branch
    %713 = sbr.rel (0) target = $region29
  $region28: #{discriminator_forward.6} parent=0 // pred_region
    _
  $region29: #{discriminator_forward.6} parent=0 // pred_fallthru
    _

// kernel: discriminator_forward.7
$region0: #{discriminator_forward.7}
  #allocation0 [shape = 'u32[]', space=smem, size = 0x4, offset = 0x4, fixed_abs, tag = 'smem constant byte address 0x4 - core index']
  #allocation1 [shape = 'u32[72,128]{1,0:T(1,128)}', space=vmem, size = 0x9000, scoped, tag = 'internal scratch']
  %s0 = inlined_call_operand.vmem [shape: bf16[128,50], index: 0, kind: input, shape index: {}]
  %s1 = inlined_call_operand.vmem [shape: bf16[4,64,128], index: 1, kind: input, shape index: {}]
  %s2 = inlined_call_operand.vmem [shape: f32[1,50], index: 2, kind: input, shape index: {}]
  %s3 = inlined_call_operand.vmem [shape: f32[64,1], index: 3, kind: input, shape index: {}]
  %s4 = inlined_call_operand.vmem [shape: f32[64,1], index: 4, kind: input, shape index: {}]
  %s5 = inlined_call_operand.vmem [shape: f32[64,50], index: 5, kind: output, shape index: {}]
  %s6 = sld [smem:[#allocation0]]
  $region30: #{discriminator_forward.7} parent=0
    _
  %s8 = ssub.s32 1, %s6
  %s9 = scalar_select 0, %s8, %s6
  // Predicated region
  $region2: #{discriminator_forward.7} parent=0 // pred_check
    _
  $region3: #{discriminator_forward.7} parent=0 // pred_check_branch
    %11 = sbr.rel (0) target = $region5
  $region4: #{discriminator_forward.7} parent=0 // pred_region
    _
  $region5: #{discriminator_forward.7} parent=0 // pred_fallthru
    _
  // Predicated region
  $region6: #{discriminator_forward.7} parent=0 // pred_check
    _
  $region7: #{discriminator_forward.7} parent=0 // pred_check_branch
    %13 = sbr.rel (0) target = $region9
  $region8: #{discriminator_forward.7} parent=0 // pred_region
    _
  $region9: #{discriminator_forward.7} parent=0 // pred_fallthru
    _
  // Predicated region
  $region10: #{discriminator_forward.7} parent=0 // pred_check
    _
  $region11: #{discriminator_forward.7} parent=0 // pred_check_branch
    %15 = sbr.rel (0) target = $region13
  $region12: #{discriminator_forward.7} parent=0 // pred_region
    _
  $region13: #{discriminator_forward.7} parent=0 // pred_fallthru
    _
  // Predicated region
  $region14: #{discriminator_forward.7} parent=0 // pred_check
    _
  $region15: #{discriminator_forward.7} parent=0 // pred_check_branch
    %17 = sbr.rel (0) target = $region17
  $region16: #{discriminator_forward.7} parent=0 // pred_region
    _
  $region17: #{discriminator_forward.7} parent=0 // pred_fallthru
    _
  // Predicated region
  $region18: #{discriminator_forward.7} parent=0 // pred_check
    _
  $region19: #{discriminator_forward.7} parent=0 // pred_check_branch
    %19 = sbr.rel (0) target = $region21
  $region20: #{discriminator_forward.7} parent=0 // pred_region
    _
  $region21: #{discriminator_forward.7} parent=0 // pred_fallthru
    _
  %v20 = vld [vmem:[%s0] sm:$0xf]
  %v21 = vld [vmem:[%s0 + $0x4] sm:$0xf]
  %v22 = vld [vmem:[%s0 + $0x8] sm:$0xf]
  %v23 = vld [vmem:[%s0 + $0xc] sm:$0xf]
  %v24 = vld [vmem:[%s0 + $0x10] sm:$0xf]
  %v25 = vld [vmem:[%s0 + $0x14] sm:$0xf]
  %v26 = vld [vmem:[%s0 + $0x18] sm:$0xf]
  %v27 = vld [vmem:[%s0 + $0x1c] sm:$0xf]
  %v28 = vld [vmem:[%s0 + $0x20] sm:$0xf]
  %v29 = vld [vmem:[%s0 + $0x24] sm:$0xf]
  %v30 = vld [vmem:[%s0 + $0x28] sm:$0xf]
  %v31 = vld [vmem:[%s0 + $0x2c] sm:$0xf]
  %v32 = vld [vmem:[%s0 + $0x30] sm:$0xf]
  %v33 = vld [vmem:[%s0 + $0x34] sm:$0xf]
  %v34 = vld [vmem:[%s0 + $0x38] sm:$0xf]
  %v35 = vld [vmem:[%s0 + $0x3c] sm:$0xf]
  %v36 = vld [vmem:[%s1] sm:$0xf]
  %v37 = vld [vmem:[%s1 + $0x4] sm:$0xf]
  %v38 = vld [vmem:[%s1 + $0x8] sm:$0xf]
  %v39 = vld [vmem:[%s1 + $0xc] sm:$0xf]
  %v40 = vld [vmem:[%s1 + $0x10] sm:$0xf]
  %v41 = vld [vmem:[%s1 + $0x14] sm:$0xf]
  %v42 = vld [vmem:[%s1 + $0x18] sm:$0xf]
  %v43 = vld [vmem:[%s1 + $0x1c] sm:$0xf]
  %s44 = scalar_lea.vmem %s1, 32
  %v45 = vld [vmem:[%s44] sm:$0xf]
  %v46 = vld [vmem:[%s44 + $0x4] sm:$0xf]
  %v47 = vld [vmem:[%s44 + $0x8] sm:$0xf]
  %v48 = vld [vmem:[%s44 + $0xc] sm:$0xf]
  %v49 = vld [vmem:[%s44 + $0x10] sm:$0xf]
  %v50 = vld [vmem:[%s44 + $0x14] sm:$0xf]
  %v51 = vld [vmem:[%s44 + $0x18] sm:$0xf]
  %v52 = vld [vmem:[%s44 + $0x1c] sm:$0xf]
  %v61 = vunpack.c.l.b16 %v45
  %v62 = vunpack.c.l.b16 %v46
  %v63 = vunpack.c.l.b16 %v47
  %v64 = vunpack.c.l.b16 %v48
  %v65 = vunpack.c.l.b16 %v49
  %v66 = vunpack.c.l.b16 %v50
  %v67 = vunpack.c.l.b16 %v51
  %v68 = vunpack.c.l.b16 %v52
  %v69 = vpack.c.b16 %v62, %v61
  %v70 = vpack.c.b16 %v64, %v63
  %v71 = vpack.c.b16 %v66, %v65
  %v72 = vpack.c.b16 %v68, %v67
  %v93 = vunpack.c.l.b16 %v20
  %v94 = vunpack.c.l.b16 %v21
  %v95 = vunpack.c.l.b16 %v22
  %v96 = vunpack.c.l.b16 %v23
  %v97 = vunpack.c.l.b16 %v24
  %v98 = vunpack.c.l.b16 %v25
  %v99 = vunpack.c.l.b16 %v26
  %v100 = vunpack.c.l.b16 %v27
  %v101 = vunpack.c.l.b16 %v28
  %v102 = vunpack.c.l.b16 %v29
  %v103 = vunpack.c.l.b16 %v30
  %v104 = vunpack.c.l.b16 %v31
  %v105 = vunpack.c.l.b16 %v32
  %v106 = vunpack.c.l.b16 %v33
  %v107 = vunpack.c.l.b16 %v34
  %v108 = vunpack.c.l.b16 %v35
  %v109 = vpack.c.b16 %v94, %v93
  %v110 = vpack.c.b16 %v96, %v95
  %v111 = vpack.c.b16 %v98, %v97
  %v112 = vpack.c.b16 %v100, %v99
  %v113 = vpack.c.b16 %v102, %v101
  %v114 = vpack.c.b16 %v104, %v103
  %v115 = vpack.c.b16 %v106, %v105
  %v116 = vpack.c.b16 %v108, %v107
  %125 = vmatpush.bf16.msra.mxu0 %v116
  %126 = vmatpush.bf16.msra.mxu0 %v115
  %127 = vmatpush.bf16.msra.mxu0 %v114
  %128 = vmatpush.bf16.msra.mxu0 %v113
  %129 = vmatpush.bf16.msra.mxu0 %v112
  %130 = vmatpush.bf16.msra.mxu0 %v111
  %131 = vmatpush.bf16.msra.mxu0 %v110
  %132 = vmatpush.bf16.msra.mxu0 %v109
  %133 = vmatmul.bf16.gmra.mxu0 %v69
  %v134 = vpop.f32.mrf.mxu0
  %v135 = vadd.f32 0.0, %v134
  %v136 = vpop.f32.mrf.mxu0
  %v137 = vadd.f32 0.0, %v136
  %138 = vmatmul.bf16.gmra.mxu0 %v70
  %v139 = vpop.f32.mrf.mxu0
  %v140 = vadd.f32 0.0, %v139
  %v141 = vpop.f32.mrf.mxu0
  %v142 = vadd.f32 0.0, %v141
  %143 = vmatmul.bf16.gmra.mxu0 %v71
  %v144 = vpop.f32.mrf.mxu0
  %v145 = vadd.f32 0.0, %v144
  %v146 = vpop.f32.mrf.mxu0
  %v147 = vadd.f32 0.0, %v146
  %148 = vmatmul.bf16.gmra.mxu0 %v72
  %v149 = vpop.f32.mrf.mxu0
  %v150 = vadd.f32 0.0, %v149
  %v151 = vpop.f32.mrf.mxu0
  %v152 = vadd.f32 0.0, %v151
  %153 = vdwg.mxu0
  %162 = vrot.lane.b32.xlu0 %v135, 127
  %v163 = vpop.permute.xlu0 %162
  %164 = vrot.lane.b32.xlu0 %v137, 127
  %v165 = vpop.permute.xlu0 %164
  %166 = vrot.lane.b32.xlu0 %v140, 127
  %v167 = vpop.permute.xlu0 %166
  %168 = vrot.lane.b32.xlu0 %v142, 127
  %v169 = vpop.permute.xlu0 %168
  %170 = vrot.lane.b32.xlu0 %v145, 127
  %v171 = vpop.permute.xlu0 %170
  %172 = vrot.lane.b32.xlu0 %v147, 127
  %v173 = vpop.permute.xlu0 %172
  %174 = vrot.lane.b32.xlu0 %v150, 127
  %v175 = vpop.permute.xlu0 %174
  %176 = vrot.lane.b32.xlu0 %v152, 127
  %v177 = vpop.permute.xlu0 %176
  %186 = vrot.lane.b32.xlu0 %v135, 49
  %v187 = vpop.permute.xlu0 %186
  %188 = vrot.lane.b32.xlu0 %v137, 49
  %v189 = vpop.permute.xlu0 %188
  %190 = vrot.lane.b32.xlu0 %v140, 49
  %v191 = vpop.permute.xlu0 %190
  %192 = vrot.lane.b32.xlu0 %v142, 49
  %v193 = vpop.permute.xlu0 %192
  %194 = vrot.lane.b32.xlu0 %v145, 49
  %v195 = vpop.permute.xlu0 %194
  %196 = vrot.lane.b32.xlu0 %v147, 49
  %v197 = vpop.permute.xlu0 %196
  %198 = vrot.lane.b32.xlu0 %v150, 49
  %v199 = vpop.permute.xlu0 %198
  %200 = vrot.lane.b32.xlu0 %v152, 49
  %v201 = vpop.permute.xlu0 %200
  %vm210 = vcmask 400384
  %v211 = vsel %vm210, %v163, %v187
  %v212 = vsel %vm210, %v165, %v189
  %v213 = vsel %vm210, %v167, %v191
  %v214 = vsel %vm210, %v169, %v193
  %v215 = vsel %vm210, %v171, %v195
  %v216 = vsel %vm210, %v173, %v197
  %v217 = vsel %vm210, %v175, %v199
  %v218 = vsel %vm210, %v177, %v201
  %v227 = vunpack.c.l.b16 %v36
  %v228 = vunpack.c.l.b16 %v37
  %v229 = vunpack.c.l.b16 %v38
  %v230 = vunpack.c.l.b16 %v39
  %v231 = vunpack.c.l.b16 %v40
  %v232 = vunpack.c.l.b16 %v41
  %v233 = vunpack.c.l.b16 %v42
  %v234 = vunpack.c.l.b16 %v43
  %v235 = vpack.c.b16 %v228, %v227
  %v236 = vpack.c.b16 %v230, %v229
  %v237 = vpack.c.b16 %v232, %v231
  %v238 = vpack.c.b16 %v234, %v233
  %243 = vmatpush.bf16.msra.mxu0 %v116
  %244 = vmatpush.bf16.msra.mxu0 %v115
  %245 = vmatpush.bf16.msra.mxu0 %v114
  %246 = vmatpush.bf16.msra.mxu0 %v113
  %247 = vmatpush.bf16.msra.mxu0 %v112
  %248 = vmatpush.bf16.msra.mxu0 %v111
  %249 = vmatpush.bf16.msra.mxu0 %v110
  %250 = vmatpush.bf16.msra.mxu0 %v109
  %251 = vmatmul.bf16.gmra.mxu0 %v235
  %v252 = vpop.f32.mrf.mxu0
  %v253 = vadd.f32 %v211, %v252
  %v254 = vpop.f32.mrf.mxu0
  %v255 = vadd.f32 %v212, %v254
  %256 = vmatmul.bf16.gmra.mxu0 %v236
  %v257 = vpop.f32.mrf.mxu0
  %v258 = vadd.f32 %v213, %v257
  %v259 = vpop.f32.mrf.mxu0
  %v260 = vadd.f32 %v214, %v259
  %261 = vmatmul.bf16.gmra.mxu0 %v237
  %v262 = vpop.f32.mrf.mxu0
  %v263 = vadd.f32 %v215, %v262
  %v264 = vpop.f32.mrf.mxu0
  %v265 = vadd.f32 %v216, %v264
  %266 = vmatmul.bf16.gmra.mxu0 %v238
  %v267 = vpop.f32.mrf.mxu0
  %v268 = vadd.f32 %v217, %v267
  %v269 = vpop.f32.mrf.mxu0
  %v270 = vadd.f32 %v218, %v269
  %271 = vdwg.mxu0
  %s272 = scalar_lea.vmem %s1, 64
  %v273 = vld [vmem:[%s272] sm:$0xf]
  %v274 = vld [vmem:[%s272 + $0x4] sm:$0xf]
  %v275 = vld [vmem:[%s272 + $0x8] sm:$0xf]
  %v276 = vld [vmem:[%s272 + $0xc] sm:$0xf]
  %v277 = vld [vmem:[%s272 + $0x10] sm:$0xf]
  %v278 = vld [vmem:[%s272 + $0x14] sm:$0xf]
  %v279 = vld [vmem:[%s272 + $0x18] sm:$0xf]
  %v280 = vld [vmem:[%s272 + $0x1c] sm:$0xf]
  %v289 = vunpack.c.l.b16 %v273
  %v290 = vunpack.c.l.b16 %v274
  %v291 = vunpack.c.l.b16 %v275
  %v292 = vunpack.c.l.b16 %v276
  %v293 = vunpack.c.l.b16 %v277
  %v294 = vunpack.c.l.b16 %v278
  %v295 = vunpack.c.l.b16 %v279
  %v296 = vunpack.c.l.b16 %v280
  %v297 = vpack.c.b16 %v290, %v289
  %v298 = vpack.c.b16 %v292, %v291
  %v299 = vpack.c.b16 %v294, %v293
  %v300 = vpack.c.b16 %v296, %v295
  %305 = vmatpush.bf16.msra.mxu0 %v116
  %306 = vmatpush.bf16.msra.mxu0 %v115
  %307 = vmatpush.bf16.msra.mxu0 %v114
  %308 = vmatpush.bf16.msra.mxu0 %v113
  %309 = vmatpush.bf16.msra.mxu0 %v112
  %310 = vmatpush.bf16.msra.mxu0 %v111
  %311 = vmatpush.bf16.msra.mxu0 %v110
  %312 = vmatpush.bf16.msra.mxu0 %v109
  %313 = vmatmul.bf16.gmra.mxu0 %v297
  %v314 = vpop.f32.mrf.mxu0
  %v315 = vadd.f32 0.0, %v314
  %v316 = vpop.f32.mrf.mxu0
  %v317 = vadd.f32 0.0, %v316
  %318 = vmatmul.bf16.gmra.mxu0 %v298
  %v319 = vpop.f32.mrf.mxu0
  %v320 = vadd.f32 0.0, %v319
  %v321 = vpop.f32.mrf.mxu0
  %v322 = vadd.f32 0.0, %v321
  %323 = vmatmul.bf16.gmra.mxu0 %v299
  %v324 = vpop.f32.mrf.mxu0
  %v325 = vadd.f32 0.0, %v324
  %v326 = vpop.f32.mrf.mxu0
  %v327 = vadd.f32 0.0, %v326
  %328 = vmatmul.bf16.gmra.mxu0 %v300
  %v329 = vpop.f32.mrf.mxu0
  %v330 = vadd.f32 0.0, %v329
  %v331 = vpop.f32.mrf.mxu0
  %v332 = vadd.f32 0.0, %v331
  %333 = vdwg.mxu0
  %342 = vrot.lane.b32.xlu0 %v315, 123
  %v343 = vpop.permute.xlu0 %342
  %344 = vrot.lane.b32.xlu0 %v317, 123
  %v345 = vpop.permute.xlu0 %344
  %346 = vrot.lane.b32.xlu0 %v320, 123
  %v347 = vpop.permute.xlu0 %346
  %348 = vrot.lane.b32.xlu0 %v322, 123
  %v349 = vpop.permute.xlu0 %348
  %350 = vrot.lane.b32.xlu0 %v325, 123
  %v351 = vpop.permute.xlu0 %350
  %352 = vrot.lane.b32.xlu0 %v327, 123
  %v353 = vpop.permute.xlu0 %352
  %354 = vrot.lane.b32.xlu0 %v330, 123
  %v355 = vpop.permute.xlu0 %354
  %356 = vrot.lane.b32.xlu0 %v332, 123
  %v357 = vpop.permute.xlu0 %356
  %366 = vrot.lane.b32.xlu0 %v315, 45
  %v367 = vpop.permute.xlu0 %366
  %368 = vrot.lane.b32.xlu0 %v317, 45
  %v369 = vpop.permute.xlu0 %368
  %370 = vrot.lane.b32.xlu0 %v320, 45
  %v371 = vpop.permute.xlu0 %370
  %372 = vrot.lane.b32.xlu0 %v322, 45
  %v373 = vpop.permute.xlu0 %372
  %374 = vrot.lane.b32.xlu0 %v325, 45
  %v375 = vpop.permute.xlu0 %374
  %376 = vrot.lane.b32.xlu0 %v327, 45
  %v377 = vpop.permute.xlu0 %376
  %378 = vrot.lane.b32.xlu0 %v330, 45
  %v379 = vpop.permute.xlu0 %378
  %380 = vrot.lane.b32.xlu0 %v332, 45
  %v381 = vpop.permute.xlu0 %380
  %vm390 = vcmask 367616
  %v391 = vsel %vm390, %v343, %v367
  %v392 = vsel %vm390, %v345, %v369
  %v393 = vsel %vm390, %v347, %v371
  %v394 = vsel %vm390, %v349, %v373
  %v395 = vsel %vm390, %v351, %v375
  %v396 = vsel %vm390, %v353, %v377
  %v397 = vsel %vm390, %v355, %v379
  %v398 = vsel %vm390, %v357, %v381
  %v399 = vadd.f32 %v253, %v391
  %v400 = vadd.f32 %v255, %v392
  %v401 = vadd.f32 %v258, %v393
  %v402 = vadd.f32 %v260, %v394
  %v403 = vadd.f32 %v263, %v395
  %v404 = vadd.f32 %v265, %v396
  %v405 = vadd.f32 %v268, %v397
  %v406 = vadd.f32 %v270, %v398
  %s407 = scalar_lea.vmem %s1, 96
  %v408 = vld [vmem:[%s407] sm:$0xf]
  %v409 = vld [vmem:[%s407 + $0x4] sm:$0xf]
  %v410 = vld [vmem:[%s407 + $0x8] sm:$0xf]
  %v411 = vld [vmem:[%s407 + $0xc] sm:$0xf]
  %v412 = vld [vmem:[%s407 + $0x10] sm:$0xf]
  %v413 = vld [vmem:[%s407 + $0x14] sm:$0xf]
  %v414 = vld [vmem:[%s407 + $0x18] sm:$0xf]
  %v415 = vld [vmem:[%s407 + $0x1c] sm:$0xf]
  %v424 = vunpack.c.l.b16 %v408
  %v425 = vunpack.c.l.b16 %v409
  %v426 = vunpack.c.l.b16 %v410
  %v427 = vunpack.c.l.b16 %v411
  %v428 = vunpack.c.l.b16 %v412
  %v429 = vunpack.c.l.b16 %v413
  %v430 = vunpack.c.l.b16 %v414
  %v431 = vunpack.c.l.b16 %v415
  %v432 = vpack.c.b16 %v425, %v424
  %v433 = vpack.c.b16 %v427, %v426
  %v434 = vpack.c.b16 %v429, %v428
  %v435 = vpack.c.b16 %v431, %v430
  %440 = vmatpush.bf16.msra.mxu0 %v116
  %441 = vmatpush.bf16.msra.mxu0 %v115
  %442 = vmatpush.bf16.msra.mxu0 %v114
  %443 = vmatpush.bf16.msra.mxu0 %v113
  %444 = vmatpush.bf16.msra.mxu0 %v112
  %445 = vmatpush.bf16.msra.mxu0 %v111
  %446 = vmatpush.bf16.msra.mxu0 %v110
  %447 = vmatpush.bf16.msra.mxu0 %v109
  %448 = vmatmul.bf16.gmra.mxu0 %v432
  %v449 = vpop.f32.mrf.mxu0
  %v450 = vadd.f32 0.0, %v449
  %v451 = vpop.f32.mrf.mxu0
  %v452 = vadd.f32 0.0, %v451
  %453 = vmatmul.bf16.gmra.mxu0 %v433
  %v454 = vpop.f32.mrf.mxu0
  %v455 = vadd.f32 0.0, %v454
  %v456 = vpop.f32.mrf.mxu0
  %v457 = vadd.f32 0.0, %v456
  %458 = vmatmul.bf16.gmra.mxu0 %v434
  %v459 = vpop.f32.mrf.mxu0
  %v460 = vadd.f32 0.0, %v459
  %v461 = vpop.f32.mrf.mxu0
  %v462 = vadd.f32 0.0, %v461
  %463 = vmatmul.bf16.gmra.mxu0 %v435
  %v464 = vpop.f32.mrf.mxu0
  %v465 = vadd.f32 0.0, %v464
  %v466 = vpop.f32.mrf.mxu0
  %v467 = vadd.f32 0.0, %v466
  %468 = vdwg.mxu0
  %477 = vrot.lane.b32.xlu0 %v450, 122
  %v478 = vpop.permute.xlu0 %477
  %479 = vrot.lane.b32.xlu0 %v452, 122
  %v480 = vpop.permute.xlu0 %479
  %481 = vrot.lane.b32.xlu0 %v455, 122
  %v482 = vpop.permute.xlu0 %481
  %483 = vrot.lane.b32.xlu0 %v457, 122
  %v484 = vpop.permute.xlu0 %483
  %485 = vrot.lane.b32.xlu0 %v460, 122
  %v486 = vpop.permute.xlu0 %485
  %487 = vrot.lane.b32.xlu0 %v462, 122
  %v488 = vpop.permute.xlu0 %487
  %489 = vrot.lane.b32.xlu0 %v465, 122
  %v490 = vpop.permute.xlu0 %489
  %491 = vrot.lane.b32.xlu0 %v467, 122
  %v492 = vpop.permute.xlu0 %491
  %501 = vrot.lane.b32.xlu0 %v450, 44
  %v502 = vpop.permute.xlu0 %501
  %503 = vrot.lane.b32.xlu0 %v452, 44
  %v504 = vpop.permute.xlu0 %503
  %505 = vrot.lane.b32.xlu0 %v455, 44
  %v506 = vpop.permute.xlu0 %505
  %507 = vrot.lane.b32.xlu0 %v457, 44
  %v508 = vpop.permute.xlu0 %507
  %509 = vrot.lane.b32.xlu0 %v460, 44
  %v510 = vpop.permute.xlu0 %509
  %511 = vrot.lane.b32.xlu0 %v462, 44
  %v512 = vpop.permute.xlu0 %511
  %513 = vrot.lane.b32.xlu0 %v465, 44
  %v514 = vpop.permute.xlu0 %513
  %515 = vrot.lane.b32.xlu0 %v467, 44
  %v516 = vpop.permute.xlu0 %515
  %vm525 = vcmask 359424
  %v526 = vsel %vm525, %v478, %v502
  %v527 = vsel %vm525, %v480, %v504
  %v528 = vsel %vm525, %v482, %v506
  %v529 = vsel %vm525, %v484, %v508
  %v530 = vsel %vm525, %v486, %v510
  %v531 = vsel %vm525, %v488, %v512
  %v532 = vsel %vm525, %v490, %v514
  %v533 = vsel %vm525, %v492, %v516
  %v534 = vadd.f32 %v399, %v526
  %v535 = vadd.f32 %v400, %v527
  %v536 = vadd.f32 %v401, %v528
  %v537 = vadd.f32 %v402, %v529
  %v538 = vadd.f32 %v403, %v530
  %v539 = vadd.f32 %v404, %v531
  %v540 = vadd.f32 %v405, %v532
  %v541 = vadd.f32 %v406, %v533
  %v542 = vld [vmem:[%s2] sm:$0x1]
  %v544 = vperm.slane %v542, 0
  %v546 = vmul.f32 %v534, %v544
  %v547 = vmul.f32 %v535, %v544
  %v548 = vmul.f32 %v536, %v544
  %v549 = vmul.f32 %v537, %v544
  %v550 = vmul.f32 %v538, %v544
  %v551 = vmul.f32 %v539, %v544
  %v552 = vmul.f32 %v540, %v544
  %v553 = vmul.f32 %v541, %v544
  %vm554 = vcmask 408576
  %v555 = vsel %vm554, %v546, 0.0
  %556 = vadd.xlane.f32.xlu0 %v555
  %v557 = vpop.xlane.xlu0 %556
  %v558 = vsel %vm554, %v547, 0.0
  %559 = vadd.xlane.f32.xlu0 %v558
  %v560 = vpop.xlane.xlu0 %559
  %v561 = vsel %vm554, %v548, 0.0
  %562 = vadd.xlane.f32.xlu0 %v561
  %v563 = vpop.xlane.xlu0 %562
  %v564 = vsel %vm554, %v549, 0.0
  %565 = vadd.xlane.f32.xlu0 %v564
  %v566 = vpop.xlane.xlu0 %565
  %v567 = vsel %vm554, %v550, 0.0
  %568 = vadd.xlane.f32.xlu0 %v567
  %v569 = vpop.xlane.xlu0 %568
  %v570 = vsel %vm554, %v551, 0.0
  %571 = vadd.xlane.f32.xlu0 %v570
  %v572 = vpop.xlane.xlu0 %571
  %v573 = vsel %vm554, %v552, 0.0
  %574 = vadd.xlane.f32.xlu0 %v573
  %v575 = vpop.xlane.xlu0 %574
  %v576 = vsel %vm554, %v553, 0.0
  %577 = vadd.xlane.f32.xlu0 %v576
  %v578 = vpop.xlane.xlu0 %577
  %v579 = vmul.f32 %v557, 0.03125
  %v580 = vmul.f32 %v560, 0.03125
  %v581 = vmul.f32 %v563, 0.03125
  %v582 = vmul.f32 %v566, 0.03125
  %v583 = vmul.f32 %v569, 0.03125
  %v584 = vmul.f32 %v572, 0.03125
  %v585 = vmul.f32 %v575, 0.03125
  %v586 = vmul.f32 %v578, 0.03125
  %v587 = vsub.f32 %v534, %v579
  %v588 = vsub.f32 %v535, %v580
  %v589 = vsub.f32 %v536, %v581
  %v590 = vsub.f32 %v537, %v582
  %v591 = vsub.f32 %v538, %v583
  %v592 = vsub.f32 %v539, %v584
  %v593 = vsub.f32 %v540, %v585
  %v594 = vsub.f32 %v541, %v586
  %v595 = vmul.f32 %v587, %v544
  %v596 = vmul.f32 %v588, %v544
  %v597 = vmul.f32 %v589, %v544
  %v598 = vmul.f32 %v590, %v544
  %v599 = vmul.f32 %v591, %v544
  %v600 = vmul.f32 %v592, %v544
  %v601 = vmul.f32 %v593, %v544
  %v602 = vmul.f32 %v594, %v544
  %v603 = vmul.f32 %v595, %v595
  %v604 = vmul.f32 %v596, %v596
  %v605 = vmul.f32 %v597, %v597
  %v606 = vmul.f32 %v598, %v598
  %v607 = vmul.f32 %v599, %v599
  %v608 = vmul.f32 %v600, %v600
  %v609 = vmul.f32 %v601, %v601
  %v610 = vmul.f32 %v602, %v602
  %v611 = vsel %vm554, %v603, 0.0
  %612 = vadd.xlane.f32.xlu0 %v611
  %v613 = vpop.xlane.xlu0 %612
  %v614 = vsel %vm554, %v604, 0.0
  %615 = vadd.xlane.f32.xlu0 %v614
  %v616 = vpop.xlane.xlu0 %615
  %v617 = vsel %vm554, %v605, 0.0
  %618 = vadd.xlane.f32.xlu0 %v617
  %v619 = vpop.xlane.xlu0 %618
  %v620 = vsel %vm554, %v606, 0.0
  %621 = vadd.xlane.f32.xlu0 %v620
  %v622 = vpop.xlane.xlu0 %621
  %v623 = vsel %vm554, %v607, 0.0
  %624 = vadd.xlane.f32.xlu0 %v623
  %v625 = vpop.xlane.xlu0 %624
  %v626 = vsel %vm554, %v608, 0.0
  %627 = vadd.xlane.f32.xlu0 %v626
  %v628 = vpop.xlane.xlu0 %627
  %v629 = vsel %vm554, %v609, 0.0
  %630 = vadd.xlane.f32.xlu0 %v629
  %v631 = vpop.xlane.xlu0 %630
  %v632 = vsel %vm554, %v610, 0.0
  %633 = vadd.xlane.f32.xlu0 %v632
  %v634 = vpop.xlane.xlu0 %633
  %v635 = vmul.f32 %v613, 0.03125
  %v636 = vmul.f32 %v616, 0.03125
  %v637 = vmul.f32 %v619, 0.03125
  %v638 = vmul.f32 %v622, 0.03125
  %v639 = vmul.f32 %v625, 0.03125
  %v640 = vmul.f32 %v628, 0.03125
  %v641 = vmul.f32 %v631, 0.03125
  %v642 = vmul.f32 %v634, 0.03125
  %v643 = vadd.f32 %v635, 1e-05
  %v644 = vadd.f32 %v636, 1e-05
  %v645 = vadd.f32 %v637, 1e-05
  %v646 = vadd.f32 %v638, 1e-05
  %v647 = vadd.f32 %v639, 1e-05
  %v648 = vadd.f32 %v640, 1e-05
  %v649 = vadd.f32 %v641, 1e-05
  %v650 = vadd.f32 %v642, 1e-05
  %v651 = vrsqrt.pop %v643
  %v652 = vmul.f32 %v651, %v643
  %v653 = vmul.f32 %v652, %v651
  %v654 = vmul.f32 0.5, %v653
  %v655 = vsub.f32 1.5, %v654
  %v656 = vmul.f32 %v651, %v655
  %vm657 = vweird.f32 %v643
  %vm658 = vweird.f32 %v651
  %vm659 = vmor %vm657, %vm658
  %v660 = vsel %vm659, %v651, %v656
  %v661 = vrsqrt.pop %v644
  %v662 = vmul.f32 %v661, %v644
  %v663 = vmul.f32 %v662, %v661
  %v664 = vmul.f32 0.5, %v663
  %v665 = vsub.f32 1.5, %v664
  %v666 = vmul.f32 %v661, %v665
  %vm667 = vweird.f32 %v644
  %vm668 = vweird.f32 %v661
  %vm669 = vmor %vm667, %vm668
  %v670 = vsel %vm669, %v661, %v666
  %v671 = vrsqrt.pop %v645
  %v672 = vmul.f32 %v671, %v645
  %v673 = vmul.f32 %v672, %v671
  %v674 = vmul.f32 0.5, %v673
  %v675 = vsub.f32 1.5, %v674
  %v676 = vmul.f32 %v671, %v675
  %vm677 = vweird.f32 %v645
  %vm678 = vweird.f32 %v671
  %vm679 = vmor %vm677, %vm678
  %v680 = vsel %vm679, %v671, %v676
  %v681 = vrsqrt.pop %v646
  %v682 = vmul.f32 %v681, %v646
  %v683 = vmul.f32 %v682, %v681
  %v684 = vmul.f32 0.5, %v683
  %v685 = vsub.f32 1.5, %v684
  %v686 = vmul.f32 %v681, %v685
  %vm687 = vweird.f32 %v646
  %vm688 = vweird.f32 %v681
  %vm689 = vmor %vm687, %vm688
  %v690 = vsel %vm689, %v681, %v686
  %v691 = vrsqrt.pop %v647
  %v692 = vmul.f32 %v691, %v647
  %v693 = vmul.f32 %v692, %v691
  %v694 = vmul.f32 0.5, %v693
  %v695 = vsub.f32 1.5, %v694
  %v696 = vmul.f32 %v691, %v695
  %vm697 = vweird.f32 %v647
  %vm698 = vweird.f32 %v691
  %vm699 = vmor %vm697, %vm698
  %v700 = vsel %vm699, %v691, %v696
  %v701 = vrsqrt.pop %v648
  %v702 = vmul.f32 %v701, %v648
  %v703 = vmul.f32 %v702, %v701
  %v704 = vmul.f32 0.5, %v703
  %v705 = vsub.f32 1.5, %v704
  %v706 = vmul.f32 %v701, %v705
  %vm707 = vweird.f32 %v648
  %vm708 = vweird.f32 %v701
  %vm709 = vmor %vm707, %vm708
  %v710 = vsel %vm709, %v701, %v706
  %v711 = vrsqrt.pop %v649
  %v712 = vmul.f32 %v711, %v649
  %v713 = vmul.f32 %v712, %v711
  %v714 = vmul.f32 0.5, %v713
  %v715 = vsub.f32 1.5, %v714
  %v716 = vmul.f32 %v711, %v715
  %vm717 = vweird.f32 %v649
  %vm718 = vweird.f32 %v711
  %vm719 = vmor %vm717, %vm718
  %v720 = vsel %vm719, %v711, %v716
  %v721 = vrsqrt.pop %v650
  %v722 = vmul.f32 %v721, %v650
  %v723 = vmul.f32 %v722, %v721
  %v724 = vmul.f32 0.5, %v723
  %v725 = vsub.f32 1.5, %v724
  %v726 = vmul.f32 %v721, %v725
  %vm727 = vweird.f32 %v650
  %vm728 = vweird.f32 %v721
  %vm729 = vmor %vm727, %vm728
  %v730 = vsel %vm729, %v721, %v726
  %v731 = vmul.f32 %v587, %v660
  %v732 = vmul.f32 %v588, %v670
  %v733 = vmul.f32 %v589, %v680
  %v734 = vmul.f32 %v590, %v690
  %v735 = vmul.f32 %v591, %v700
  %v736 = vmul.f32 %v592, %v710
  %v737 = vmul.f32 %v593, %v720
  %v738 = vmul.f32 %v594, %v730
  %v739 = vld [vmem:[%s3] sm:$0xff]
  %v740 = vld [vmem:[%s3 + $0x8] sm:$0xff]
  %v741 = vld [vmem:[%s3 + $0x10] sm:$0xff]
  %v742 = vld [vmem:[%s3 + $0x18] sm:$0xff]
  %v743 = vld [vmem:[%s3 + $0x20] sm:$0xff]
  %v744 = vld [vmem:[%s3 + $0x28] sm:$0xff]
  %v745 = vld [vmem:[%s3 + $0x30] sm:$0xff]
  %v746 = vld [vmem:[%s3 + $0x38] sm:$0xff]
  %748 = vset.pattern.permute.xlu0 0
  %749 = vperm.xlu0 %748, %v739
  %v750 = vpop.permute.xlu0 %749
  %753 = vset.pattern.permute.xlu0 0
  %754 = vperm.xlu0 %753, %v740
  %v755 = vpop.permute.xlu0 %754
  %758 = vset.pattern.permute.xlu0 0
  %759 = vperm.xlu0 %758, %v741
  %v760 = vpop.permute.xlu0 %759
  %763 = vset.pattern.permute.xlu0 0
  %764 = vperm.xlu0 %763, %v742
  %v765 = vpop.permute.xlu0 %764
  %768 = vset.pattern.permute.xlu0 0
  %769 = vperm.xlu0 %768, %v743
  %v770 = vpop.permute.xlu0 %769
  %773 = vset.pattern.permute.xlu0 0
  %774 = vperm.xlu0 %773, %v744
  %v775 = vpop.permute.xlu0 %774
  %778 = vset.pattern.permute.xlu0 0
  %779 = vperm.xlu0 %778, %v745
  %v780 = vpop.permute.xlu0 %779
  %783 = vset.pattern.permute.xlu0 0
  %784 = vperm.xlu0 %783, %v746
  %v785 = vpop.permute.xlu0 %784
  %v787 = vmul.f32 %v731, %v750
  %v788 = vmul.f32 %v732, %v755
  %v789 = vmul.f32 %v733, %v760
  %v790 = vmul.f32 %v734, %v765
  %v791 = vmul.f32 %v735, %v770
  %v792 = vmul.f32 %v736, %v775
  %v793 = vmul.f32 %v737, %v780
  %v794 = vmul.f32 %v738, %v785
  %v795 = vld [vmem:[%s4] sm:$0xff]
  %v796 = vld [vmem:[%s4 + $0x8] sm:$0xff]
  %v797 = vld [vmem:[%s4 + $0x10] sm:$0xff]
  %v798 = vld [vmem:[%s4 + $0x18] sm:$0xff]
  %v799 = vld [vmem:[%s4 + $0x20] sm:$0xff]
  %v800 = vld [vmem:[%s4 + $0x28] sm:$0xff]
  %v801 = vld [vmem:[%s4 + $0x30] sm:$0xff]
  %v802 = vld [vmem:[%s4 + $0x38] sm:$0xff]
  %804 = vset.pattern.permute.xlu0 0
  %805 = vperm.xlu0 %804, %v795
  %v806 = vpop.permute.xlu0 %805
  %809 = vset.pattern.permute.xlu0 0
  %810 = vperm.xlu0 %809, %v796
  %v811 = vpop.permute.xlu0 %810
  %814 = vset.pattern.permute.xlu0 0
  %815 = vperm.xlu0 %814, %v797
  %v816 = vpop.permute.xlu0 %815
  %819 = vset.pattern.permute.xlu0 0
  %820 = vperm.xlu0 %819, %v798
  %v821 = vpop.permute.xlu0 %820
  %824 = vset.pattern.permute.xlu0 0
  %825 = vperm.xlu0 %824, %v799
  %v826 = vpop.permute.xlu0 %825
  %829 = vset.pattern.permute.xlu0 0
  %830 = vperm.xlu0 %829, %v800
  %v831 = vpop.permute.xlu0 %830
  %834 = vset.pattern.permute.xlu0 0
  %835 = vperm.xlu0 %834, %v801
  %v836 = vpop.permute.xlu0 %835
  %839 = vset.pattern.permute.xlu0 0
  %840 = vperm.xlu0 %839, %v802
  %v841 = vpop.permute.xlu0 %840
  %v843 = vadd.f32 %v787, %v806
  %v844 = vadd.f32 %v788, %v811
  %v845 = vadd.f32 %v789, %v816
  %v846 = vadd.f32 %v790, %v821
  %v847 = vadd.f32 %v791, %v826
  %v848 = vadd.f32 %v792, %v831
  %v849 = vadd.f32 %v793, %v836
  %v850 = vadd.f32 %v794, %v841
  %vm851 = vcmp.ge.f32.partialorder %v843, 0.0
  %vm852 = vcmp.ge.f32.partialorder %v844, 0.0
  %vm853 = vcmp.ge.f32.partialorder %v845, 0.0
  %vm854 = vcmp.ge.f32.partialorder %v846, 0.0
  %vm855 = vcmp.ge.f32.partialorder %v847, 0.0
  %vm856 = vcmp.ge.f32.partialorder %v848, 0.0
  %vm857 = vcmp.ge.f32.partialorder %v849, 0.0
  %vm858 = vcmp.ge.f32.partialorder %v850, 0.0
  %v859 = vmul.f32 %v843, 0.2
  %v860 = vmul.f32 %v844, 0.2
  %v861 = vmul.f32 %v845, 0.2
  %v862 = vmul.f32 %v846, 0.2
  %v863 = vmul.f32 %v847, 0.2
  %v864 = vmul.f32 %v848, 0.2
  %v865 = vmul.f32 %v849, 0.2
  %v866 = vmul.f32 %v850, 0.2
  %v867 = vsel %vm851, %v843, %v859
  %v868 = vsel %vm852, %v844, %v860
  %v869 = vsel %vm853, %v845, %v861
  %v870 = vsel %vm854, %v846, %v862
  %v871 = vsel %vm855, %v847, %v863
  %v872 = vsel %vm856, %v848, %v864
  %v873 = vsel %vm857, %v849, %v865
  %v874 = vsel %vm858, %v850, %v866
  %875 = vst.msk [vmem:[%s5] sm:$0xff] %vm554, %v867
  %876 = vst.msk [vmem:[%s5 + $0x8] sm:$0xff] %vm554, %v868
  %877 = vst.msk [vmem:[%s5 + $0x10] sm:$0xff] %vm554, %v869
  %878 = vst.msk [vmem:[%s5 + $0x18] sm:$0xff] %vm554, %v870
  %879 = vst.msk [vmem:[%s5 + $0x20] sm:$0xff] %vm554, %v871
  %880 = vst.msk [vmem:[%s5 + $0x28] sm:$0xff] %vm554, %v872
  %881 = vst.msk [vmem:[%s5 + $0x30] sm:$0xff] %vm554, %v873
  %882 = vst.msk [vmem:[%s5 + $0x38] sm:$0xff] %vm554, %v874
  // Predicated region
  $region22: #{discriminator_forward.7} parent=0 // pred_check
    _
  $region23: #{discriminator_forward.7} parent=0 // pred_check_branch
    %884 = sbr.rel (0) target = $region25
  $region24: #{discriminator_forward.7} parent=0 // pred_region
    _
  $region25: #{discriminator_forward.7} parent=0 // pred_fallthru
    _
  // Predicated region
  $region26: #{discriminator_forward.7} parent=0 // pred_check
    _
  $region27: #{discriminator_forward.7} parent=0 // pred_check_branch
    %886 = sbr.rel (0) target = $region29
  $region28: #{discriminator_forward.7} parent=0 // pred_region
    _
  $region29: #{discriminator_forward.7} parent=0 // pred_fallthru
    _

</llo_original>
